<compile_context>
chip_gen: v7x
topology: tpu7x:2x2x1
jax: 0.10.0
libtpu: 0.0.40
codegen_flags: <defaults>
</compile_context>

<pallas_src>
import jax
import jax.numpy as jnp
import numpy as np
from jax import lax
from jax.experimental import pallas as pl
from jax.experimental.pallas import tpu as pltpu

EPS = 1e-5  # torch InstanceNorm2d default eps


def _border_masks(H, W):
    """(9, 1, H*W) f32 validity masks for a 3x3 conv, dilation=2, padding=2.

    Pure function of (H, W): hoisted out of the kernel so the iota / div / mod
    / compare chain is not re-executed by the VPU on every grid step.
    Tap order k = ky*3 + kx, offsets dy = 2*(ky-1), dx = 2*(kx-1).
    """
    HW = H * W
    hh, ww = np.divmod(np.arange(HW), W)
    m = np.zeros((9, 1, HW), np.float32)
    for ky in range(3):
        dy = 2 * (ky - 1)
        for kx in range(3):
            dx = 2 * (kx - 1)
            ok = (hh + dy >= 0) & (hh + dy < H) & (ww + dx >= 0) & (ww + dx < W)
            m[ky * 3 + kx, 0, :] = ok
    return jnp.asarray(m)


def _pick_block_batch(N, max_b=4):
    """Largest B <= max_b that divides N while keeping >= 2 grid steps when
    N >= 2 (v7x: two TensorCores are fed by sharding the parallel grid axis).
    max_b=4 keeps the unrolled per-sample live sets comfortably inside the
    64-vreg file at these channel counts; reduce it for much larger Cmid."""
    for b in range(min(max_b, N), 0, -1):
        if N % b == 0 and (N // b >= 2 or N < 2):
            return b
    return 1


def _vmem_limit_bytes(B, Cin, Cmid, Cm4, Cout, HW):
    f32 = 4
    io = 2 * B * (Cin + Cout) * HW * f32                       # double-buffered x/out blocks
    params = 2 * (Cmid * Cin + Cm4 * Cmid + 9 * Cm4 * Cm4 + Cout * Cm4 + 9 * HW) * f32
    # Headroom for live values / possible spills (x, ex, taps, acc, h3 per in-flight sample).
    live = 6 * B * max(Cin, Cmid, Cout) * HW * f32
    want = int(1.5 * (io + params + live)) + (1 << 20)
    # v7x: 64 MiB physical VMEM per core (v5e/v6e: 128 MiB). Stay well below.
    # TODO(synk): tile the HW axis (with halo handling at tile edges) if a
    # larger (Cm4, H, W) configuration pushes `want` past this cap.
    return max(4 << 20, min(want, 48 << 20))


def _make_kernel(H, W, B, Cm4, needs_cast):
    HW = H * W
    inv_hw = 1.0 / float(HW)
    # Flattened-HW offset of each dilated tap (k = ky*3 + kx).
    offs = [(2 * (ky - 1)) * W + (2 * (kx - 1))
            for ky in range(3) for kx in range(3)]

    def inorm_relu(v):
        # Two-pass InstanceNorm statistics per channel row (matches the
        # torch / lax reference; no E[x^2]-mean^2 cancellation), then ReLU.
        mean = jnp.sum(v, axis=-1, keepdims=True) * inv_hw
        d = v - mean
        var = jnp.sum(d * d, axis=-1, keepdims=True) * inv_hw
        return jnp.maximum(d * lax.rsqrt(var + EPS), 0.0)

    def kernel(x_ref, wex_ref, w1_ref, w2_ref, w3_ref, mask_ref, o_ref):
        # Weights and border masks: loaded/broadcast ONCE per grid step and
        # shared by all B samples in the block.
        wex = wex_ref[...]                                  # (Cmid, Cin)
        w1 = w1_ref[...]                                    # (Cm4, Cmid)
        w3 = w3_ref[...]                                    # (Cout, Cm4)
        w2s = [w2_ref[k] for k in range(9)]                 # 9 x (Cm4, Cm4)
        masks = [None if off == 0
                 else jnp.broadcast_to(mask_ref[k], (Cm4, HW))
                 for k, off in enumerate(offs)]             # hoisted broadcasts

        for b in range(B):   # B is a small static int; each body is large
            x = x_ref[b]                                    # (Cin, HW)
            if needs_cast:
                x = x.astype(jnp.float32)

            # trans branch: IN -> ReLU -> 1x1 conv (no bias)
            ex = jnp.dot(wex, inorm_relu(x),
                         preferred_element_type=jnp.float32)      # (Cmid, HW)

            # bottleneck stage 1: IN -> ReLU -> 1x1 conv
            h1 = jnp.dot(w1, inorm_relu(ex),
                         preferred_element_type=jnp.float32)      # (Cm4, HW)

            # bottleneck stage 2: IN -> ReLU -> 3x3 conv, dilation=2, pad=2.
            # 9 lane-rolled + border-masked taps, each contracted by its own
            # accumulating matmul (split-K; no im2col VMEM scratch, no masked
            # sub-tile stores; accumulation maps to the MRB on v7x).
            a = inorm_relu(h1)                                     # (Cm4, HW)
            acc = None
            for k, off in enumerate(offs):
                if off == 0:
                    tap = a
                else:
                    tap = pltpu.roll(a, (-off) % HW, axis=1) * masks[k]
                part = jnp.dot(w2s[k], tap,
                               preferred_element_type=jnp.float32)  # (Cm4, HW)
                acc = part if acc is None else acc + part

            # bottleneck stage 3: IN -> ReLU -> 1x1 conv, residual add with ex
            h3 = jnp.dot(w3, inorm_relu(acc),
                         preferred_element_type=jnp.float32)       # (Cout, HW)
            res = h3 + ex
            if needs_cast:
                res = res.astype(o_ref.dtype)
            o_ref[b] = res

    return kernel


def rn_dilation_u2(x_nchw, w_ex, w1, w2, w3, *, max_block_batch=4):
    """Forward pass. PyTorch conventions: x NCHW, conv weights OIHW."""
    N, Cin, H, W = x_nchw.shape
    Cmid = w_ex.shape[0]
    Cm4 = w1.shape[0]
    Cout = w3.shape[0]
    assert Cmid == Cout, "residual add requires middle_channel == out_channel"
    HW = H * W

    # Free, contiguous reshape: no NCHW<->NHWC transpose / extra HBM pass.
    x_flat = x_nchw.reshape(N, Cin, HW)
    wex_k = w_ex[:, :, 0, 0]                                   # (Cmid, Cin)
    w1_k = w1[:, :, 0, 0]                                      # (Cm4, Cmid)
    # Per-tap weight matrices, k = ky*3 + kx  ->  (9, Cm4_out, Cm4_in)
    w2_k = jnp.transpose(w2, (2, 3, 0, 1)).reshape(9, Cm4, Cm4)
    w3_k = w3[:, :, 0, 0]                                      # (Cout, Cm4)
    mask = _border_masks(H, W)                                 # (9, 1, HW)

    B = _pick_block_batch(N, max_block_batch)
    grid = N // B                                              # B divides N
    needs_cast = x_nchw.dtype != jnp.float32

    kernel = _make_kernel(H, W, B, Cm4, needs_cast)

    out_flat = pl.pallas_call(
        kernel,
        out_shape=jax.ShapeDtypeStruct((N, Cout, HW), x_nchw.dtype),
        grid=(grid,),
        in_specs=[
            pl.BlockSpec((B, Cin, HW), lambda n: (n, 0, 0)),
            # Constant index_maps: weights / masks are fetched once and kept
            # resident across grid steps.
            pl.BlockSpec((Cmid, Cin), lambda n: (0, 0)),
            pl.BlockSpec((Cm4, Cmid), lambda n: (0, 0)),
            pl.BlockSpec((9, Cm4, Cm4), lambda n: (0, 0, 0)),
            pl.BlockSpec((Cout, Cm4), lambda n: (0, 0)),
            pl.BlockSpec((9, 1, HW), lambda n: (0, 0, 0)),
        ],
        out_specs=pl.BlockSpec((B, Cout, HW), lambda n: (n, 0, 0)),
        compiler_params=pltpu.CompilerParams(
            # Batch axis is parallel (megacore / v7x dual-TC sharding).
            dimension_semantics=("parallel",),
            vmem_limit_bytes=_vmem_limit_bytes(B, Cin, Cmid, Cm4, Cout, HW),
        ),
    )(x_flat, wex_k, w1_k, w2_k, w3_k, mask)
    return out_flat.reshape(N, Cout, H, W)   # free reshape back to NCHW


# ---------------- pure-JAX reference (NCHW, lax convs) ----------------
def _instance_norm_nchw(x):
    mean = jnp.mean(x, axis=(2, 3), keepdims=True)
    var = jnp.mean((x - mean) ** 2, axis=(2, 3), keepdims=True)
    return (x - mean) / jnp.sqrt(var + EPS)


def ref_forward(x, w_ex, w1, w2, w3):
    def conv(v, w, dilation=1, padding=0):
        return jax.lax.conv_general_dilated(
            v, w, window_strides=(1, 1),
            padding=[(padding, padding), (padding, padding)],
            rhs_dilation=(dilation, dilation),
            dimension_numbers=("NCHW", "OIHW", "NCHW"))

    ex = conv(jax.nn.relu(_instance_norm_nchw(x)), w_ex)
    h = conv(jax.nn.relu(_instance_norm_nchw(ex)), w1)
    h = conv(jax.nn.relu(_instance_norm_nchw(h)), w2, dilation=2, padding=2)
    h = conv(jax.nn.relu(_instance_norm_nchw(h)), w3)
    return h + ex


if __name__ == "__main__":
    key = jax.random.PRNGKey(0)
    # N=4 so the batched path is exercised: B=2 samples per grid step,
    # grid=(2,) (keeps both v7x TensorCores busy).
    N, Cin, H, W = 4, 8, 16, 16
    Cmid, Cout = 16, 16          # residual requires middle_channel == out_channel
    Cm4 = Cmid // 4

    kx, k1, k2, k3, k4 = jax.random.split(key, 5)
    x = jax.random.normal(kx, (N, Cin, H, W), jnp.float32)
    w_ex = 0.2 * jax.random.normal(k1, (Cmid, Cin, 1, 1), jnp.float32)
    w1 = 0.2 * jax.random.normal(k2, (Cm4, Cmid, 1, 1), jnp.float32)
    w2 = 0.2 * jax.random.normal(k3, (Cm4, Cm4, 3, 3), jnp.float32)
    w3 = 0.2 * jax.random.normal(k4, (Cout, Cm4, 1, 1), jnp.float32)

    out = jax.block_until_ready(rn_dilation_u2(x, w_ex, w1, w2, w3))
    ref = ref_forward(x, w_ex, w1, w2, w3)
    assert out.shape == ref.shape == (N, Cout, H, W)
    max_err = float(jnp.max(jnp.abs(out - ref)))
    assert jnp.allclose(out, ref, rtol=2e-3, atol=2e-3), f"max_err={max_err}"
    print("KERNEL_OK")
</pallas_src>

<mosaic_0001>
module attributes {stable_mosaic.version = 11 : i64} {
  func.func @kernel(%arg0: i32, %arg1: memref<2x8x256xf32, #tpu.memory_space<vmem>>, %arg2: memref<16x8xf32, #tpu.memory_space<vmem>>, %arg3: memref<4x16xf32, #tpu.memory_space<vmem>>, %arg4: memref<9x4x4xf32, #tpu.memory_space<vmem>>, %arg5: memref<16x4xf32, #tpu.memory_space<vmem>>, %arg6: memref<9x1x256xf32, #tpu.memory_space<vmem>>, %arg7: memref<2x16x256xf32, #tpu.memory_space<vmem>>) attributes {dimension_semantics = [#tpu.dimension_semantics<parallel>], iteration_bounds = array<i64: 2>, scalar_prefetch = 0 : i64, scratch_operands = 0 : i64, tpu.core_type = #tpu.core_type<tc>, window_params = [{transform_indices = @transform_0, window_bounds = array<i64: 2, 8, 256>}, {pipeline_mode = #tpu.pipeline_mode<synchronous>, transform_indices = @transform_1, window_bounds = array<i64: 16, 8>}, {pipeline_mode = #tpu.pipeline_mode<synchronous>, transform_indices = @transform_2, window_bounds = array<i64: 4, 16>}, {pipeline_mode = #tpu.pipeline_mode<synchronous>, transform_indices = @transform_3, window_bounds = array<i64: 9, 4, 4>}, {pipeline_mode = #tpu.pipeline_mode<synchronous>, transform_indices = @transform_4, window_bounds = array<i64: 16, 4>}, {pipeline_mode = #tpu.pipeline_mode<synchronous>, transform_indices = @transform_5, window_bounds = array<i64: 9, 1, 256>}, {transform_indices = @transform_6, window_bounds = array<i64: 2, 16, 256>}]} {
    %c0 = arith.constant 0 : index
    %c0_0 = arith.constant 0 : index
    %0 = vector.load %arg2[%c0, %c0_0] : memref<16x8xf32, #tpu.memory_space<vmem>>, vector<16x8xf32>
    %c0_1 = arith.constant 0 : index
    %c0_2 = arith.constant 0 : index
    %1 = vector.load %arg3[%c0_1, %c0_2] : memref<4x16xf32, #tpu.memory_space<vmem>>, vector<4x16xf32>
    %c0_3 = arith.constant 0 : index
    %c0_4 = arith.constant 0 : index
    %2 = vector.load %arg5[%c0_3, %c0_4] : memref<16x4xf32, #tpu.memory_space<vmem>>, vector<16x4xf32>
    %c0_5 = arith.constant 0 : index
    %c0_6 = arith.constant 0 : index
    %c0_7 = arith.constant 0 : index
    %3 = vector.load %arg4[%c0_5, %c0_6, %c0_7] : memref<9x4x4xf32, #tpu.memory_space<vmem>>, vector<1x4x4xf32>
    %4 = vector.shape_cast %3 : vector<1x4x4xf32> to vector<4x4xf32>
    %c1 = arith.constant 1 : index
    %c0_8 = arith.constant 0 : index
    %c0_9 = arith.constant 0 : index
    %5 = vector.load %arg4[%c1, %c0_8, %c0_9] : memref<9x4x4xf32, #tpu.memory_space<vmem>>, vector<1x4x4xf32>
    %6 = vector.shape_cast %5 : vector<1x4x4xf32> to vector<4x4xf32>
    %c2 = arith.constant 2 : index
    %c0_10 = arith.constant 0 : index
    %c0_11 = arith.constant 0 : index
    %7 = vector.load %arg4[%c2, %c0_10, %c0_11] : memref<9x4x4xf32, #tpu.memory_space<vmem>>, vector<1x4x4xf32>
    %8 = vector.shape_cast %7 : vector<1x4x4xf32> to vector<4x4xf32>
    %c3 = arith.constant 3 : index
    %c0_12 = arith.constant 0 : index
    %c0_13 = arith.constant 0 : index
    %9 = vector.load %arg4[%c3, %c0_12, %c0_13] : memref<9x4x4xf32, #tpu.memory_space<vmem>>, vector<1x4x4xf32>
    %10 = vector.shape_cast %9 : vector<1x4x4xf32> to vector<4x4xf32>
    %c4 = arith.constant 4 : index
    %c0_14 = arith.constant 0 : index
    %c0_15 = arith.constant 0 : index
    %11 = vector.load %arg4[%c4, %c0_14, %c0_15] : memref<9x4x4xf32, #tpu.memory_space<vmem>>, vector<1x4x4xf32>
    %12 = vector.shape_cast %11 : vector<1x4x4xf32> to vector<4x4xf32>
    %c5 = arith.constant 5 : index
    %c0_16 = arith.constant 0 : index
    %c0_17 = arith.constant 0 : index
    %13 = vector.load %arg4[%c5, %c0_16, %c0_17] : memref<9x4x4xf32, #tpu.memory_space<vmem>>, vector<1x4x4xf32>
    %14 = vector.shape_cast %13 : vector<1x4x4xf32> to vector<4x4xf32>
    %c6 = arith.constant 6 : index
    %c0_18 = arith.constant 0 : index
    %c0_19 = arith.constant 0 : index
    %15 = vector.load %arg4[%c6, %c0_18, %c0_19] : memref<9x4x4xf32, #tpu.memory_space<vmem>>, vector<1x4x4xf32>
    %16 = vector.shape_cast %15 : vector<1x4x4xf32> to vector<4x4xf32>
    %c7 = arith.constant 7 : index
    %c0_20 = arith.constant 0 : index
    %c0_21 = arith.constant 0 : index
    %17 = vector.load %arg4[%c7, %c0_20, %c0_21] : memref<9x4x4xf32, #tpu.memory_space<vmem>>, vector<1x4x4xf32>
    %18 = vector.shape_cast %17 : vector<1x4x4xf32> to vector<4x4xf32>
    %c8 = arith.constant 8 : index
    %c0_22 = arith.constant 0 : index
    %c0_23 = arith.constant 0 : index
    %19 = vector.load %arg4[%c8, %c0_22, %c0_23] : memref<9x4x4xf32, #tpu.memory_space<vmem>>, vector<1x4x4xf32>
    %20 = vector.shape_cast %19 : vector<1x4x4xf32> to vector<4x4xf32>
    %c0_24 = arith.constant 0 : index
    %c0_25 = arith.constant 0 : index
    %c0_26 = arith.constant 0 : index
    %21 = vector.load %arg6[%c0_24, %c0_25, %c0_26] : memref<9x1x256xf32, #tpu.memory_space<vmem>>, vector<1x1x256xf32>
    %22 = vector.shape_cast %21 : vector<1x1x256xf32> to vector<1x256xf32>
    %23 = vector.shape_cast %22 : vector<1x256xf32> to vector<1x256xf32>
    %24 = vector.broadcast %23 : vector<1x256xf32> to vector<4x256xf32>
    %c1_27 = arith.constant 1 : index
    %c0_28 = arith.constant 0 : index
    %c0_29 = arith.constant 0 : index
    %25 = vector.load %arg6[%c1_27, %c0_28, %c0_29] : memref<9x1x256xf32, #tpu.memory_space<vmem>>, vector<1x1x256xf32>
    %26 = vector.shape_cast %25 : vector<1x1x256xf32> to vector<1x256xf32>
    %27 = vector.shape_cast %26 : vector<1x256xf32> to vector<1x256xf32>
    %28 = vector.broadcast %27 : vector<1x256xf32> to vector<4x256xf32>
    %c2_30 = arith.constant 2 : index
    %c0_31 = arith.constant 0 : index
    %c0_32 = arith.constant 0 : index
    %29 = vector.load %arg6[%c2_30, %c0_31, %c0_32] : memref<9x1x256xf32, #tpu.memory_space<vmem>>, vector<1x1x256xf32>
    %30 = vector.shape_cast %29 : vector<1x1x256xf32> to vector<1x256xf32>
    %31 = vector.shape_cast %30 : vector<1x256xf32> to vector<1x256xf32>
    %32 = vector.broadcast %31 : vector<1x256xf32> to vector<4x256xf32>
    %c3_33 = arith.constant 3 : index
    %c0_34 = arith.constant 0 : index
    %c0_35 = arith.constant 0 : index
    %33 = vector.load %arg6[%c3_33, %c0_34, %c0_35] : memref<9x1x256xf32, #tpu.memory_space<vmem>>, vector<1x1x256xf32>
    %34 = vector.shape_cast %33 : vector<1x1x256xf32> to vector<1x256xf32>
    %35 = vector.shape_cast %34 : vector<1x256xf32> to vector<1x256xf32>
    %36 = vector.broadcast %35 : vector<1x256xf32> to vector<4x256xf32>
    %c5_36 = arith.constant 5 : index
    %c0_37 = arith.constant 0 : index
    %c0_38 = arith.constant 0 : index
    %37 = vector.load %arg6[%c5_36, %c0_37, %c0_38] : memref<9x1x256xf32, #tpu.memory_space<vmem>>, vector<1x1x256xf32>
    %38 = vector.shape_cast %37 : vector<1x1x256xf32> to vector<1x256xf32>
    %39 = vector.shape_cast %38 : vector<1x256xf32> to vector<1x256xf32>
    %40 = vector.broadcast %39 : vector<1x256xf32> to vector<4x256xf32>
    %c6_39 = arith.constant 6 : index
    %c0_40 = arith.constant 0 : index
    %c0_41 = arith.constant 0 : index
    %41 = vector.load %arg6[%c6_39, %c0_40, %c0_41] : memref<9x1x256xf32, #tpu.memory_space<vmem>>, vector<1x1x256xf32>
    %42 = vector.shape_cast %41 : vector<1x1x256xf32> to vector<1x256xf32>
    %43 = vector.shape_cast %42 : vector<1x256xf32> to vector<1x256xf32>
    %44 = vector.broadcast %43 : vector<1x256xf32> to vector<4x256xf32>
    %c7_42 = arith.constant 7 : index
    %c0_43 = arith.constant 0 : index
    %c0_44 = arith.constant 0 : index
    %45 = vector.load %arg6[%c7_42, %c0_43, %c0_44] : memref<9x1x256xf32, #tpu.memory_space<vmem>>, vector<1x1x256xf32>
    %46 = vector.shape_cast %45 : vector<1x1x256xf32> to vector<1x256xf32>
    %47 = vector.shape_cast %46 : vector<1x256xf32> to vector<1x256xf32>
    %48 = vector.broadcast %47 : vector<1x256xf32> to vector<4x256xf32>
    %c8_45 = arith.constant 8 : index
    %c0_46 = arith.constant 0 : index
    %c0_47 = arith.constant 0 : index
    %49 = vector.load %arg6[%c8_45, %c0_46, %c0_47] : memref<9x1x256xf32, #tpu.memory_space<vmem>>, vector<1x1x256xf32>
    %50 = vector.shape_cast %49 : vector<1x1x256xf32> to vector<1x256xf32>
    %51 = vector.shape_cast %50 : vector<1x256xf32> to vector<1x256xf32>
    %52 = vector.broadcast %51 : vector<1x256xf32> to vector<4x256xf32>
    %c0_48 = arith.constant 0 : index
    %c0_49 = arith.constant 0 : index
    %c0_50 = arith.constant 0 : index
    %53 = vector.load %arg1[%c0_48, %c0_49, %c0_50] : memref<2x8x256xf32, #tpu.memory_space<vmem>>, vector<1x8x256xf32>
    %54 = vector.shape_cast %53 : vector<1x8x256xf32> to vector<8x256xf32>
    %cst = arith.constant dense<0.000000e+00> : vector<8xf32>
    %55 = vector.multi_reduction <add>, %54, %cst [1] : vector<8x256xf32> to vector<8xf32>
    %56 = vector.shape_cast %55 : vector<8xf32> to vector<8x1xf32>
    %cst_51 = arith.constant 3.906250e-03 : f32
    %57 = vector.broadcast %cst_51 : f32 to vector<8x1xf32>
    %58 = arith.mulf %56, %57 : vector<8x1xf32>
    %59 = vector.broadcast %58 : vector<8x1xf32> to vector<8x256xf32>
    %60 = arith.subf %54, %59 : vector<8x256xf32>
    %61 = arith.mulf %60, %60 : vector<8x256xf32>
    %cst_52 = arith.constant dense<0.000000e+00> : vector<8xf32>
    %62 = vector.multi_reduction <add>, %61, %cst_52 [1] : vector<8x256xf32> to vector<8xf32>
    %63 = vector.shape_cast %62 : vector<8xf32> to vector<8x1xf32>
    %cst_53 = arith.constant 3.906250e-03 : f32
    %64 = vector.broadcast %cst_53 : f32 to vector<8x1xf32>
    %65 = arith.mulf %63, %64 : vector<8x1xf32>
    %cst_54 = arith.constant 9.99999974E-6 : f32
    %66 = vector.broadcast %cst_54 : f32 to vector<8x1xf32>
    %67 = arith.addf %65, %66 : vector<8x1xf32>
    %68 = math.rsqrt %67 : vector<8x1xf32>
    %69 = vector.broadcast %68 : vector<8x1xf32> to vector<8x256xf32>
    %70 = arith.mulf %60, %69 : vector<8x256xf32>
    %cst_55 = arith.constant 0.000000e+00 : f32
    %71 = vector.broadcast %cst_55 : f32 to vector<8x256xf32>
    %72 = arith.maximumf %70, %71 : vector<8x256xf32>
    %cst_56 = arith.constant dense<0.000000e+00> : vector<16x256xf32>
    %73 = tpu.matmul %0, %72, %cst_56 {dimension_numbers = #tpu.dot_dimension_numbers<[1], [0], [0], [1], [0, 0, 1, 1], [], []>} : vector<16x8xf32>, vector<8x256xf32>, vector<16x256xf32> -> vector<16x256xf32>
    %cst_57 = arith.constant dense<0.000000e+00> : vector<16xf32>
    %74 = vector.multi_reduction <add>, %73, %cst_57 [1] : vector<16x256xf32> to vector<16xf32>
    %75 = vector.shape_cast %74 : vector<16xf32> to vector<16x1xf32>
    %cst_58 = arith.constant 3.906250e-03 : f32
    %76 = vector.broadcast %cst_58 : f32 to vector<16x1xf32>
    %77 = arith.mulf %75, %76 : vector<16x1xf32>
    %78 = vector.broadcast %77 : vector<16x1xf32> to vector<16x256xf32>
    %79 = arith.subf %73, %78 : vector<16x256xf32>
    %80 = arith.mulf %79, %79 : vector<16x256xf32>
    %cst_59 = arith.constant dense<0.000000e+00> : vector<16xf32>
    %81 = vector.multi_reduction <add>, %80, %cst_59 [1] : vector<16x256xf32> to vector<16xf32>
    %82 = vector.shape_cast %81 : vector<16xf32> to vector<16x1xf32>
    %cst_60 = arith.constant 3.906250e-03 : f32
    %83 = vector.broadcast %cst_60 : f32 to vector<16x1xf32>
    %84 = arith.mulf %82, %83 : vector<16x1xf32>
    %cst_61 = arith.constant 9.99999974E-6 : f32
    %85 = vector.broadcast %cst_61 : f32 to vector<16x1xf32>
    %86 = arith.addf %84, %85 : vector<16x1xf32>
    %87 = math.rsqrt %86 : vector<16x1xf32>
    %88 = vector.broadcast %87 : vector<16x1xf32> to vector<16x256xf32>
    %89 = arith.mulf %79, %88 : vector<16x256xf32>
    %cst_62 = arith.constant 0.000000e+00 : f32
    %90 = vector.broadcast %cst_62 : f32 to vector<16x256xf32>
    %91 = arith.maximumf %89, %90 : vector<16x256xf32>
    %cst_63 = arith.constant dense<0.000000e+00> : vector<4x256xf32>
    %92 = tpu.matmul %1, %91, %cst_63 {dimension_numbers = #tpu.dot_dimension_numbers<[1], [0], [0], [1], [0, 0, 1, 1], [], []>} : vector<4x16xf32>, vector<16x256xf32>, vector<4x256xf32> -> vector<4x256xf32>
    %cst_64 = arith.constant dense<0.000000e+00> : vector<4xf32>
    %93 = vector.multi_reduction <add>, %92, %cst_64 [1] : vector<4x256xf32> to vector<4xf32>
    %94 = vector.shape_cast %93 : vector<4xf32> to vector<4x1xf32>
    %cst_65 = arith.constant 3.906250e-03 : f32
    %95 = vector.broadcast %cst_65 : f32 to vector<4x1xf32>
    %96 = arith.mulf %94, %95 : vector<4x1xf32>
    %97 = vector.broadcast %96 : vector<4x1xf32> to vector<4x256xf32>
    %98 = arith.subf %92, %97 : vector<4x256xf32>
    %99 = arith.mulf %98, %98 : vector<4x256xf32>
    %cst_66 = arith.constant dense<0.000000e+00> : vector<4xf32>
    %100 = vector.multi_reduction <add>, %99, %cst_66 [1] : vector<4x256xf32> to vector<4xf32>
    %101 = vector.shape_cast %100 : vector<4xf32> to vector<4x1xf32>
    %cst_67 = arith.constant 3.906250e-03 : f32
    %102 = vector.broadcast %cst_67 : f32 to vector<4x1xf32>
    %103 = arith.mulf %101, %102 : vector<4x1xf32>
    %cst_68 = arith.constant 9.99999974E-6 : f32
    %104 = vector.broadcast %cst_68 : f32 to vector<4x1xf32>
    %105 = arith.addf %103, %104 : vector<4x1xf32>
    %106 = math.rsqrt %105 : vector<4x1xf32>
    %107 = vector.broadcast %106 : vector<4x1xf32> to vector<4x256xf32>
    %108 = arith.mulf %98, %107 : vector<4x256xf32>
    %cst_69 = arith.constant 0.000000e+00 : f32
    %109 = vector.broadcast %cst_69 : f32 to vector<4x256xf32>
    %110 = arith.maximumf %108, %109 : vector<4x256xf32>
    %c34_i32 = arith.constant 34 : i32
    %111 = tpu.dynamic_rotate %110 by %c34_i32 dim 1 : vector<4x256xf32>, i32 -> vector<4x256xf32>
    %112 = arith.mulf %111, %24 : vector<4x256xf32>
    %cst_70 = arith.constant dense<0.000000e+00> : vector<4x256xf32>
    %113 = tpu.matmul %4, %112, %cst_70 {dimension_numbers = #tpu.dot_dimension_numbers<[1], [0], [0], [1], [0, 0, 1, 1], [], []>} : vector<4x4xf32>, vector<4x256xf32>, vector<4x256xf32> -> vector<4x256xf32>
    %c32_i32 = arith.constant 32 : i32
    %114 = tpu.dynamic_rotate %110 by %c32_i32 dim 1 : vector<4x256xf32>, i32 -> vector<4x256xf32>
    %115 = arith.mulf %114, %28 : vector<4x256xf32>
    %cst_71 = arith.constant dense<0.000000e+00> : vector<4x256xf32>
    %116 = tpu.matmul %6, %115, %cst_71 {dimension_numbers = #tpu.dot_dimension_numbers<[1], [0], [0], [1], [0, 0, 1, 1], [], []>} : vector<4x4xf32>, vector<4x256xf32>, vector<4x256xf32> -> vector<4x256xf32>
    %117 = arith.addf %113, %116 : vector<4x256xf32>
    %c30_i32 = arith.constant 30 : i32
    %118 = tpu.dynamic_rotate %110 by %c30_i32 dim 1 : vector<4x256xf32>, i32 -> vector<4x256xf32>
    %119 = arith.mulf %118, %32 : vector<4x256xf32>
    %cst_72 = arith.constant dense<0.000000e+00> : vector<4x256xf32>
    %120 = tpu.matmul %8, %119, %cst_72 {dimension_numbers = #tpu.dot_dimension_numbers<[1], [0], [0], [1], [0, 0, 1, 1], [], []>} : vector<4x4xf32>, vector<4x256xf32>, vector<4x256xf32> -> vector<4x256xf32>
    %121 = arith.addf %117, %120 : vector<4x256xf32>
    %c2_i32 = arith.constant 2 : i32
    %122 = tpu.dynamic_rotate %110 by %c2_i32 dim 1 : vector<4x256xf32>, i32 -> vector<4x256xf32>
    %123 = arith.mulf %122, %36 : vector<4x256xf32>
    %cst_73 = arith.constant dense<0.000000e+00> : vector<4x256xf32>
    %124 = tpu.matmul %10, %123, %cst_73 {dimension_numbers = #tpu.dot_dimension_numbers<[1], [0], [0], [1], [0, 0, 1, 1], [], []>} : vector<4x4xf32>, vector<4x256xf32>, vector<4x256xf32> -> vector<4x256xf32>
    %125 = arith.addf %121, %124 : vector<4x256xf32>
    %cst_74 = arith.constant dense<0.000000e+00> : vector<4x256xf32>
    %126 = tpu.matmul %12, %110, %cst_74 {dimension_numbers = #tpu.dot_dimension_numbers<[1], [0], [0], [1], [0, 0, 1, 1], [], []>} : vector<4x4xf32>, vector<4x256xf32>, vector<4x256xf32> -> vector<4x256xf32>
    %127 = arith.addf %125, %126 : vector<4x256xf32>
    %c254_i32 = arith.constant 254 : i32
    %128 = tpu.dynamic_rotate %110 by %c254_i32 dim 1 : vector<4x256xf32>, i32 -> vector<4x256xf32>
    %129 = arith.mulf %128, %40 : vector<4x256xf32>
    %cst_75 = arith.constant dense<0.000000e+00> : vector<4x256xf32>
    %130 = tpu.matmul %14, %129, %cst_75 {dimension_numbers = #tpu.dot_dimension_numbers<[1], [0], [0], [1], [0, 0, 1, 1], [], []>} : vector<4x4xf32>, vector<4x256xf32>, vector<4x256xf32> -> vector<4x256xf32>
    %131 = arith.addf %127, %130 : vector<4x256xf32>
    %c226_i32 = arith.constant 226 : i32
    %132 = tpu.dynamic_rotate %110 by %c226_i32 dim 1 : vector<4x256xf32>, i32 -> vector<4x256xf32>
    %133 = arith.mulf %132, %44 : vector<4x256xf32>
    %cst_76 = arith.constant dense<0.000000e+00> : vector<4x256xf32>
    %134 = tpu.matmul %16, %133, %cst_76 {dimension_numbers = #tpu.dot_dimension_numbers<[1], [0], [0], [1], [0, 0, 1, 1], [], []>} : vector<4x4xf32>, vector<4x256xf32>, vector<4x256xf32> -> vector<4x256xf32>
    %135 = arith.addf %131, %134 : vector<4x256xf32>
    %c224_i32 = arith.constant 224 : i32
    %136 = tpu.dynamic_rotate %110 by %c224_i32 dim 1 : vector<4x256xf32>, i32 -> vector<4x256xf32>
    %137 = arith.mulf %136, %48 : vector<4x256xf32>
    %cst_77 = arith.constant dense<0.000000e+00> : vector<4x256xf32>
    %138 = tpu.matmul %18, %137, %cst_77 {dimension_numbers = #tpu.dot_dimension_numbers<[1], [0], [0], [1], [0, 0, 1, 1], [], []>} : vector<4x4xf32>, vector<4x256xf32>, vector<4x256xf32> -> vector<4x256xf32>
    %139 = arith.addf %135, %138 : vector<4x256xf32>
    %c222_i32 = arith.constant 222 : i32
    %140 = tpu.dynamic_rotate %110 by %c222_i32 dim 1 : vector<4x256xf32>, i32 -> vector<4x256xf32>
    %141 = arith.mulf %140, %52 : vector<4x256xf32>
    %cst_78 = arith.constant dense<0.000000e+00> : vector<4x256xf32>
    %142 = tpu.matmul %20, %141, %cst_78 {dimension_numbers = #tpu.dot_dimension_numbers<[1], [0], [0], [1], [0, 0, 1, 1], [], []>} : vector<4x4xf32>, vector<4x256xf32>, vector<4x256xf32> -> vector<4x256xf32>
    %143 = arith.addf %139, %142 : vector<4x256xf32>
    %cst_79 = arith.constant dense<0.000000e+00> : vector<4xf32>
    %144 = vector.multi_reduction <add>, %143, %cst_79 [1] : vector<4x256xf32> to vector<4xf32>
    %145 = vector.shape_cast %144 : vector<4xf32> to vector<4x1xf32>
    %cst_80 = arith.constant 3.906250e-03 : f32
    %146 = vector.broadcast %cst_80 : f32 to vector<4x1xf32>
    %147 = arith.mulf %145, %146 : vector<4x1xf32>
    %148 = vector.broadcast %147 : vector<4x1xf32> to vector<4x256xf32>
    %149 = arith.subf %143, %148 : vector<4x256xf32>
    %150 = arith.mulf %149, %149 : vector<4x256xf32>
    %cst_81 = arith.constant dense<0.000000e+00> : vector<4xf32>
    %151 = vector.multi_reduction <add>, %150, %cst_81 [1] : vector<4x256xf32> to vector<4xf32>
    %152 = vector.shape_cast %151 : vector<4xf32> to vector<4x1xf32>
    %cst_82 = arith.constant 3.906250e-03 : f32
    %153 = vector.broadcast %cst_82 : f32 to vector<4x1xf32>
    %154 = arith.mulf %152, %153 : vector<4x1xf32>
    %cst_83 = arith.constant 9.99999974E-6 : f32
    %155 = vector.broadcast %cst_83 : f32 to vector<4x1xf32>
    %156 = arith.addf %154, %155 : vector<4x1xf32>
    %157 = math.rsqrt %156 : vector<4x1xf32>
    %158 = vector.broadcast %157 : vector<4x1xf32> to vector<4x256xf32>
    %159 = arith.mulf %149, %158 : vector<4x256xf32>
    %cst_84 = arith.constant 0.000000e+00 : f32
    %160 = vector.broadcast %cst_84 : f32 to vector<4x256xf32>
    %161 = arith.maximumf %159, %160 : vector<4x256xf32>
    %cst_85 = arith.constant dense<0.000000e+00> : vector<16x256xf32>
    %162 = tpu.matmul %2, %161, %cst_85 {dimension_numbers = #tpu.dot_dimension_numbers<[1], [0], [0], [1], [0, 0, 1, 1], [], []>} : vector<16x4xf32>, vector<4x256xf32>, vector<16x256xf32> -> vector<16x256xf32>
    %163 = arith.addf %162, %73 : vector<16x256xf32>
    %c0_86 = arith.constant 0 : index
    %c0_87 = arith.constant 0 : index
    %c0_88 = arith.constant 0 : index
    %164 = vector.load %arg7[%c0_86, %c0_87, %c0_88] : memref<2x16x256xf32, #tpu.memory_space<vmem>>, vector<1x16x256xf32>
    %165 = vector.shape_cast %164 : vector<1x16x256xf32> to vector<16x256xf32>
    %166 = vector.shape_cast %163 : vector<16x256xf32> to vector<1x16x256xf32>
    tpu.vector_store %arg7[%c0_86, %c0_87, %c0_88], %166 {strides = array<i32>} : memref<2x16x256xf32, #tpu.memory_space<vmem>>, vector<1x16x256xf32>,
    %c1_89 = arith.constant 1 : index
    %c0_90 = arith.constant 0 : index
    %c0_91 = arith.constant 0 : index
    %167 = vector.load %arg1[%c1_89, %c0_90, %c0_91] : memref<2x8x256xf32, #tpu.memory_space<vmem>>, vector<1x8x256xf32>
    %168 = vector.shape_cast %167 : vector<1x8x256xf32> to vector<8x256xf32>
    %cst_92 = arith.constant dense<0.000000e+00> : vector<8xf32>
    %169 = vector.multi_reduction <add>, %168, %cst_92 [1] : vector<8x256xf32> to vector<8xf32>
    %170 = vector.shape_cast %169 : vector<8xf32> to vector<8x1xf32>
    %cst_93 = arith.constant 3.906250e-03 : f32
    %171 = vector.broadcast %cst_93 : f32 to vector<8x1xf32>
    %172 = arith.mulf %170, %171 : vector<8x1xf32>
    %173 = vector.broadcast %172 : vector<8x1xf32> to vector<8x256xf32>
    %174 = arith.subf %168, %173 : vector<8x256xf32>
    %175 = arith.mulf %174, %174 : vector<8x256xf32>
    %cst_94 = arith.constant dense<0.000000e+00> : vector<8xf32>
    %176 = vector.multi_reduction <add>, %175, %cst_94 [1] : vector<8x256xf32> to vector<8xf32>
    %177 = vector.shape_cast %176 : vector<8xf32> to vector<8x1xf32>
    %cst_95 = arith.constant 3.906250e-03 : f32
    %178 = vector.broadcast %cst_95 : f32 to vector<8x1xf32>
    %179 = arith.mulf %177, %178 : vector<8x1xf32>
    %cst_96 = arith.constant 9.99999974E-6 : f32
    %180 = vector.broadcast %cst_96 : f32 to vector<8x1xf32>
    %181 = arith.addf %179, %180 : vector<8x1xf32>
    %182 = math.rsqrt %181 : vector<8x1xf32>
    %183 = vector.broadcast %182 : vector<8x1xf32> to vector<8x256xf32>
    %184 = arith.mulf %174, %183 : vector<8x256xf32>
    %cst_97 = arith.constant 0.000000e+00 : f32
    %185 = vector.broadcast %cst_97 : f32 to vector<8x256xf32>
    %186 = arith.maximumf %184, %185 : vector<8x256xf32>
    %cst_98 = arith.constant dense<0.000000e+00> : vector<16x256xf32>
    %187 = tpu.matmul %0, %186, %cst_98 {dimension_numbers = #tpu.dot_dimension_numbers<[1], [0], [0], [1], [0, 0, 1, 1], [], []>} : vector<16x8xf32>, vector<8x256xf32>, vector<16x256xf32> -> vector<16x256xf32>
    %cst_99 = arith.constant dense<0.000000e+00> : vector<16xf32>
    %188 = vector.multi_reduction <add>, %187, %cst_99 [1] : vector<16x256xf32> to vector<16xf32>
    %189 = vector.shape_cast %188 : vector<16xf32> to vector<16x1xf32>
    %cst_100 = arith.constant 3.906250e-03 : f32
    %190 = vector.broadcast %cst_100 : f32 to vector<16x1xf32>
    %191 = arith.mulf %189, %190 : vector<16x1xf32>
    %192 = vector.broadcast %191 : vector<16x1xf32> to vector<16x256xf32>
    %193 = arith.subf %187, %192 : vector<16x256xf32>
    %194 = arith.mulf %193, %193 : vector<16x256xf32>
    %cst_101 = arith.constant dense<0.000000e+00> : vector<16xf32>
    %195 = vector.multi_reduction <add>, %194, %cst_101 [1] : vector<16x256xf32> to vector<16xf32>
    %196 = vector.shape_cast %195 : vector<16xf32> to vector<16x1xf32>
    %cst_102 = arith.constant 3.906250e-03 : f32
    %197 = vector.broadcast %cst_102 : f32 to vector<16x1xf32>
    %198 = arith.mulf %196, %197 : vector<16x1xf32>
    %cst_103 = arith.constant 9.99999974E-6 : f32
    %199 = vector.broadcast %cst_103 : f32 to vector<16x1xf32>
    %200 = arith.addf %198, %199 : vector<16x1xf32>
    %201 = math.rsqrt %200 : vector<16x1xf32>
    %202 = vector.broadcast %201 : vector<16x1xf32> to vector<16x256xf32>
    %203 = arith.mulf %193, %202 : vector<16x256xf32>
    %cst_104 = arith.constant 0.000000e+00 : f32
    %204 = vector.broadcast %cst_104 : f32 to vector<16x256xf32>
    %205 = arith.maximumf %203, %204 : vector<16x256xf32>
    %cst_105 = arith.constant dense<0.000000e+00> : vector<4x256xf32>
    %206 = tpu.matmul %1, %205, %cst_105 {dimension_numbers = #tpu.dot_dimension_numbers<[1], [0], [0], [1], [0, 0, 1, 1], [], []>} : vector<4x16xf32>, vector<16x256xf32>, vector<4x256xf32> -> vector<4x256xf32>
    %cst_106 = arith.constant dense<0.000000e+00> : vector<4xf32>
    %207 = vector.multi_reduction <add>, %206, %cst_106 [1] : vector<4x256xf32> to vector<4xf32>
    %208 = vector.shape_cast %207 : vector<4xf32> to vector<4x1xf32>
    %cst_107 = arith.constant 3.906250e-03 : f32
    %209 = vector.broadcast %cst_107 : f32 to vector<4x1xf32>
    %210 = arith.mulf %208, %209 : vector<4x1xf32>
    %211 = vector.broadcast %210 : vector<4x1xf32> to vector<4x256xf32>
    %212 = arith.subf %206, %211 : vector<4x256xf32>
    %213 = arith.mulf %212, %212 : vector<4x256xf32>
    %cst_108 = arith.constant dense<0.000000e+00> : vector<4xf32>
    %214 = vector.multi_reduction <add>, %213, %cst_108 [1] : vector<4x256xf32> to vector<4xf32>
    %215 = vector.shape_cast %214 : vector<4xf32> to vector<4x1xf32>
    %cst_109 = arith.constant 3.906250e-03 : f32
    %216 = vector.broadcast %cst_109 : f32 to vector<4x1xf32>
    %217 = arith.mulf %215, %216 : vector<4x1xf32>
    %cst_110 = arith.constant 9.99999974E-6 : f32
    %218 = vector.broadcast %cst_110 : f32 to vector<4x1xf32>
    %219 = arith.addf %217, %218 : vector<4x1xf32>
    %220 = math.rsqrt %219 : vector<4x1xf32>
    %221 = vector.broadcast %220 : vector<4x1xf32> to vector<4x256xf32>
    %222 = arith.mulf %212, %221 : vector<4x256xf32>
    %cst_111 = arith.constant 0.000000e+00 : f32
    %223 = vector.broadcast %cst_111 : f32 to vector<4x256xf32>
    %224 = arith.maximumf %222, %223 : vector<4x256xf32>
    %c34_i32_112 = arith.constant 34 : i32
    %225 = tpu.dynamic_rotate %224 by %c34_i32_112 dim 1 : vector<4x256xf32>, i32 -> vector<4x256xf32>
    %226 = arith.mulf %225, %24 : vector<4x256xf32>
    %cst_113 = arith.constant dense<0.000000e+00> : vector<4x256xf32>
    %227 = tpu.matmul %4, %226, %cst_113 {dimension_numbers = #tpu.dot_dimension_numbers<[1], [0], [0], [1], [0, 0, 1, 1], [], []>} : vector<4x4xf32>, vector<4x256xf32>, vector<4x256xf32> -> vector<4x256xf32>
    %c32_i32_114 = arith.constant 32 : i32
    %228 = tpu.dynamic_rotate %224 by %c32_i32_114 dim 1 : vector<4x256xf32>, i32 -> vector<4x256xf32>
    %229 = arith.mulf %228, %28 : vector<4x256xf32>
    %cst_115 = arith.constant dense<0.000000e+00> : vector<4x256xf32>
    %230 = tpu.matmul %6, %229, %cst_115 {dimension_numbers = #tpu.dot_dimension_numbers<[1], [0], [0], [1], [0, 0, 1, 1], [], []>} : vector<4x4xf32>, vector<4x256xf32>, vector<4x256xf32> -> vector<4x256xf32>
    %231 = arith.addf %227, %230 : vector<4x256xf32>
    %c30_i32_116 = arith.constant 30 : i32
    %232 = tpu.dynamic_rotate %224 by %c30_i32_116 dim 1 : vector<4x256xf32>, i32 -> vector<4x256xf32>
    %233 = arith.mulf %232, %32 : vector<4x256xf32>
    %cst_117 = arith.constant dense<0.000000e+00> : vector<4x256xf32>
    %234 = tpu.matmul %8, %233, %cst_117 {dimension_numbers = #tpu.dot_dimension_numbers<[1], [0], [0], [1], [0, 0, 1, 1], [], []>} : vector<4x4xf32>, vector<4x256xf32>, vector<4x256xf32> -> vector<4x256xf32>
    %235 = arith.addf %231, %234 : vector<4x256xf32>
    %c2_i32_118 = arith.constant 2 : i32
    %236 = tpu.dynamic_rotate %224 by %c2_i32_118 dim 1 : vector<4x256xf32>, i32 -> vector<4x256xf32>
    %237 = arith.mulf %236, %36 : vector<4x256xf32>
    %cst_119 = arith.constant dense<0.000000e+00> : vector<4x256xf32>
    %238 = tpu.matmul %10, %237, %cst_119 {dimension_numbers = #tpu.dot_dimension_numbers<[1], [0], [0], [1], [0, 0, 1, 1], [], []>} : vector<4x4xf32>, vector<4x256xf32>, vector<4x256xf32> -> vector<4x256xf32>
    %239 = arith.addf %235, %238 : vector<4x256xf32>
    %cst_120 = arith.constant dense<0.000000e+00> : vector<4x256xf32>
    %240 = tpu.matmul %12, %224, %cst_120 {dimension_numbers = #tpu.dot_dimension_numbers<[1], [0], [0], [1], [0, 0, 1, 1], [], []>} : vector<4x4xf32>, vector<4x256xf32>, vector<4x256xf32> -> vector<4x256xf32>
    %241 = arith.addf %239, %240 : vector<4x256xf32>
    %c254_i32_121 = arith.constant 254 : i32
    %242 = tpu.dynamic_rotate %224 by %c254_i32_121 dim 1 : vector<4x256xf32>, i32 -> vector<4x256xf32>
    %243 = arith.mulf %242, %40 : vector<4x256xf32>
    %cst_122 = arith.constant dense<0.000000e+00> : vector<4x256xf32>
    %244 = tpu.matmul %14, %243, %cst_122 {dimension_numbers = #tpu.dot_dimension_numbers<[1], [0], [0], [1], [0, 0, 1, 1], [], []>} : vector<4x4xf32>, vector<4x256xf32>, vector<4x256xf32> -> vector<4x256xf32>
    %245 = arith.addf %241, %244 : vector<4x256xf32>
    %c226_i32_123 = arith.constant 226 : i32
    %246 = tpu.dynamic_rotate %224 by %c226_i32_123 dim 1 : vector<4x256xf32>, i32 -> vector<4x256xf32>
    %247 = arith.mulf %246, %44 : vector<4x256xf32>
    %cst_124 = arith.constant dense<0.000000e+00> : vector<4x256xf32>
    %248 = tpu.matmul %16, %247, %cst_124 {dimension_numbers = #tpu.dot_dimension_numbers<[1], [0], [0], [1], [0, 0, 1, 1], [], []>} : vector<4x4xf32>, vector<4x256xf32>, vector<4x256xf32> -> vector<4x256xf32>
    %249 = arith.addf %245, %248 : vector<4x256xf32>
    %c224_i32_125 = arith.constant 224 : i32
    %250 = tpu.dynamic_rotate %224 by %c224_i32_125 dim 1 : vector<4x256xf32>, i32 -> vector<4x256xf32>
    %251 = arith.mulf %250, %48 : vector<4x256xf32>
    %cst_126 = arith.constant dense<0.000000e+00> : vector<4x256xf32>
    %252 = tpu.matmul %18, %251, %cst_126 {dimension_numbers = #tpu.dot_dimension_numbers<[1], [0], [0], [1], [0, 0, 1, 1], [], []>} : vector<4x4xf32>, vector<4x256xf32>, vector<4x256xf32> -> vector<4x256xf32>
    %253 = arith.addf %249, %252 : vector<4x256xf32>
    %c222_i32_127 = arith.constant 222 : i32
    %254 = tpu.dynamic_rotate %224 by %c222_i32_127 dim 1 : vector<4x256xf32>, i32 -> vector<4x256xf32>
    %255 = arith.mulf %254, %52 : vector<4x256xf32>
    %cst_128 = arith.constant dense<0.000000e+00> : vector<4x256xf32>
    %256 = tpu.matmul %20, %255, %cst_128 {dimension_numbers = #tpu.dot_dimension_numbers<[1], [0], [0], [1], [0, 0, 1, 1], [], []>} : vector<4x4xf32>, vector<4x256xf32>, vector<4x256xf32> -> vector<4x256xf32>
    %257 = arith.addf %253, %256 : vector<4x256xf32>
    %cst_129 = arith.constant dense<0.000000e+00> : vector<4xf32>
    %258 = vector.multi_reduction <add>, %257, %cst_129 [1] : vector<4x256xf32> to vector<4xf32>
    %259 = vector.shape_cast %258 : vector<4xf32> to vector<4x1xf32>
    %cst_130 = arith.constant 3.906250e-03 : f32
    %260 = vector.broadcast %cst_130 : f32 to vector<4x1xf32>
    %261 = arith.mulf %259, %260 : vector<4x1xf32>
    %262 = vector.broadcast %261 : vector<4x1xf32> to vector<4x256xf32>
    %263 = arith.subf %257, %262 : vector<4x256xf32>
    %264 = arith.mulf %263, %263 : vector<4x256xf32>
    %cst_131 = arith.constant dense<0.000000e+00> : vector<4xf32>
    %265 = vector.multi_reduction <add>, %264, %cst_131 [1] : vector<4x256xf32> to vector<4xf32>
    %266 = vector.shape_cast %265 : vector<4xf32> to vector<4x1xf32>
    %cst_132 = arith.constant 3.906250e-03 : f32
    %267 = vector.broadcast %cst_132 : f32 to vector<4x1xf32>
    %268 = arith.mulf %266, %267 : vector<4x1xf32>
    %cst_133 = arith.constant 9.99999974E-6 : f32
    %269 = vector.broadcast %cst_133 : f32 to vector<4x1xf32>
    %270 = arith.addf %268, %269 : vector<4x1xf32>
    %271 = math.rsqrt %270 : vector<4x1xf32>
    %272 = vector.broadcast %271 : vector<4x1xf32> to vector<4x256xf32>
    %273 = arith.mulf %263, %272 : vector<4x256xf32>
    %cst_134 = arith.constant 0.000000e+00 : f32
    %274 = vector.broadcast %cst_134 : f32 to vector<4x256xf32>
    %275 = arith.maximumf %273, %274 : vector<4x256xf32>
    %cst_135 = arith.constant dense<0.000000e+00> : vector<16x256xf32>
    %276 = tpu.matmul %2, %275, %cst_135 {dimension_numbers = #tpu.dot_dimension_numbers<[1], [0], [0], [1], [0, 0, 1, 1], [], []>} : vector<16x4xf32>, vector<4x256xf32>, vector<16x256xf32> -> vector<16x256xf32>
    %277 = arith.addf %276, %187 : vector<16x256xf32>
    %c1_136 = arith.constant 1 : index
    %c0_137 = arith.constant 0 : index
    %c0_138 = arith.constant 0 : index
    %278 = vector.load %arg7[%c1_136, %c0_137, %c0_138] : memref<2x16x256xf32, #tpu.memory_space<vmem>>, vector<1x16x256xf32>
    %279 = vector.shape_cast %278 : vector<1x16x256xf32> to vector<16x256xf32>
    %280 = vector.shape_cast %277 : vector<16x256xf32> to vector<1x16x256xf32>
    tpu.vector_store %arg7[%c1_136, %c0_137, %c0_138], %280 {strides = array<i32>} : memref<2x16x256xf32, #tpu.memory_space<vmem>>, vector<1x16x256xf32>,
    return
  }
  func.func @transform_0(%arg0: i32) -> (i32, i32, i32) {
    %c0_i32 = arith.constant 0 : i32
    %c0_i32_0 = arith.constant 0 : i32
    %c0_i32_1 = arith.constant 0 : i32
    return %arg0, %c0_i32, %c0_i32_0 : i32, i32, i32
  }
  func.func @transform_1(%arg0: i32) -> (i32, i32) {
    %c0_i32 = arith.constant 0 : i32
    %c0_i32_0 = arith.constant 0 : i32
    %c0_i32_1 = arith.constant 0 : i32
    return %c0_i32, %c0_i32_0 : i32, i32
  }
  func.func @transform_2(%arg0: i32) -> (i32, i32) {
    %c0_i32 = arith.constant 0 : i32
    %c0_i32_0 = arith.constant 0 : i32
    %c0_i32_1 = arith.constant 0 : i32
    return %c0_i32, %c0_i32_0 : i32, i32
  }
  func.func @transform_3(%arg0: i32) -> (i32, i32, i32) {
    %c0_i32 = arith.constant 0 : i32
    %c0_i32_0 = arith.constant 0 : i32
    %c0_i32_1 = arith.constant 0 : i32
    %c0_i32_2 = arith.constant 0 : i32
    return %c0_i32, %c0_i32_0, %c0_i32_1 : i32, i32, i32
  }
  func.func @transform_4(%arg0: i32) -> (i32, i32) {
    %c0_i32 = arith.constant 0 : i32
    %c0_i32_0 = arith.constant 0 : i32
    %c0_i32_1 = arith.constant 0 : i32
    return %c0_i32, %c0_i32_0 : i32, i32
  }
  func.func @transform_5(%arg0: i32) -> (i32, i32, i32) {
    %c0_i32 = arith.constant 0 : i32
    %c0_i32_0 = arith.constant 0 : i32
    %c0_i32_1 = arith.constant 0 : i32
    %c0_i32_2 = arith.constant 0 : i32
    return %c0_i32, %c0_i32_0, %c0_i32_1 : i32, i32, i32
  }
  func.func @transform_6(%arg0: i32) -> (i32, i32, i32) {
    %c0_i32 = arith.constant 0 : i32
    %c0_i32_0 = arith.constant 0 : i32
    %c0_i32_1 = arith.constant 0 : i32
    return %arg0, %c0_i32, %c0_i32_0 : i32, i32, i32
  }
}

</mosaic_0001>

<llo_original>
// kernel: tpu_custom_call.1
$region0: #{tpu_custom_call.1}
  #allocation0 [shape = 'u32[]', space=smem, size = 0x4, offset = 0x4, fixed_abs, tag = 'smem constant byte address 0x4 - core index']
  #allocation1 [shape = 'u32[144,128]{1,0:T(1,128)}', space=vmem, size = 0x12000, scoped, tag = 'internal scratch']
  %s0 = inlined_call_operand.vmem [shape: f32[4,8,256], index: 0, kind: input, shape index: {}]
  %s1 = inlined_call_operand.vmem [shape: f32[16,8], index: 1, kind: input, shape index: {}]
  %s2 = inlined_call_operand.vmem [shape: f32[4,16], index: 2, kind: input, shape index: {}]
  %s3 = inlined_call_operand.vmem [shape: f32[9,4,4], index: 3, kind: input, shape index: {}]
  %s4 = inlined_call_operand.vmem [shape: f32[16,4], index: 4, kind: input, shape index: {}]
  %s5 = inlined_call_operand.vmem [shape: f32[9,1,256], index: 5, kind: input, shape index: {}]
  %s6 = inlined_call_operand.hbm [shape: f32[4,16,256], index: 6, kind: output, shape index: {}]
  %s7 = sld [smem:[#allocation0]]
  $region57: #{tpu_custom_call.1} parent=0
    _
  %s9 = ssub.s32 1, %s7
  %s10 = scalar_select 0, %s9, %s7
  $region1: #{tpu_custom_call.1} parent=0
    #allocation2 [shape = 'u8[65536]{0}', space=vmem, size = 0x10000, scoped, tag = 'output window, operand 0']
    #allocation3 [shape = 's32[2]{0}', space=sflag, size = 0x8, scoped, tag = 'scoped memory for tpu_custom_call.1']
    %11 = vsyncpa [#allocation3], 0
    %s12 = scalar_lea.sflag [#allocation3], 1
    %13 = vsyncpa %s12, 0
    loop: start=0, step=1, limit=4
    $region2: #{tpu_custom_call.1} parent=1 // loop_pre_header
      _
    $region3: #{tpu_custom_call.1} parent=1 // loop_header
      %s15 = sphi 0, %s19
      %p16 = scmp.ge.s32.totalorder %s15, 4
      %s25 = sphi 0, %s27
      %s28 = sphi 0, %s25
      %s29 = sphi 0, %s28
      %s45 = sphi 0, %s29
      %s49 = sphi 0, %s49
      %s51 = sphi 0, %s49
      %s52 = sphi 0, %s51
      %s66 = sphi 0, %s52
      %s70 = sphi 0, %s70
      %s72 = sphi 0, %s70
      %s73 = sphi 0, %s72
      %s87 = sphi 0, %s73
      %s91 = sphi 0, %s91
      %s93 = sphi 0, %s91
      %s94 = sphi 0, %s93
      %s108 = sphi 0, %s94
      %s112 = sphi 0, %s112
      %s114 = sphi 0, %s112
      %s115 = sphi 0, %s114
      %s129 = sphi 0, %s115
      %s133 = sphi 0, %s133
      %s135 = sphi 0, %s133
      %s136 = sphi 0, %s135
      %s150 = sphi 0, %s136
      %s156 = sphi 0, %s158
      %s159 = sphi 0, %s156
      %s160 = sphi 0, %s159
      %s176 = sphi 0, %s160
    $region4: #{tpu_custom_call.1} parent=1 // loop_header_branch
      %18 = sbr.rel (%p16) target = $region8
    $region5: #{tpu_custom_call.1} parent=1 // loop_body
      %s20 = ssub.s32 %s15, 1
      %s21 = ssub.s32 %s15, 2
      %s22 = sadd.s32 %s15, 1
      %s23 = ssub.s32 %s15, %s22
      %p24 = scmp.eq.s32.totalorder %s23, 0
      %s26 = sadd.s32 %s25, 1
      %s27 = scalar_select %p24, %s25, %s26
      %p30 = pneg %p24
      %p31 = scmp.eq.s32.totalorder %s15, 1
      %p32 = por %p30, %p31
      %p33 = scmp.ne.s32.totalorder %s25, %s28
      %p34 = scmp.eq.s32.totalorder %s15, 0
      %p35 = por %p33, %p34
      %p36 = scmp.ne.s32.totalorder %s25, %s28
      %p37 = scmp.eq.s32.totalorder %s20, 1
      %p38 = por %p36, %p37
      %p39 = scmp.ne.s32.totalorder %s28, %s29
      %p40 = scmp.eq.s32.totalorder %s20, 0
      %p41 = por %p39, %p40
      %p42 = scmp.ne.s32.totalorder %s28, %s29
      %p43 = scmp.eq.s32.totalorder %s21, 1
      %p44 = por %p42, %p43
      %p46 = scmp.ne.s32.totalorder %s29, %s45
      %p47 = scmp.eq.s32.totalorder %s21, 0
      %p48 = por %p46, %p47
      %s50 = sadd.s32 %s49, 1
      %p53 = scmp.eq.s32.totalorder %s15, 1
      %p54 = scmp.ne.s32.totalorder %s49, %s51
      %p55 = scmp.eq.s32.totalorder %s15, 0
      %p56 = por %p54, %p55
      %p57 = scmp.ne.s32.totalorder %s49, %s51
      %p58 = scmp.eq.s32.totalorder %s20, 1
      %p59 = por %p57, %p58
      %p60 = scmp.ne.s32.totalorder %s51, %s52
      %p61 = scmp.eq.s32.totalorder %s20, 0
      %p62 = por %p60, %p61
      %p63 = scmp.ne.s32.totalorder %s51, %s52
      %p64 = scmp.eq.s32.totalorder %s21, 1
      %p65 = por %p63, %p64
      %p67 = scmp.ne.s32.totalorder %s52, %s66
      %p68 = scmp.eq.s32.totalorder %s21, 0
      %p69 = por %p67, %p68
      %s71 = sadd.s32 %s70, 1
      %p74 = scmp.eq.s32.totalorder %s15, 1
      %p75 = scmp.ne.s32.totalorder %s70, %s72
      %p76 = scmp.eq.s32.totalorder %s15, 0
      %p77 = por %p75, %p76
      %p78 = scmp.ne.s32.totalorder %s70, %s72
      %p79 = scmp.eq.s32.totalorder %s20, 1
      %p80 = por %p78, %p79
      %p81 = scmp.ne.s32.totalorder %s72, %s73
      %p82 = scmp.eq.s32.totalorder %s20, 0
      %p83 = por %p81, %p82
      %p84 = scmp.ne.s32.totalorder %s72, %s73
      %p85 = scmp.eq.s32.totalorder %s21, 1
      %p86 = por %p84, %p85
      %p88 = scmp.ne.s32.totalorder %s73, %s87
      %p89 = scmp.eq.s32.totalorder %s21, 0
      %p90 = por %p88, %p89
      %s92 = sadd.s32 %s91, 1
      %p95 = scmp.eq.s32.totalorder %s15, 1
      %p96 = scmp.ne.s32.totalorder %s91, %s93
      %p97 = scmp.eq.s32.totalorder %s15, 0
      %p98 = por %p96, %p97
      %p99 = scmp.ne.s32.totalorder %s91, %s93
      %p100 = scmp.eq.s32.totalorder %s20, 1
      %p101 = por %p99, %p100
      %p102 = scmp.ne.s32.totalorder %s93, %s94
      %p103 = scmp.eq.s32.totalorder %s20, 0
      %p104 = por %p102, %p103
      %p105 = scmp.ne.s32.totalorder %s93, %s94
      %p106 = scmp.eq.s32.totalorder %s21, 1
      %p107 = por %p105, %p106
      %p109 = scmp.ne.s32.totalorder %s94, %s108
      %p110 = scmp.eq.s32.totalorder %s21, 0
      %p111 = por %p109, %p110
      %s113 = sadd.s32 %s112, 1
      %p116 = scmp.eq.s32.totalorder %s15, 1
      %p117 = scmp.ne.s32.totalorder %s112, %s114
      %p118 = scmp.eq.s32.totalorder %s15, 0
      %p119 = por %p117, %p118
      %p120 = scmp.ne.s32.totalorder %s112, %s114
      %p121 = scmp.eq.s32.totalorder %s20, 1
      %p122 = por %p120, %p121
      %p123 = scmp.ne.s32.totalorder %s114, %s115
      %p124 = scmp.eq.s32.totalorder %s20, 0
      %p125 = por %p123, %p124
      %p126 = scmp.ne.s32.totalorder %s114, %s115
      %p127 = scmp.eq.s32.totalorder %s21, 1
      %p128 = por %p126, %p127
      %p130 = scmp.ne.s32.totalorder %s115, %s129
      %p131 = scmp.eq.s32.totalorder %s21, 0
      %p132 = por %p130, %p131
      %s134 = sadd.s32 %s133, 1
      %p137 = scmp.eq.s32.totalorder %s15, 1
      %p138 = scmp.ne.s32.totalorder %s133, %s135
      %p139 = scmp.eq.s32.totalorder %s15, 0
      %p140 = por %p138, %p139
      %p141 = scmp.ne.s32.totalorder %s133, %s135
      %p142 = scmp.eq.s32.totalorder %s20, 1
      %p143 = por %p141, %p142
      %p144 = scmp.ne.s32.totalorder %s135, %s136
      %p145 = scmp.eq.s32.totalorder %s20, 0
      %p146 = por %p144, %p145
      %p147 = scmp.ne.s32.totalorder %s135, %s136
      %p148 = scmp.eq.s32.totalorder %s21, 1
      %p149 = por %p147, %p148
      %p151 = scmp.ne.s32.totalorder %s136, %s150
      %p152 = scmp.eq.s32.totalorder %s21, 0
      %p153 = por %p151, %p152
      %s154 = ssub.s32 %s15, %s22
      %p155 = scmp.eq.s32.totalorder %s154, 0
      %s157 = sadd.s32 %s156, 1
      %s158 = scalar_select %p155, %s156, %s157
      %p161 = pneg %p155
      %p162 = scmp.eq.s32.totalorder %s15, 1
      %p163 = por %p161, %p162
      %p164 = scmp.ne.s32.totalorder %s156, %s159
      %p165 = scmp.eq.s32.totalorder %s15, 0
      %p166 = por %p164, %p165
      %p167 = scmp.ne.s32.totalorder %s156, %s159
      %p168 = scmp.eq.s32.totalorder %s20, 1
      %p169 = por %p167, %p168
      %p170 = scmp.ne.s32.totalorder %s159, %s160
      %p171 = scmp.eq.s32.totalorder %s20, 0
      %p172 = por %p170, %p171
      %p173 = scmp.ne.s32.totalorder %s159, %s160
      %p174 = scmp.eq.s32.totalorder %s21, 1
      %p175 = por %p173, %p174
      %p177 = scmp.ne.s32.totalorder %s160, %s176
      %p178 = scmp.eq.s32.totalorder %s21, 0
      %p179 = por %p177, %p178
      %p180 = scmp.le.s32.totalorder 1, %s15
      %p181 = scmp.lt.s32.totalorder %s15, 3
      %p182 = pnand %p180, %p181
      %p183 = pneg %p182
      // Predicated region
      $region9: #{tpu_custom_call.1} parent=5 // pred_check
        _
      $region10: #{tpu_custom_call.1} parent=5 // pred_check_branch
        %185 = sbr.rel (%p182) target = $region12
      $region11: #{tpu_custom_call.1} parent=5 // pred_region
        %s186 = ssub.s32 %s15, 1
        // Predicated region
        $region13: #{tpu_custom_call.1} parent=11 // pred_check
          %p187 = pneg %p62
        $region14: #{tpu_custom_call.1} parent=11 // pred_check_branch
          %189 = sbr.rel (%p187) target = $region16
        $region15: #{tpu_custom_call.1} parent=11 // pred_region
          _
        $region16: #{tpu_custom_call.1} parent=11 // pred_fallthru
          _
        // Predicated region
        $region17: #{tpu_custom_call.1} parent=11 // pred_check
          %p190 = pneg %p83
        $region18: #{tpu_custom_call.1} parent=11 // pred_check_branch
          %192 = sbr.rel (%p190) target = $region20
        $region19: #{tpu_custom_call.1} parent=11 // pred_region
          _
        $region20: #{tpu_custom_call.1} parent=11 // pred_fallthru
          _
        // Predicated region
        $region21: #{tpu_custom_call.1} parent=11 // pred_check
          %p193 = pneg %p104
        $region22: #{tpu_custom_call.1} parent=11 // pred_check_branch
          %195 = sbr.rel (%p193) target = $region24
        $region23: #{tpu_custom_call.1} parent=11 // pred_region
          _
        $region24: #{tpu_custom_call.1} parent=11 // pred_fallthru
          _
        // Predicated region
        $region25: #{tpu_custom_call.1} parent=11 // pred_check
          %p196 = pneg %p125
        $region26: #{tpu_custom_call.1} parent=11 // pred_check_branch
          %198 = sbr.rel (%p196) target = $region28
        $region27: #{tpu_custom_call.1} parent=11 // pred_region
          _
        $region28: #{tpu_custom_call.1} parent=11 // pred_fallthru
          _
        // Predicated region
        $region29: #{tpu_custom_call.1} parent=11 // pred_check
          %p199 = pneg %p146
        $region30: #{tpu_custom_call.1} parent=11 // pred_check_branch
          %201 = sbr.rel (%p199) target = $region32
        $region31: #{tpu_custom_call.1} parent=11 // pred_region
          _
        $region32: #{tpu_custom_call.1} parent=11 // pred_fallthru
          _
      $region12: #{tpu_custom_call.1} parent=5 // pred_fallthru
        _
      %p202 = scmp.lt.s32.totalorder %s15, 2
      // Predicated region
      $region33: #{tpu_custom_call.1} parent=5 // pred_check
        %p203 = pneg %p202
      $region34: #{tpu_custom_call.1} parent=5 // pred_check_branch
        %205 = sbr.rel (%p203) target = $region36
      $region35: #{tpu_custom_call.1} parent=5 // pred_region
        // Predicated region
        $region37: #{tpu_custom_call.1} parent=35 // pred_check
          %p206 = pneg %p35
        $region38: #{tpu_custom_call.1} parent=35 // pred_check_branch
          %208 = sbr.rel (%p206) target = $region40
        $region39: #{tpu_custom_call.1} parent=35 // pred_region
          %s209 = smul.u32 2, %s15
          %p210 = scmp.lt.s32.totalorder %s209, 3
          %s211 = scalar_select %p210, %s209, 3
          %s212 = smul.addr %s211, 2
          %s213 = smul.addr %s212, 8
          %s214 = scalar_lea.vmem %s0, %s213
          %s215 = smul.u32 2, %s15
        $region40: #{tpu_custom_call.1} parent=35 // pred_fallthru
          _
      $region36: #{tpu_custom_call.1} parent=5 // pred_fallthru
        _
      %p216 = scmp.le.s32.totalorder 1, %s15
      %p217 = scmp.lt.s32.totalorder %s15, 3
      %p218 = pnand %p216, %p217
      %p219 = pneg %p218
      // Predicated region
      $region41: #{tpu_custom_call.1} parent=5 // pred_check
        _
      $region42: #{tpu_custom_call.1} parent=5 // pred_check_branch
        %221 = sbr.rel (%p218) target = $region44
      $region43: #{tpu_custom_call.1} parent=5 // pred_region
        %s222 = ssub.s32 %s15, 1
        %s223 = smul.u32 2, %s20
        %p224 = scmp.lt.s32.totalorder %s223, 3
        %s225 = scalar_select %p224, %s223, 3
        %s226 = smul.addr %s225, 2
        %s227 = smul.addr %s226, 8
        %s228 = scalar_lea.vmem %s0, %s227
        %p229 = pneg %p41
        %p230 = pneg %p38
        %p231 = pneg %p62
        %p232 = pneg %p59
        %p233 = pneg %p83
        %p234 = pneg %p80
        %p235 = pneg %p104
        %p236 = pneg %p101
        %p237 = pneg %p125
        %p238 = pneg %p122
        %p239 = pneg %p146
        %p240 = pneg %p143
        %p241 = pneg %p172
        %p242 = pneg %p169
        %s243 = sand.u32 %s159, 1
        %s244 = scalar_lea.sflag [#allocation3], %s243
        %s245 = sand.u32 %s159, 1
        %s246 = smul.addr %s245, 64
        %s247 = scalar_lea.vmem [#allocation2], %s246
        %s248 = smul.u32 2, %s20
        %p249 = scmp.lt.s32.totalorder %s248, 3
        %s250 = scalar_select %p249, %s248, 3
        %s251 = smul.addr %s250, 2
        %s252 = smul.addr %s251, 8
        %s253 = scalar_lea.vmem %s0, %s252
        %s254 = smul.u32 2, %s20
        %s255 = smul.u32 2, %s20
        %v256 = vld [vmem:[%s1] sm:$0xff]
        %v257 = vld [vmem:[%s1 + $0x8] sm:$0xff]
        %v258 = vld [vmem:[%s2] sm:$0xf]
        %v259 = vld [vmem:[%s4] sm:$0xff]
        %v260 = vld [vmem:[%s4 + $0x8] sm:$0xff]
        %v261 = vld [vmem:[%s3] sm:$0xf]
        %s262 = scalar_lea.vmem %s3, 4
        %v263 = vld [vmem:[%s262] sm:$0xf]
        %s264 = scalar_lea.vmem %s3, 8
        %v265 = vld [vmem:[%s264] sm:$0xf]
        %s266 = scalar_lea.vmem %s3, 12
        %v267 = vld [vmem:[%s266] sm:$0xf]
        %s268 = scalar_lea.vmem %s3, 16
        %v269 = vld [vmem:[%s268] sm:$0xf]
        %s270 = scalar_lea.vmem %s3, 20
        %v271 = vld [vmem:[%s270] sm:$0xf]
        %s272 = scalar_lea.vmem %s3, 24
        %v273 = vld [vmem:[%s272] sm:$0xf]
        %s274 = scalar_lea.vmem %s3, 28
        %v275 = vld [vmem:[%s274] sm:$0xf]
        %s276 = scalar_lea.vmem %s3, 32
        %v277 = vld [vmem:[%s276] sm:$0xf]
        %v278 = vld [vmem:[%s5] sm:$0x3]
        %v280 = vlaneseq
        %v281 = vshrl.u32 %v280, 7
        %v282 = vsub.s32 0, %v281
        %v283 = vrot.slane %v278, %v282
        %v284 = vlaneseq
        %v285 = vshrl.u32 %v284, 7
        %v286 = vsub.s32 1, %v285
        %v287 = vrot.slane %v278, %v286
        %s290 = scalar_lea.vmem %s5, 2
        %v291 = vld [vmem:[%s290] sm:$0x3]
        %v293 = vlaneseq
        %v294 = vshrl.u32 %v293, 7
        %v295 = vsub.s32 0, %v294
        %v296 = vrot.slane %v291, %v295
        %v297 = vlaneseq
        %v298 = vshrl.u32 %v297, 7
        %v299 = vsub.s32 1, %v298
        %v300 = vrot.slane %v291, %v299
        %s303 = scalar_lea.vmem %s5, 4
        %v304 = vld [vmem:[%s303] sm:$0x3]
        %v306 = vlaneseq
        %v307 = vshrl.u32 %v306, 7
        %v308 = vsub.s32 0, %v307
        %v309 = vrot.slane %v304, %v308
        %v310 = vlaneseq
        %v311 = vshrl.u32 %v310, 7
        %v312 = vsub.s32 1, %v311
        %v313 = vrot.slane %v304, %v312
        %s316 = scalar_lea.vmem %s5, 6
        %v317 = vld [vmem:[%s316] sm:$0x3]
        %v319 = vlaneseq
        %v320 = vshrl.u32 %v319, 7
        %v321 = vsub.s32 0, %v320
        %v322 = vrot.slane %v317, %v321
        %v323 = vlaneseq
        %v324 = vshrl.u32 %v323, 7
        %v325 = vsub.s32 1, %v324
        %v326 = vrot.slane %v317, %v325
        %s329 = scalar_lea.vmem %s5, 10
        %v330 = vld [vmem:[%s329] sm:$0x3]
        %v332 = vlaneseq
        %v333 = vshrl.u32 %v332, 7
        %v334 = vsub.s32 0, %v333
        %v335 = vrot.slane %v330, %v334
        %v336 = vlaneseq
        %v337 = vshrl.u32 %v336, 7
        %v338 = vsub.s32 1, %v337
        %v339 = vrot.slane %v330, %v338
        %s342 = scalar_lea.vmem %s5, 12
        %v343 = vld [vmem:[%s342] sm:$0x3]
        %v345 = vlaneseq
        %v346 = vshrl.u32 %v345, 7
        %v347 = vsub.s32 0, %v346
        %v348 = vrot.slane %v343, %v347
        %v349 = vlaneseq
        %v350 = vshrl.u32 %v349, 7
        %v351 = vsub.s32 1, %v350
        %v352 = vrot.slane %v343, %v351
        %s355 = scalar_lea.vmem %s5, 14
        %v356 = vld [vmem:[%s355] sm:$0x3]
        %v358 = vlaneseq
        %v359 = vshrl.u32 %v358, 7
        %v360 = vsub.s32 0, %v359
        %v361 = vrot.slane %v356, %v360
        %v362 = vlaneseq
        %v363 = vshrl.u32 %v362, 7
        %v364 = vsub.s32 1, %v363
        %v365 = vrot.slane %v356, %v364
        %s368 = scalar_lea.vmem %s5, 16
        %v369 = vld [vmem:[%s368] sm:$0x3]
        %v371 = vlaneseq
        %v372 = vshrl.u32 %v371, 7
        %v373 = vsub.s32 0, %v372
        %v374 = vrot.slane %v369, %v373
        %v375 = vlaneseq
        %v376 = vshrl.u32 %v375, 7
        %v377 = vsub.s32 1, %v376
        %v378 = vrot.slane %v369, %v377
        %v381 = vld [vmem:[%s253] sm:$0xff]
        %v382 = vld [vmem:[%s253 + $0x8] sm:$0xff]
        %v383 = vadd.f32 %v381, %v382
        %384 = vadd.xlane.f32.xlu0 %v383
        %v385 = vpop.xlane.xlu0 %384
        %v386 = vmul.f32 %v385, 0.00390625
        %v387 = vsub.f32 %v381, %v386
        %v388 = vsub.f32 %v382, %v386
        %v389 = vmul.f32 %v387, %v387
        %v390 = vmul.f32 %v388, %v388
        %v391 = vadd.f32 %v389, %v390
        %392 = vadd.xlane.f32.xlu0 %v391
        %v393 = vpop.xlane.xlu0 %392
        %v394 = vmul.f32 %v393, 0.00390625
        %v395 = vadd.f32 %v394, 1e-05
        %v396 = vrsqrt.pop %v395
        %v397 = vmul.f32 %v387, %v396
        %v398 = vmul.f32 %v388, %v396
        %v399 = vmax.f32 %v397, 0.0
        %v400 = vmax.f32 %v398, 0.0
        %vm401 = vcmask 64512
        %v403 = vsel %vm401, %v256, 0
        %v406 = vsel %vm401, %v257, 0
        %408 = vmatprep.subr.mxu0 %v400
        %409 = vmatpush1.msra.mxu0 %v399
        %410 = vmatprep.subr.mxu0 0.0
        %411 = vmatpush1.msra.mxu0 0.0
        %412 = vmatprep.subr.mxu0 0.0
        %413 = vmatpush1.msra.mxu0 0.0
        %414 = vmatprep.subr.mxu0 0.0
        %415 = vmatpush1.msra.mxu0 0.0
        %416 = vmatprep.subr.mxu0 0.0
        %417 = vmatpush1.msra.mxu0 0.0
        %418 = vmatprep.subr.mxu0 0.0
        %419 = vmatpush1.msra.mxu0 0.0
        %420 = vmatprep.subr.mxu0 0.0
        %421 = vmatpush1.msra.mxu0 0.0
        %422 = vmatprep.subr.mxu0 0.0
        %423 = vmatpush1.msra.mxu0 0.0
        %424 = vmatprep.subr.mxu0 0.0
        %425 = vmatpush1.msra.mxu0 0.0
        %426 = vmatprep.subr.mxu0 0.0
        %427 = vmatpush1.msra.mxu0 0.0
        %428 = vmatprep.subr.mxu0 0.0
        %429 = vmatpush1.msra.mxu0 0.0
        %430 = vmatprep.subr.mxu0 0.0
        %431 = vmatpush1.msra.mxu0 0.0
        %432 = vmatprep.subr.mxu0 0.0
        %433 = vmatpush1.msra.mxu0 0.0
        %434 = vmatprep.subr.mxu0 0.0
        %435 = vmatpush1.msra.mxu0 0.0
        %436 = vmatprep.subr.mxu0 0.0
        %437 = vmatpush1.msra.mxu0 0.0
        %438 = vmatprep.subr.mxu0 0.0
        %439 = vmatpush1.msra.mxu0 0.0
        %440 = vmatprep.subr.mxu0 0.0
        %441 = vmatpush1.msra.mxu0 0.0
        %442 = vmatprep.subr.mxu0 0.0
        %443 = vmatpush1.msra.mxu0 0.0
        %444 = vmatprep.subr.mxu0 0.0
        %445 = vmatpush1.msra.mxu0 0.0
        %446 = vmatprep.subr.mxu0 0.0
        %447 = vmatpush1.msra.mxu0 0.0
        %448 = vmatprep.subr.mxu0 0.0
        %449 = vmatpush1.msra.mxu0 0.0
        %450 = vmatprep.subr.mxu0 0.0
        %451 = vmatpush1.msra.mxu0 0.0
        %452 = vmatprep.subr.mxu0 0.0
        %453 = vmatpush1.msra.mxu0 0.0
        %454 = vmatprep.subr.mxu0 0.0
        %455 = vmatpush1.msra.mxu0 0.0
        %456 = vmatprep.subr.mxu0 0.0
        %457 = vmatpush1.msra.mxu0 0.0
        %458 = vmatprep.subr.mxu0 0.0
        %459 = vmatpush1.msra.mxu0 0.0
        %460 = vmatprep.subr.mxu0 0.0
        %461 = vmatpush1.msra.mxu0 0.0
        %462 = vmatprep.subr.mxu0 0.0
        %463 = vmatpush1.msra.mxu0 0.0
        %464 = vmatprep.subr.mxu0 0.0
        %465 = vmatpush1.msra.mxu0 0.0
        %466 = vmatprep.subr.mxu0 0.0
        %467 = vmatpush1.msra.mxu0 0.0
        %468 = vmatprep.subr.mxu0 0.0
        %469 = vmatpush1.msra.mxu0 0.0
        %470 = vmatprep.subr.mxu0 0.0
        %471 = vmatpush1.msra.mxu0 0.0
        %472 = vmatprep.mubr.f32.mxu0 0.0
        %473 = vmatmul.mubr.f32.gmra.mrb[0].mxu0 %v403
        %v474 = vpop.f32.mrb[0].mxu0
        %v475 = vadd.f32 0.0, %v474
        %v476 = vpop.f32.mrb[0].mxu0
        %v477 = vadd.f32 0.0, %v476
        %478 = vmatprep.mubr.f32.mxu0 0.0
        %479 = vmatmul.mubr.f32.gmra.mrb[0].mxu0 %v406
        %v480 = vpop.f32.mrb[0].mxu0
        %v481 = vadd.f32 0.0, %v480
        %v482 = vpop.f32.mrb[0].mxu0
        %v483 = vadd.f32 0.0, %v482
        %484 = vdwg.mxu0
        %v485 = vadd.f32 %v475, %v477
        %486 = vadd.xlane.f32.xlu0 %v485
        %v487 = vpop.xlane.xlu0 %486
        %v488 = vadd.f32 %v481, %v483
        %489 = vadd.xlane.f32.xlu0 %v488
        %v490 = vpop.xlane.xlu0 %489
        %v491 = vmul.f32 %v487, 0.00390625
        %v492 = vmul.f32 %v490, 0.00390625
        %v493 = vsub.f32 %v475, %v491
        %v494 = vsub.f32 %v477, %v491
        %v495 = vsub.f32 %v481, %v492
        %v496 = vsub.f32 %v483, %v492
        %v497 = vmul.f32 %v493, %v493
        %v498 = vmul.f32 %v494, %v494
        %v499 = vmul.f32 %v495, %v495
        %v500 = vmul.f32 %v496, %v496
        %v501 = vadd.f32 %v497, %v498
        %502 = vadd.xlane.f32.xlu0 %v501
        %v503 = vpop.xlane.xlu0 %502
        %v504 = vadd.f32 %v499, %v500
        %505 = vadd.xlane.f32.xlu0 %v504
        %v506 = vpop.xlane.xlu0 %505
        %v507 = vmul.f32 %v503, 0.00390625
        %v508 = vmul.f32 %v506, 0.00390625
        %v509 = vadd.f32 %v507, 1e-05
        %v510 = vadd.f32 %v508, 1e-05
        %v511 = vrsqrt.pop %v509
        %v512 = vrsqrt.pop %v510
        %v513 = vmul.f32 %v493, %v511
        %v514 = vmul.f32 %v494, %v511
        %v515 = vmul.f32 %v495, %v512
        %v516 = vmul.f32 %v496, %v512
        %v517 = vmax.f32 %v513, 0.0
        %v518 = vmax.f32 %v514, 0.0
        %v519 = vmax.f32 %v515, 0.0
        %v520 = vmax.f32 %v516, 0.0
        %vm521 = vcmask 130048
        %v523 = vsel %vm521, %v258, 0
        %525 = vmatprep.subr.mxu0 %v518
        %526 = vmatpush1.msra.mxu0 %v517
        %527 = vmatprep.subr.mxu0 %v520
        %528 = vmatpush1.msra.mxu0 %v519
        %529 = vmatprep.subr.mxu0 0.0
        %530 = vmatpush1.msra.mxu0 0.0
        %531 = vmatprep.subr.mxu0 0.0
        %532 = vmatpush1.msra.mxu0 0.0
        %533 = vmatprep.subr.mxu0 0.0
        %534 = vmatpush1.msra.mxu0 0.0
        %535 = vmatprep.subr.mxu0 0.0
        %536 = vmatpush1.msra.mxu0 0.0
        %537 = vmatprep.subr.mxu0 0.0
        %538 = vmatpush1.msra.mxu0 0.0
        %539 = vmatprep.subr.mxu0 0.0
        %540 = vmatpush1.msra.mxu0 0.0
        %541 = vmatprep.subr.mxu0 0.0
        %542 = vmatpush1.msra.mxu0 0.0
        %543 = vmatprep.subr.mxu0 0.0
        %544 = vmatpush1.msra.mxu0 0.0
        %545 = vmatprep.subr.mxu0 0.0
        %546 = vmatpush1.msra.mxu0 0.0
        %547 = vmatprep.subr.mxu0 0.0
        %548 = vmatpush1.msra.mxu0 0.0
        %549 = vmatprep.subr.mxu0 0.0
        %550 = vmatpush1.msra.mxu0 0.0
        %551 = vmatprep.subr.mxu0 0.0
        %552 = vmatpush1.msra.mxu0 0.0
        %553 = vmatprep.subr.mxu0 0.0
        %554 = vmatpush1.msra.mxu0 0.0
        %555 = vmatprep.subr.mxu0 0.0
        %556 = vmatpush1.msra.mxu0 0.0
        %557 = vmatprep.subr.mxu0 0.0
        %558 = vmatpush1.msra.mxu0 0.0
        %559 = vmatprep.subr.mxu0 0.0
        %560 = vmatpush1.msra.mxu0 0.0
        %561 = vmatprep.subr.mxu0 0.0
        %562 = vmatpush1.msra.mxu0 0.0
        %563 = vmatprep.subr.mxu0 0.0
        %564 = vmatpush1.msra.mxu0 0.0
        %565 = vmatprep.subr.mxu0 0.0
        %566 = vmatpush1.msra.mxu0 0.0
        %567 = vmatprep.subr.mxu0 0.0
        %568 = vmatpush1.msra.mxu0 0.0
        %569 = vmatprep.subr.mxu0 0.0
        %570 = vmatpush1.msra.mxu0 0.0
        %571 = vmatprep.subr.mxu0 0.0
        %572 = vmatpush1.msra.mxu0 0.0
        %573 = vmatprep.subr.mxu0 0.0
        %574 = vmatpush1.msra.mxu0 0.0
        %575 = vmatprep.subr.mxu0 0.0
        %576 = vmatpush1.msra.mxu0 0.0
        %577 = vmatprep.subr.mxu0 0.0
        %578 = vmatpush1.msra.mxu0 0.0
        %579 = vmatprep.subr.mxu0 0.0
        %580 = vmatpush1.msra.mxu0 0.0
        %581 = vmatprep.subr.mxu0 0.0
        %582 = vmatpush1.msra.mxu0 0.0
        %583 = vmatprep.subr.mxu0 0.0
        %584 = vmatpush1.msra.mxu0 0.0
        %585 = vmatprep.subr.mxu0 0.0
        %586 = vmatpush1.msra.mxu0 0.0
        %587 = vmatprep.subr.mxu0 0.0
        %588 = vmatpush1.msra.mxu0 0.0
        %589 = vmatprep.mubr.f32.mxu0 0.0
        %590 = vmatmul.mubr.f32.gmra.mrb[0].mxu0 %v523
        %v591 = vpop.f32.mrb[0].mxu0
        %v592 = vadd.f32 0.0, %v591
        %v593 = vpop.f32.mrb[0].mxu0
        %v594 = vadd.f32 0.0, %v593
        %595 = vdwg.mxu0
        %vm596 = vcmask 1043456
        %v597 = vsel %vm596, %v592, 0.0
        %v598 = vsel %vm596, %v594, 0.0
        %v599 = vadd.f32 %v597, %v598
        %600 = vadd.xlane.f32.xlu0 %v599
        %v601 = vpop.xlane.xlu0 %600
        %v602 = vmul.f32 %v601, 0.00390625
        %v603 = vsub.f32 %v592, %v602
        %v604 = vsub.f32 %v594, %v602
        %v605 = vmul.f32 %v603, %v603
        %v606 = vmul.f32 %v604, %v604
        %v607 = vsel %vm596, %v605, 0.0
        %v608 = vsel %vm596, %v606, 0.0
        %v609 = vadd.f32 %v607, %v608
        %610 = vadd.xlane.f32.xlu0 %v609
        %v611 = vpop.xlane.xlu0 %610
        %v612 = vmul.f32 %v611, 0.00390625
        %v613 = vadd.f32 %v612, 1e-05
        %v614 = vrsqrt.pop %v613
        %v615 = vmul.f32 %v603, %v614
        %v616 = vmul.f32 %v604, %v614
        %v617 = vmax.f32 %v615, 0.0
        %v618 = vmax.f32 %v616, 0.0
        %619 = vrot.lane.b32.xlu0 %v617, 34
        %v620 = vpop.permute.xlu0 %619
        %621 = vrot.lane.b32.xlu0 %v618, 34
        %v622 = vpop.permute.xlu0 %621
        %v623 = vlaneseq
        %v624 = vand.u32 %v623, 127
        %vm625 = vcmp.lt.s32.totalorder %v624, 34
        %v626 = vsel %vm625, %v620, %v622
        %v627 = vsel %vm625, %v622, %v620
        %v628 = vmul.f32 %v627, %v283
        %v629 = vmul.f32 %v626, %v287
        %630 = vrot.lane.b32.xlu0 %v617, 32
        %v631 = vpop.permute.xlu0 %630
        %632 = vrot.lane.b32.xlu0 %v618, 32
        %v633 = vpop.permute.xlu0 %632
        %vm634 = vcmp.lt.s32.totalorder %v624, 32
        %v635 = vsel %vm634, %v631, %v633
        %v636 = vsel %vm634, %v633, %v631
        %v637 = vmul.f32 %v636, %v296
        %v638 = vmul.f32 %v635, %v300
        %vm639 = vcmask 31744
        %v641 = vsel %vm639, %v263, 0
        %v644 = vsel %vm596, %v637, 0
        %v647 = vsel %vm596, %v638, 0
        %649 = vmatprep.subr.mxu0 %v647
        %650 = vmatpush1.msra.mxu0 %v644
        %651 = vmatprep.subr.mxu0 0.0
        %652 = vmatpush1.msra.mxu0 0.0
        %653 = vmatprep.subr.mxu0 0.0
        %654 = vmatpush1.msra.mxu0 0.0
        %655 = vmatprep.subr.mxu0 0.0
        %656 = vmatpush1.msra.mxu0 0.0
        %657 = vmatprep.subr.mxu0 0.0
        %658 = vmatpush1.msra.mxu0 0.0
        %659 = vmatprep.subr.mxu0 0.0
        %660 = vmatpush1.msra.mxu0 0.0
        %661 = vmatprep.subr.mxu0 0.0
        %662 = vmatpush1.msra.mxu0 0.0
        %663 = vmatprep.subr.mxu0 0.0
        %664 = vmatpush1.msra.mxu0 0.0
        %665 = vmatprep.subr.mxu0 0.0
        %666 = vmatpush1.msra.mxu0 0.0
        %667 = vmatprep.subr.mxu0 0.0
        %668 = vmatpush1.msra.mxu0 0.0
        %669 = vmatprep.subr.mxu0 0.0
        %670 = vmatpush1.msra.mxu0 0.0
        %671 = vmatprep.subr.mxu0 0.0
        %672 = vmatpush1.msra.mxu0 0.0
        %673 = vmatprep.subr.mxu0 0.0
        %674 = vmatpush1.msra.mxu0 0.0
        %675 = vmatprep.subr.mxu0 0.0
        %676 = vmatpush1.msra.mxu0 0.0
        %677 = vmatprep.subr.mxu0 0.0
        %678 = vmatpush1.msra.mxu0 0.0
        %679 = vmatprep.subr.mxu0 0.0
        %680 = vmatpush1.msra.mxu0 0.0
        %681 = vmatprep.subr.mxu0 0.0
        %682 = vmatpush1.msra.mxu0 0.0
        %683 = vmatprep.subr.mxu0 0.0
        %684 = vmatpush1.msra.mxu0 0.0
        %685 = vmatprep.subr.mxu0 0.0
        %686 = vmatpush1.msra.mxu0 0.0
        %687 = vmatprep.subr.mxu0 0.0
        %688 = vmatpush1.msra.mxu0 0.0
        %689 = vmatprep.subr.mxu0 0.0
        %690 = vmatpush1.msra.mxu0 0.0
        %691 = vmatprep.subr.mxu0 0.0
        %692 = vmatpush1.msra.mxu0 0.0
        %693 = vmatprep.subr.mxu0 0.0
        %694 = vmatpush1.msra.mxu0 0.0
        %695 = vmatprep.subr.mxu0 0.0
        %696 = vmatpush1.msra.mxu0 0.0
        %697 = vmatprep.subr.mxu0 0.0
        %698 = vmatpush1.msra.mxu0 0.0
        %699 = vmatprep.subr.mxu0 0.0
        %700 = vmatpush1.msra.mxu0 0.0
        %701 = vmatprep.subr.mxu0 0.0
        %702 = vmatpush1.msra.mxu0 0.0
        %703 = vmatprep.subr.mxu0 0.0
        %704 = vmatpush1.msra.mxu0 0.0
        %705 = vmatprep.subr.mxu0 0.0
        %706 = vmatpush1.msra.mxu0 0.0
        %707 = vmatprep.subr.mxu0 0.0
        %708 = vmatpush1.msra.mxu0 0.0
        %709 = vmatprep.subr.mxu0 0.0
        %710 = vmatpush1.msra.mxu0 0.0
        %711 = vmatprep.subr.mxu0 0.0
        %712 = vmatpush1.msra.mxu0 0.0
        %713 = vmatprep.mubr.f32.mxu0 0.0
        %714 = vmatmul.mubr.f32.gmra.mrb[0].mxu0 %v641
        %v715 = vpop.f32.mrb[0].mxu0
        %v716 = vadd.f32 0.0, %v715
        %v717 = vpop.f32.mrb[0].mxu0
        %v718 = vadd.f32 0.0, %v717
        %719 = vdwg.mxu0
        %v721 = vsel %vm639, %v261, 0
        %v724 = vsel %vm596, %v628, 0
        %v727 = vsel %vm596, %v629, 0
        %729 = vmatprep.subr.mxu0 %v727
        %730 = vmatpush1.msra.mxu0 %v724
        %731 = vmatprep.subr.mxu0 0.0
        %732 = vmatpush1.msra.mxu0 0.0
        %733 = vmatprep.subr.mxu0 0.0
        %734 = vmatpush1.msra.mxu0 0.0
        %735 = vmatprep.subr.mxu0 0.0
        %736 = vmatpush1.msra.mxu0 0.0
        %737 = vmatprep.subr.mxu0 0.0
        %738 = vmatpush1.msra.mxu0 0.0
        %739 = vmatprep.subr.mxu0 0.0
        %740 = vmatpush1.msra.mxu0 0.0
        %741 = vmatprep.subr.mxu0 0.0
        %742 = vmatpush1.msra.mxu0 0.0
        %743 = vmatprep.subr.mxu0 0.0
        %744 = vmatpush1.msra.mxu0 0.0
        %745 = vmatprep.subr.mxu0 0.0
        %746 = vmatpush1.msra.mxu0 0.0
        %747 = vmatprep.subr.mxu0 0.0
        %748 = vmatpush1.msra.mxu0 0.0
        %749 = vmatprep.subr.mxu0 0.0
        %750 = vmatpush1.msra.mxu0 0.0
        %751 = vmatprep.subr.mxu0 0.0
        %752 = vmatpush1.msra.mxu0 0.0
        %753 = vmatprep.subr.mxu0 0.0
        %754 = vmatpush1.msra.mxu0 0.0
        %755 = vmatprep.subr.mxu0 0.0
        %756 = vmatpush1.msra.mxu0 0.0
        %757 = vmatprep.subr.mxu0 0.0
        %758 = vmatpush1.msra.mxu0 0.0
        %759 = vmatprep.subr.mxu0 0.0
        %760 = vmatpush1.msra.mxu0 0.0
        %761 = vmatprep.subr.mxu0 0.0
        %762 = vmatpush1.msra.mxu0 0.0
        %763 = vmatprep.subr.mxu0 0.0
        %764 = vmatpush1.msra.mxu0 0.0
        %765 = vmatprep.subr.mxu0 0.0
        %766 = vmatpush1.msra.mxu0 0.0
        %767 = vmatprep.subr.mxu0 0.0
        %768 = vmatpush1.msra.mxu0 0.0
        %769 = vmatprep.subr.mxu0 0.0
        %770 = vmatpush1.msra.mxu0 0.0
        %771 = vmatprep.subr.mxu0 0.0
        %772 = vmatpush1.msra.mxu0 0.0
        %773 = vmatprep.subr.mxu0 0.0
        %774 = vmatpush1.msra.mxu0 0.0
        %775 = vmatprep.subr.mxu0 0.0
        %776 = vmatpush1.msra.mxu0 0.0
        %777 = vmatprep.subr.mxu0 0.0
        %778 = vmatpush1.msra.mxu0 0.0
        %779 = vmatprep.subr.mxu0 0.0
        %780 = vmatpush1.msra.mxu0 0.0
        %781 = vmatprep.subr.mxu0 0.0
        %782 = vmatpush1.msra.mxu0 0.0
        %783 = vmatprep.subr.mxu0 0.0
        %784 = vmatpush1.msra.mxu0 0.0
        %785 = vmatprep.subr.mxu0 0.0
        %786 = vmatpush1.msra.mxu0 0.0
        %787 = vmatprep.subr.mxu0 0.0
        %788 = vmatpush1.msra.mxu0 0.0
        %789 = vmatprep.subr.mxu0 0.0
        %790 = vmatpush1.msra.mxu0 0.0
        %791 = vmatprep.subr.mxu0 0.0
        %792 = vmatpush1.msra.mxu0 0.0
        %793 = vmatprep.mubr.f32.mxu0 0.0
        %794 = vmatmul.mubr.f32.gmra.mrb[0].mxu0 %v721
        %v795 = vpop.f32.mrb[0].mxu0
        %v796 = vadd.f32 %v716, %v795
        %v797 = vpop.f32.mrb[0].mxu0
        %v798 = vadd.f32 %v718, %v797
        %799 = vdwg.mxu0
        %800 = vrot.lane.b32.xlu0 %v617, 30
        %v801 = vpop.permute.xlu0 %800
        %802 = vrot.lane.b32.xlu0 %v618, 30
        %v803 = vpop.permute.xlu0 %802
        %vm804 = vcmp.lt.s32.totalorder %v624, 30
        %v805 = vsel %vm804, %v801, %v803
        %v806 = vsel %vm804, %v803, %v801
        %v807 = vmul.f32 %v806, %v309
        %v808 = vmul.f32 %v805, %v313
        %v810 = vsel %vm639, %v265, 0
        %v813 = vsel %vm596, %v807, 0
        %v816 = vsel %vm596, %v808, 0
        %818 = vmatprep.subr.mxu0 %v816
        %819 = vmatpush1.msra.mxu0 %v813
        %820 = vmatprep.subr.mxu0 0.0
        %821 = vmatpush1.msra.mxu0 0.0
        %822 = vmatprep.subr.mxu0 0.0
        %823 = vmatpush1.msra.mxu0 0.0
        %824 = vmatprep.subr.mxu0 0.0
        %825 = vmatpush1.msra.mxu0 0.0
        %826 = vmatprep.subr.mxu0 0.0
        %827 = vmatpush1.msra.mxu0 0.0
        %828 = vmatprep.subr.mxu0 0.0
        %829 = vmatpush1.msra.mxu0 0.0
        %830 = vmatprep.subr.mxu0 0.0
        %831 = vmatpush1.msra.mxu0 0.0
        %832 = vmatprep.subr.mxu0 0.0
        %833 = vmatpush1.msra.mxu0 0.0
        %834 = vmatprep.subr.mxu0 0.0
        %835 = vmatpush1.msra.mxu0 0.0
        %836 = vmatprep.subr.mxu0 0.0
        %837 = vmatpush1.msra.mxu0 0.0
        %838 = vmatprep.subr.mxu0 0.0
        %839 = vmatpush1.msra.mxu0 0.0
        %840 = vmatprep.subr.mxu0 0.0
        %841 = vmatpush1.msra.mxu0 0.0
        %842 = vmatprep.subr.mxu0 0.0
        %843 = vmatpush1.msra.mxu0 0.0
        %844 = vmatprep.subr.mxu0 0.0
        %845 = vmatpush1.msra.mxu0 0.0
        %846 = vmatprep.subr.mxu0 0.0
        %847 = vmatpush1.msra.mxu0 0.0
        %848 = vmatprep.subr.mxu0 0.0
        %849 = vmatpush1.msra.mxu0 0.0
        %850 = vmatprep.subr.mxu0 0.0
        %851 = vmatpush1.msra.mxu0 0.0
        %852 = vmatprep.subr.mxu0 0.0
        %853 = vmatpush1.msra.mxu0 0.0
        %854 = vmatprep.subr.mxu0 0.0
        %855 = vmatpush1.msra.mxu0 0.0
        %856 = vmatprep.subr.mxu0 0.0
        %857 = vmatpush1.msra.mxu0 0.0
        %858 = vmatprep.subr.mxu0 0.0
        %859 = vmatpush1.msra.mxu0 0.0
        %860 = vmatprep.subr.mxu0 0.0
        %861 = vmatpush1.msra.mxu0 0.0
        %862 = vmatprep.subr.mxu0 0.0
        %863 = vmatpush1.msra.mxu0 0.0
        %864 = vmatprep.subr.mxu0 0.0
        %865 = vmatpush1.msra.mxu0 0.0
        %866 = vmatprep.subr.mxu0 0.0
        %867 = vmatpush1.msra.mxu0 0.0
        %868 = vmatprep.subr.mxu0 0.0
        %869 = vmatpush1.msra.mxu0 0.0
        %870 = vmatprep.subr.mxu0 0.0
        %871 = vmatpush1.msra.mxu0 0.0
        %872 = vmatprep.subr.mxu0 0.0
        %873 = vmatpush1.msra.mxu0 0.0
        %874 = vmatprep.subr.mxu0 0.0
        %875 = vmatpush1.msra.mxu0 0.0
        %876 = vmatprep.subr.mxu0 0.0
        %877 = vmatpush1.msra.mxu0 0.0
        %878 = vmatprep.subr.mxu0 0.0
        %879 = vmatpush1.msra.mxu0 0.0
        %880 = vmatprep.subr.mxu0 0.0
        %881 = vmatpush1.msra.mxu0 0.0
        %882 = vmatprep.mubr.f32.mxu0 0.0
        %883 = vmatmul.mubr.f32.gmra.mrb[0].mxu0 %v810
        %v884 = vpop.f32.mrb[0].mxu0
        %v885 = vadd.f32 0.0, %v884
        %v886 = vpop.f32.mrb[0].mxu0
        %v887 = vadd.f32 0.0, %v886
        %888 = vdwg.mxu0
        %v889 = vadd.f32 %v796, %v885
        %v890 = vadd.f32 %v798, %v887
        %891 = vrot.lane.b32.xlu0 %v617, 2
        %v892 = vpop.permute.xlu0 %891
        %893 = vrot.lane.b32.xlu0 %v618, 2
        %v894 = vpop.permute.xlu0 %893
        %vm895 = vcmp.lt.s32.totalorder %v624, 2
        %v896 = vsel %vm895, %v892, %v894
        %v897 = vsel %vm895, %v894, %v892
        %v898 = vmul.f32 %v897, %v322
        %v899 = vmul.f32 %v896, %v326
        %v901 = vsel %vm639, %v267, 0
        %v904 = vsel %vm596, %v898, 0
        %v907 = vsel %vm596, %v899, 0
        %909 = vmatprep.subr.mxu0 %v907
        %910 = vmatpush1.msra.mxu0 %v904
        %911 = vmatprep.subr.mxu0 0.0
        %912 = vmatpush1.msra.mxu0 0.0
        %913 = vmatprep.subr.mxu0 0.0
        %914 = vmatpush1.msra.mxu0 0.0
        %915 = vmatprep.subr.mxu0 0.0
        %916 = vmatpush1.msra.mxu0 0.0
        %917 = vmatprep.subr.mxu0 0.0
        %918 = vmatpush1.msra.mxu0 0.0
        %919 = vmatprep.subr.mxu0 0.0
        %920 = vmatpush1.msra.mxu0 0.0
        %921 = vmatprep.subr.mxu0 0.0
        %922 = vmatpush1.msra.mxu0 0.0
        %923 = vmatprep.subr.mxu0 0.0
        %924 = vmatpush1.msra.mxu0 0.0
        %925 = vmatprep.subr.mxu0 0.0
        %926 = vmatpush1.msra.mxu0 0.0
        %927 = vmatprep.subr.mxu0 0.0
        %928 = vmatpush1.msra.mxu0 0.0
        %929 = vmatprep.subr.mxu0 0.0
        %930 = vmatpush1.msra.mxu0 0.0
        %931 = vmatprep.subr.mxu0 0.0
        %932 = vmatpush1.msra.mxu0 0.0
        %933 = vmatprep.subr.mxu0 0.0
        %934 = vmatpush1.msra.mxu0 0.0
        %935 = vmatprep.subr.mxu0 0.0
        %936 = vmatpush1.msra.mxu0 0.0
        %937 = vmatprep.subr.mxu0 0.0
        %938 = vmatpush1.msra.mxu0 0.0
        %939 = vmatprep.subr.mxu0 0.0
        %940 = vmatpush1.msra.mxu0 0.0
        %941 = vmatprep.subr.mxu0 0.0
        %942 = vmatpush1.msra.mxu0 0.0
        %943 = vmatprep.subr.mxu0 0.0
        %944 = vmatpush1.msra.mxu0 0.0
        %945 = vmatprep.subr.mxu0 0.0
        %946 = vmatpush1.msra.mxu0 0.0
        %947 = vmatprep.subr.mxu0 0.0
        %948 = vmatpush1.msra.mxu0 0.0
        %949 = vmatprep.subr.mxu0 0.0
        %950 = vmatpush1.msra.mxu0 0.0
        %951 = vmatprep.subr.mxu0 0.0
        %952 = vmatpush1.msra.mxu0 0.0
        %953 = vmatprep.subr.mxu0 0.0
        %954 = vmatpush1.msra.mxu0 0.0
        %955 = vmatprep.subr.mxu0 0.0
        %956 = vmatpush1.msra.mxu0 0.0
        %957 = vmatprep.subr.mxu0 0.0
        %958 = vmatpush1.msra.mxu0 0.0
        %959 = vmatprep.subr.mxu0 0.0
        %960 = vmatpush1.msra.mxu0 0.0
        %961 = vmatprep.subr.mxu0 0.0
        %962 = vmatpush1.msra.mxu0 0.0
        %963 = vmatprep.subr.mxu0 0.0
        %964 = vmatpush1.msra.mxu0 0.0
        %965 = vmatprep.subr.mxu0 0.0
        %966 = vmatpush1.msra.mxu0 0.0
        %967 = vmatprep.subr.mxu0 0.0
        %968 = vmatpush1.msra.mxu0 0.0
        %969 = vmatprep.subr.mxu0 0.0
        %970 = vmatpush1.msra.mxu0 0.0
        %971 = vmatprep.subr.mxu0 0.0
        %972 = vmatpush1.msra.mxu0 0.0
        %973 = vmatprep.mubr.f32.mxu0 0.0
        %974 = vmatmul.mubr.f32.gmra.mrb[0].mxu0 %v901
        %v975 = vpop.f32.mrb[0].mxu0
        %v976 = vadd.f32 0.0, %v975
        %v977 = vpop.f32.mrb[0].mxu0
        %v978 = vadd.f32 0.0, %v977
        %979 = vdwg.mxu0
        %v980 = vadd.f32 %v889, %v976
        %v981 = vadd.f32 %v890, %v978
        %v983 = vsel %vm639, %v269, 0
        %v986 = vsel %vm596, %v617, 0
        %v989 = vsel %vm596, %v618, 0
        %991 = vmatprep.subr.mxu0 %v989
        %992 = vmatpush1.msra.mxu0 %v986
        %993 = vmatprep.subr.mxu0 0.0
        %994 = vmatpush1.msra.mxu0 0.0
        %995 = vmatprep.subr.mxu0 0.0
        %996 = vmatpush1.msra.mxu0 0.0
        %997 = vmatprep.subr.mxu0 0.0
        %998 = vmatpush1.msra.mxu0 0.0
        %999 = vmatprep.subr.mxu0 0.0
        %1000 = vmatpush1.msra.mxu0 0.0
        %1001 = vmatprep.subr.mxu0 0.0
        %1002 = vmatpush1.msra.mxu0 0.0
        %1003 = vmatprep.subr.mxu0 0.0
        %1004 = vmatpush1.msra.mxu0 0.0
        %1005 = vmatprep.subr.mxu0 0.0
        %1006 = vmatpush1.msra.mxu0 0.0
        %1007 = vmatprep.subr.mxu0 0.0
        %1008 = vmatpush1.msra.mxu0 0.0
        %1009 = vmatprep.subr.mxu0 0.0
        %1010 = vmatpush1.msra.mxu0 0.0
        %1011 = vmatprep.subr.mxu0 0.0
        %1012 = vmatpush1.msra.mxu0 0.0
        %1013 = vmatprep.subr.mxu0 0.0
        %1014 = vmatpush1.msra.mxu0 0.0
        %1015 = vmatprep.subr.mxu0 0.0
        %1016 = vmatpush1.msra.mxu0 0.0
        %1017 = vmatprep.subr.mxu0 0.0
        %1018 = vmatpush1.msra.mxu0 0.0
        %1019 = vmatprep.subr.mxu0 0.0
        %1020 = vmatpush1.msra.mxu0 0.0
        %1021 = vmatprep.subr.mxu0 0.0
        %1022 = vmatpush1.msra.mxu0 0.0
        %1023 = vmatprep.subr.mxu0 0.0
        %1024 = vmatpush1.msra.mxu0 0.0
        %1025 = vmatprep.subr.mxu0 0.0
        %1026 = vmatpush1.msra.mxu0 0.0
        %1027 = vmatprep.subr.mxu0 0.0
        %1028 = vmatpush1.msra.mxu0 0.0
        %1029 = vmatprep.subr.mxu0 0.0
        %1030 = vmatpush1.msra.mxu0 0.0
        %1031 = vmatprep.subr.mxu0 0.0
        %1032 = vmatpush1.msra.mxu0 0.0
        %1033 = vmatprep.subr.mxu0 0.0
        %1034 = vmatpush1.msra.mxu0 0.0
        %1035 = vmatprep.subr.mxu0 0.0
        %1036 = vmatpush1.msra.mxu0 0.0
        %1037 = vmatprep.subr.mxu0 0.0
        %1038 = vmatpush1.msra.mxu0 0.0
        %1039 = vmatprep.subr.mxu0 0.0
        %1040 = vmatpush1.msra.mxu0 0.0
        %1041 = vmatprep.subr.mxu0 0.0
        %1042 = vmatpush1.msra.mxu0 0.0
        %1043 = vmatprep.subr.mxu0 0.0
        %1044 = vmatpush1.msra.mxu0 0.0
        %1045 = vmatprep.subr.mxu0 0.0
        %1046 = vmatpush1.msra.mxu0 0.0
        %1047 = vmatprep.subr.mxu0 0.0
        %1048 = vmatpush1.msra.mxu0 0.0
        %1049 = vmatprep.subr.mxu0 0.0
        %1050 = vmatpush1.msra.mxu0 0.0
        %1051 = vmatprep.subr.mxu0 0.0
        %1052 = vmatpush1.msra.mxu0 0.0
        %1053 = vmatprep.subr.mxu0 0.0
        %1054 = vmatpush1.msra.mxu0 0.0
        %1055 = vmatprep.mubr.f32.mxu0 0.0
        %1056 = vmatmul.mubr.f32.gmra.mrb[0].mxu0 %v983
        %v1057 = vpop.f32.mrb[0].mxu0
        %v1058 = vadd.f32 0.0, %v1057
        %v1059 = vpop.f32.mrb[0].mxu0
        %v1060 = vadd.f32 0.0, %v1059
        %1061 = vdwg.mxu0
        %v1062 = vadd.f32 %v980, %v1058
        %v1063 = vadd.f32 %v981, %v1060
        %1064 = vrot.lane.b32.xlu0 %v617, 126
        %v1065 = vpop.permute.xlu0 %1064
        %1066 = vrot.lane.b32.xlu0 %v618, 126
        %v1067 = vpop.permute.xlu0 %1066
        %vm1068 = vcmp.lt.s32.totalorder %v624, 126
        %v1069 = vsel %vm1068, %v1065, %v1067
        %v1070 = vsel %vm1068, %v1067, %v1065
        %v1071 = vmul.f32 %v1069, %v335
        %v1072 = vmul.f32 %v1070, %v339
        %v1074 = vsel %vm639, %v271, 0
        %v1077 = vsel %vm596, %v1071, 0
        %v1080 = vsel %vm596, %v1072, 0
        %1082 = vmatprep.subr.mxu0 %v1080
        %1083 = vmatpush1.msra.mxu0 %v1077
        %1084 = vmatprep.subr.mxu0 0.0
        %1085 = vmatpush1.msra.mxu0 0.0
        %1086 = vmatprep.subr.mxu0 0.0
        %1087 = vmatpush1.msra.mxu0 0.0
        %1088 = vmatprep.subr.mxu0 0.0
        %1089 = vmatpush1.msra.mxu0 0.0
        %1090 = vmatprep.subr.mxu0 0.0
        %1091 = vmatpush1.msra.mxu0 0.0
        %1092 = vmatprep.subr.mxu0 0.0
        %1093 = vmatpush1.msra.mxu0 0.0
        %1094 = vmatprep.subr.mxu0 0.0
        %1095 = vmatpush1.msra.mxu0 0.0
        %1096 = vmatprep.subr.mxu0 0.0
        %1097 = vmatpush1.msra.mxu0 0.0
        %1098 = vmatprep.subr.mxu0 0.0
        %1099 = vmatpush1.msra.mxu0 0.0
        %1100 = vmatprep.subr.mxu0 0.0
        %1101 = vmatpush1.msra.mxu0 0.0
        %1102 = vmatprep.subr.mxu0 0.0
        %1103 = vmatpush1.msra.mxu0 0.0
        %1104 = vmatprep.subr.mxu0 0.0
        %1105 = vmatpush1.msra.mxu0 0.0
        %1106 = vmatprep.subr.mxu0 0.0
        %1107 = vmatpush1.msra.mxu0 0.0
        %1108 = vmatprep.subr.mxu0 0.0
        %1109 = vmatpush1.msra.mxu0 0.0
        %1110 = vmatprep.subr.mxu0 0.0
        %1111 = vmatpush1.msra.mxu0 0.0
        %1112 = vmatprep.subr.mxu0 0.0
        %1113 = vmatpush1.msra.mxu0 0.0
        %1114 = vmatprep.subr.mxu0 0.0
        %1115 = vmatpush1.msra.mxu0 0.0
        %1116 = vmatprep.subr.mxu0 0.0
        %1117 = vmatpush1.msra.mxu0 0.0
        %1118 = vmatprep.subr.mxu0 0.0
        %1119 = vmatpush1.msra.mxu0 0.0
        %1120 = vmatprep.subr.mxu0 0.0
        %1121 = vmatpush1.msra.mxu0 0.0
        %1122 = vmatprep.subr.mxu0 0.0
        %1123 = vmatpush1.msra.mxu0 0.0
        %1124 = vmatprep.subr.mxu0 0.0
        %1125 = vmatpush1.msra.mxu0 0.0
        %1126 = vmatprep.subr.mxu0 0.0
        %1127 = vmatpush1.msra.mxu0 0.0
        %1128 = vmatprep.subr.mxu0 0.0
        %1129 = vmatpush1.msra.mxu0 0.0
        %1130 = vmatprep.subr.mxu0 0.0
        %1131 = vmatpush1.msra.mxu0 0.0
        %1132 = vmatprep.subr.mxu0 0.0
        %1133 = vmatpush1.msra.mxu0 0.0
        %1134 = vmatprep.subr.mxu0 0.0
        %1135 = vmatpush1.msra.mxu0 0.0
        %1136 = vmatprep.subr.mxu0 0.0
        %1137 = vmatpush1.msra.mxu0 0.0
        %1138 = vmatprep.subr.mxu0 0.0
        %1139 = vmatpush1.msra.mxu0 0.0
        %1140 = vmatprep.subr.mxu0 0.0
        %1141 = vmatpush1.msra.mxu0 0.0
        %1142 = vmatprep.subr.mxu0 0.0
        %1143 = vmatpush1.msra.mxu0 0.0
        %1144 = vmatprep.subr.mxu0 0.0
        %1145 = vmatpush1.msra.mxu0 0.0
        %1146 = vmatprep.mubr.f32.mxu0 0.0
        %1147 = vmatmul.mubr.f32.gmra.mrb[0].mxu0 %v1074
        %v1148 = vpop.f32.mrb[0].mxu0
        %v1149 = vadd.f32 0.0, %v1148
        %v1150 = vpop.f32.mrb[0].mxu0
        %v1151 = vadd.f32 0.0, %v1150
        %1152 = vdwg.mxu0
        %v1153 = vadd.f32 %v1062, %v1149
        %v1154 = vadd.f32 %v1063, %v1151
        %1155 = vrot.lane.b32.xlu0 %v617, 98
        %v1156 = vpop.permute.xlu0 %1155
        %1157 = vrot.lane.b32.xlu0 %v618, 98
        %v1158 = vpop.permute.xlu0 %1157
        %vm1159 = vcmp.lt.s32.totalorder %v624, 98
        %v1160 = vsel %vm1159, %v1156, %v1158
        %v1161 = vsel %vm1159, %v1158, %v1156
        %v1162 = vmul.f32 %v1160, %v348
        %v1163 = vmul.f32 %v1161, %v352
        %v1165 = vsel %vm639, %v273, 0
        %v1168 = vsel %vm596, %v1162, 0
        %v1171 = vsel %vm596, %v1163, 0
        %1173 = vmatprep.subr.mxu0 %v1171
        %1174 = vmatpush1.msra.mxu0 %v1168
        %1175 = vmatprep.subr.mxu0 0.0
        %1176 = vmatpush1.msra.mxu0 0.0
        %1177 = vmatprep.subr.mxu0 0.0
        %1178 = vmatpush1.msra.mxu0 0.0
        %1179 = vmatprep.subr.mxu0 0.0
        %1180 = vmatpush1.msra.mxu0 0.0
        %1181 = vmatprep.subr.mxu0 0.0
        %1182 = vmatpush1.msra.mxu0 0.0
        %1183 = vmatprep.subr.mxu0 0.0
        %1184 = vmatpush1.msra.mxu0 0.0
        %1185 = vmatprep.subr.mxu0 0.0
        %1186 = vmatpush1.msra.mxu0 0.0
        %1187 = vmatprep.subr.mxu0 0.0
        %1188 = vmatpush1.msra.mxu0 0.0
        %1189 = vmatprep.subr.mxu0 0.0
        %1190 = vmatpush1.msra.mxu0 0.0
        %1191 = vmatprep.subr.mxu0 0.0
        %1192 = vmatpush1.msra.mxu0 0.0
        %1193 = vmatprep.subr.mxu0 0.0
        %1194 = vmatpush1.msra.mxu0 0.0
        %1195 = vmatprep.subr.mxu0 0.0
        %1196 = vmatpush1.msra.mxu0 0.0
        %1197 = vmatprep.subr.mxu0 0.0
        %1198 = vmatpush1.msra.mxu0 0.0
        %1199 = vmatprep.subr.mxu0 0.0
        %1200 = vmatpush1.msra.mxu0 0.0
        %1201 = vmatprep.subr.mxu0 0.0
        %1202 = vmatpush1.msra.mxu0 0.0
        %1203 = vmatprep.subr.mxu0 0.0
        %1204 = vmatpush1.msra.mxu0 0.0
        %1205 = vmatprep.subr.mxu0 0.0
        %1206 = vmatpush1.msra.mxu0 0.0
        %1207 = vmatprep.subr.mxu0 0.0
        %1208 = vmatpush1.msra.mxu0 0.0
        %1209 = vmatprep.subr.mxu0 0.0
        %1210 = vmatpush1.msra.mxu0 0.0
        %1211 = vmatprep.subr.mxu0 0.0
        %1212 = vmatpush1.msra.mxu0 0.0
        %1213 = vmatprep.subr.mxu0 0.0
        %1214 = vmatpush1.msra.mxu0 0.0
        %1215 = vmatprep.subr.mxu0 0.0
        %1216 = vmatpush1.msra.mxu0 0.0
        %1217 = vmatprep.subr.mxu0 0.0
        %1218 = vmatpush1.msra.mxu0 0.0
        %1219 = vmatprep.subr.mxu0 0.0
        %1220 = vmatpush1.msra.mxu0 0.0
        %1221 = vmatprep.subr.mxu0 0.0
        %1222 = vmatpush1.msra.mxu0 0.0
        %1223 = vmatprep.subr.mxu0 0.0
        %1224 = vmatpush1.msra.mxu0 0.0
        %1225 = vmatprep.subr.mxu0 0.0
        %1226 = vmatpush1.msra.mxu0 0.0
        %1227 = vmatprep.subr.mxu0 0.0
        %1228 = vmatpush1.msra.mxu0 0.0
        %1229 = vmatprep.subr.mxu0 0.0
        %1230 = vmatpush1.msra.mxu0 0.0
        %1231 = vmatprep.subr.mxu0 0.0
        %1232 = vmatpush1.msra.mxu0 0.0
        %1233 = vmatprep.subr.mxu0 0.0
        %1234 = vmatpush1.msra.mxu0 0.0
        %1235 = vmatprep.subr.mxu0 0.0
        %1236 = vmatpush1.msra.mxu0 0.0
        %1237 = vmatprep.mubr.f32.mxu0 0.0
        %1238 = vmatmul.mubr.f32.gmra.mrb[0].mxu0 %v1165
        %v1239 = vpop.f32.mrb[0].mxu0
        %v1240 = vadd.f32 0.0, %v1239
        %v1241 = vpop.f32.mrb[0].mxu0
        %v1242 = vadd.f32 0.0, %v1241
        %1243 = vdwg.mxu0
        %v1244 = vadd.f32 %v1153, %v1240
        %v1245 = vadd.f32 %v1154, %v1242
        %1246 = vrot.lane.b32.xlu0 %v617, 96
        %v1247 = vpop.permute.xlu0 %1246
        %1248 = vrot.lane.b32.xlu0 %v618, 96
        %v1249 = vpop.permute.xlu0 %1248
        %vm1250 = vcmp.lt.s32.totalorder %v624, 96
        %v1251 = vsel %vm1250, %v1247, %v1249
        %v1252 = vsel %vm1250, %v1249, %v1247
        %v1253 = vmul.f32 %v1251, %v361
        %v1254 = vmul.f32 %v1252, %v365
        %v1256 = vsel %vm639, %v275, 0
        %v1259 = vsel %vm596, %v1253, 0
        %v1262 = vsel %vm596, %v1254, 0
        %1264 = vmatprep.subr.mxu0 %v1262
        %1265 = vmatpush1.msra.mxu0 %v1259
        %1266 = vmatprep.subr.mxu0 0.0
        %1267 = vmatpush1.msra.mxu0 0.0
        %1268 = vmatprep.subr.mxu0 0.0
        %1269 = vmatpush1.msra.mxu0 0.0
        %1270 = vmatprep.subr.mxu0 0.0
        %1271 = vmatpush1.msra.mxu0 0.0
        %1272 = vmatprep.subr.mxu0 0.0
        %1273 = vmatpush1.msra.mxu0 0.0
        %1274 = vmatprep.subr.mxu0 0.0
        %1275 = vmatpush1.msra.mxu0 0.0
        %1276 = vmatprep.subr.mxu0 0.0
        %1277 = vmatpush1.msra.mxu0 0.0
        %1278 = vmatprep.subr.mxu0 0.0
        %1279 = vmatpush1.msra.mxu0 0.0
        %1280 = vmatprep.subr.mxu0 0.0
        %1281 = vmatpush1.msra.mxu0 0.0
        %1282 = vmatprep.subr.mxu0 0.0
        %1283 = vmatpush1.msra.mxu0 0.0
        %1284 = vmatprep.subr.mxu0 0.0
        %1285 = vmatpush1.msra.mxu0 0.0
        %1286 = vmatprep.subr.mxu0 0.0
        %1287 = vmatpush1.msra.mxu0 0.0
        %1288 = vmatprep.subr.mxu0 0.0
        %1289 = vmatpush1.msra.mxu0 0.0
        %1290 = vmatprep.subr.mxu0 0.0
        %1291 = vmatpush1.msra.mxu0 0.0
        %1292 = vmatprep.subr.mxu0 0.0
        %1293 = vmatpush1.msra.mxu0 0.0
        %1294 = vmatprep.subr.mxu0 0.0
        %1295 = vmatpush1.msra.mxu0 0.0
        %1296 = vmatprep.subr.mxu0 0.0
        %1297 = vmatpush1.msra.mxu0 0.0
        %1298 = vmatprep.subr.mxu0 0.0
        %1299 = vmatpush1.msra.mxu0 0.0
        %1300 = vmatprep.subr.mxu0 0.0
        %1301 = vmatpush1.msra.mxu0 0.0
        %1302 = vmatprep.subr.mxu0 0.0
        %1303 = vmatpush1.msra.mxu0 0.0
        %1304 = vmatprep.subr.mxu0 0.0
        %1305 = vmatpush1.msra.mxu0 0.0
        %1306 = vmatprep.subr.mxu0 0.0
        %1307 = vmatpush1.msra.mxu0 0.0
        %1308 = vmatprep.subr.mxu0 0.0
        %1309 = vmatpush1.msra.mxu0 0.0
        %1310 = vmatprep.subr.mxu0 0.0
        %1311 = vmatpush1.msra.mxu0 0.0
        %1312 = vmatprep.subr.mxu0 0.0
        %1313 = vmatpush1.msra.mxu0 0.0
        %1314 = vmatprep.subr.mxu0 0.0
        %1315 = vmatpush1.msra.mxu0 0.0
        %1316 = vmatprep.subr.mxu0 0.0
        %1317 = vmatpush1.msra.mxu0 0.0
        %1318 = vmatprep.subr.mxu0 0.0
        %1319 = vmatpush1.msra.mxu0 0.0
        %1320 = vmatprep.subr.mxu0 0.0
        %1321 = vmatpush1.msra.mxu0 0.0
        %1322 = vmatprep.subr.mxu0 0.0
        %1323 = vmatpush1.msra.mxu0 0.0
        %1324 = vmatprep.subr.mxu0 0.0
        %1325 = vmatpush1.msra.mxu0 0.0
        %1326 = vmatprep.subr.mxu0 0.0
        %1327 = vmatpush1.msra.mxu0 0.0
        %1328 = vmatprep.mubr.f32.mxu0 0.0
        %1329 = vmatmul.mubr.f32.gmra.mrb[0].mxu0 %v1256
        %v1330 = vpop.f32.mrb[0].mxu0
        %v1331 = vadd.f32 0.0, %v1330
        %v1332 = vpop.f32.mrb[0].mxu0
        %v1333 = vadd.f32 0.0, %v1332
        %1334 = vdwg.mxu0
        %v1335 = vadd.f32 %v1244, %v1331
        %v1336 = vadd.f32 %v1245, %v1333
        %1337 = vrot.lane.b32.xlu0 %v617, 94
        %v1338 = vpop.permute.xlu0 %1337
        %1339 = vrot.lane.b32.xlu0 %v618, 94
        %v1340 = vpop.permute.xlu0 %1339
        %vm1341 = vcmp.lt.s32.totalorder %v624, 94
        %v1342 = vsel %vm1341, %v1338, %v1340
        %v1343 = vsel %vm1341, %v1340, %v1338
        %v1344 = vmul.f32 %v1342, %v374
        %v1345 = vmul.f32 %v1343, %v378
        %v1347 = vsel %vm639, %v277, 0
        %v1350 = vsel %vm596, %v1344, 0
        %v1353 = vsel %vm596, %v1345, 0
        %1355 = vmatprep.subr.mxu0 %v1353
        %1356 = vmatpush1.msra.mxu0 %v1350
        %1357 = vmatprep.subr.mxu0 0.0
        %1358 = vmatpush1.msra.mxu0 0.0
        %1359 = vmatprep.subr.mxu0 0.0
        %1360 = vmatpush1.msra.mxu0 0.0
        %1361 = vmatprep.subr.mxu0 0.0
        %1362 = vmatpush1.msra.mxu0 0.0
        %1363 = vmatprep.subr.mxu0 0.0
        %1364 = vmatpush1.msra.mxu0 0.0
        %1365 = vmatprep.subr.mxu0 0.0
        %1366 = vmatpush1.msra.mxu0 0.0
        %1367 = vmatprep.subr.mxu0 0.0
        %1368 = vmatpush1.msra.mxu0 0.0
        %1369 = vmatprep.subr.mxu0 0.0
        %1370 = vmatpush1.msra.mxu0 0.0
        %1371 = vmatprep.subr.mxu0 0.0
        %1372 = vmatpush1.msra.mxu0 0.0
        %1373 = vmatprep.subr.mxu0 0.0
        %1374 = vmatpush1.msra.mxu0 0.0
        %1375 = vmatprep.subr.mxu0 0.0
        %1376 = vmatpush1.msra.mxu0 0.0
        %1377 = vmatprep.subr.mxu0 0.0
        %1378 = vmatpush1.msra.mxu0 0.0
        %1379 = vmatprep.subr.mxu0 0.0
        %1380 = vmatpush1.msra.mxu0 0.0
        %1381 = vmatprep.subr.mxu0 0.0
        %1382 = vmatpush1.msra.mxu0 0.0
        %1383 = vmatprep.subr.mxu0 0.0
        %1384 = vmatpush1.msra.mxu0 0.0
        %1385 = vmatprep.subr.mxu0 0.0
        %1386 = vmatpush1.msra.mxu0 0.0
        %1387 = vmatprep.subr.mxu0 0.0
        %1388 = vmatpush1.msra.mxu0 0.0
        %1389 = vmatprep.subr.mxu0 0.0
        %1390 = vmatpush1.msra.mxu0 0.0
        %1391 = vmatprep.subr.mxu0 0.0
        %1392 = vmatpush1.msra.mxu0 0.0
        %1393 = vmatprep.subr.mxu0 0.0
        %1394 = vmatpush1.msra.mxu0 0.0
        %1395 = vmatprep.subr.mxu0 0.0
        %1396 = vmatpush1.msra.mxu0 0.0
        %1397 = vmatprep.subr.mxu0 0.0
        %1398 = vmatpush1.msra.mxu0 0.0
        %1399 = vmatprep.subr.mxu0 0.0
        %1400 = vmatpush1.msra.mxu0 0.0
        %1401 = vmatprep.subr.mxu0 0.0
        %1402 = vmatpush1.msra.mxu0 0.0
        %1403 = vmatprep.subr.mxu0 0.0
        %1404 = vmatpush1.msra.mxu0 0.0
        %1405 = vmatprep.subr.mxu0 0.0
        %1406 = vmatpush1.msra.mxu0 0.0
        %1407 = vmatprep.subr.mxu0 0.0
        %1408 = vmatpush1.msra.mxu0 0.0
        %1409 = vmatprep.subr.mxu0 0.0
        %1410 = vmatpush1.msra.mxu0 0.0
        %1411 = vmatprep.subr.mxu0 0.0
        %1412 = vmatpush1.msra.mxu0 0.0
        %1413 = vmatprep.subr.mxu0 0.0
        %1414 = vmatpush1.msra.mxu0 0.0
        %1415 = vmatprep.subr.mxu0 0.0
        %1416 = vmatpush1.msra.mxu0 0.0
        %1417 = vmatprep.subr.mxu0 0.0
        %1418 = vmatpush1.msra.mxu0 0.0
        %1419 = vmatprep.mubr.f32.mxu0 0.0
        %1420 = vmatmul.mubr.f32.gmra.mrb[0].mxu0 %v1347
        %v1421 = vpop.f32.mrb[0].mxu0
        %v1422 = vadd.f32 0.0, %v1421
        %v1423 = vpop.f32.mrb[0].mxu0
        %v1424 = vadd.f32 0.0, %v1423
        %1425 = vdwg.mxu0
        %v1426 = vadd.f32 %v1335, %v1422
        %v1427 = vadd.f32 %v1336, %v1424
        %v1428 = vsel %vm596, %v1426, 0.0
        %v1429 = vsel %vm596, %v1427, 0.0
        %v1430 = vadd.f32 %v1428, %v1429
        %1431 = vadd.xlane.f32.xlu0 %v1430
        %v1432 = vpop.xlane.xlu0 %1431
        %v1433 = vmul.f32 %v1432, 0.00390625
        %v1434 = vsub.f32 %v1426, %v1433
        %v1435 = vsub.f32 %v1427, %v1433
        %v1436 = vmul.f32 %v1434, %v1434
        %v1437 = vmul.f32 %v1435, %v1435
        %v1438 = vsel %vm596, %v1436, 0.0
        %v1439 = vsel %vm596, %v1437, 0.0
        %v1440 = vadd.f32 %v1438, %v1439
        %1441 = vadd.xlane.f32.xlu0 %v1440
        %v1442 = vpop.xlane.xlu0 %1441
        %v1443 = vmul.f32 %v1442, 0.00390625
        %v1444 = vadd.f32 %v1443, 1e-05
        %v1445 = vrsqrt.pop %v1444
        %v1446 = vmul.f32 %v1434, %v1445
        %v1447 = vmul.f32 %v1435, %v1445
        %v1448 = vmax.f32 %v1446, 0.0
        %v1449 = vmax.f32 %v1447, 0.0
        %v1451 = vsel %vm639, %v259, 0
        %v1454 = vsel %vm639, %v260, 0
        %v1457 = vsel %vm596, %v1448, 0
        %v1460 = vsel %vm596, %v1449, 0
        %1462 = vmatprep.subr.mxu0 %v1460
        %1463 = vmatpush1.msra.mxu0 %v1457
        %1464 = vmatprep.subr.mxu0 0.0
        %1465 = vmatpush1.msra.mxu0 0.0
        %1466 = vmatprep.subr.mxu0 0.0
        %1467 = vmatpush1.msra.mxu0 0.0
        %1468 = vmatprep.subr.mxu0 0.0
        %1469 = vmatpush1.msra.mxu0 0.0
        %1470 = vmatprep.subr.mxu0 0.0
        %1471 = vmatpush1.msra.mxu0 0.0
        %1472 = vmatprep.subr.mxu0 0.0
        %1473 = vmatpush1.msra.mxu0 0.0
        %1474 = vmatprep.subr.mxu0 0.0
        %1475 = vmatpush1.msra.mxu0 0.0
        %1476 = vmatprep.subr.mxu0 0.0
        %1477 = vmatpush1.msra.mxu0 0.0
        %1478 = vmatprep.subr.mxu0 0.0
        %1479 = vmatpush1.msra.mxu0 0.0
        %1480 = vmatprep.subr.mxu0 0.0
        %1481 = vmatpush1.msra.mxu0 0.0
        %1482 = vmatprep.subr.mxu0 0.0
        %1483 = vmatpush1.msra.mxu0 0.0
        %1484 = vmatprep.subr.mxu0 0.0
        %1485 = vmatpush1.msra.mxu0 0.0
        %1486 = vmatprep.subr.mxu0 0.0
        %1487 = vmatpush1.msra.mxu0 0.0
        %1488 = vmatprep.subr.mxu0 0.0
        %1489 = vmatpush1.msra.mxu0 0.0
        %1490 = vmatprep.subr.mxu0 0.0
        %1491 = vmatpush1.msra.mxu0 0.0
        %1492 = vmatprep.subr.mxu0 0.0
        %1493 = vmatpush1.msra.mxu0 0.0
        %1494 = vmatprep.subr.mxu0 0.0
        %1495 = vmatpush1.msra.mxu0 0.0
        %1496 = vmatprep.subr.mxu0 0.0
        %1497 = vmatpush1.msra.mxu0 0.0
        %1498 = vmatprep.subr.mxu0 0.0
        %1499 = vmatpush1.msra.mxu0 0.0
        %1500 = vmatprep.subr.mxu0 0.0
        %1501 = vmatpush1.msra.mxu0 0.0
        %1502 = vmatprep.subr.mxu0 0.0
        %1503 = vmatpush1.msra.mxu0 0.0
        %1504 = vmatprep.subr.mxu0 0.0
        %1505 = vmatpush1.msra.mxu0 0.0
        %1506 = vmatprep.subr.mxu0 0.0
        %1507 = vmatpush1.msra.mxu0 0.0
        %1508 = vmatprep.subr.mxu0 0.0
        %1509 = vmatpush1.msra.mxu0 0.0
        %1510 = vmatprep.subr.mxu0 0.0
        %1511 = vmatpush1.msra.mxu0 0.0
        %1512 = vmatprep.subr.mxu0 0.0
        %1513 = vmatpush1.msra.mxu0 0.0
        %1514 = vmatprep.subr.mxu0 0.0
        %1515 = vmatpush1.msra.mxu0 0.0
        %1516 = vmatprep.subr.mxu0 0.0
        %1517 = vmatpush1.msra.mxu0 0.0
        %1518 = vmatprep.subr.mxu0 0.0
        %1519 = vmatpush1.msra.mxu0 0.0
        %1520 = vmatprep.subr.mxu0 0.0
        %1521 = vmatpush1.msra.mxu0 0.0
        %1522 = vmatprep.subr.mxu0 0.0
        %1523 = vmatpush1.msra.mxu0 0.0
        %1524 = vmatprep.subr.mxu0 0.0
        %1525 = vmatpush1.msra.mxu0 0.0
        %1526 = vmatprep.mubr.f32.mxu0 0.0
        %1527 = vmatmul.mubr.f32.gmra.mrb[0].mxu0 %v1451
        %v1528 = vpop.f32.mrb[0].mxu0
        %v1529 = vadd.f32 %v475, %v1528
        %v1530 = vpop.f32.mrb[0].mxu0
        %v1531 = vadd.f32 %v477, %v1530
        %1532 = vmatprep.mubr.f32.mxu0 0.0
        %1533 = vmatmul.mubr.f32.gmra.mrb[0].mxu0 %v1454
        %v1534 = vpop.f32.mrb[0].mxu0
        %v1535 = vadd.f32 %v481, %v1534
        %v1536 = vpop.f32.mrb[0].mxu0
        %v1537 = vadd.f32 %v483, %v1536
        %1538 = vdwg.mxu0
        %1539 = vst [vmem:[%s247] sm:$0xff] %v1529
        %1540 = vst [vmem:[%s247 + $0x8] sm:$0xff] %v1531
        %1541 = vst [vmem:[%s247 + $0x10] sm:$0xff] %v1535
        %1542 = vst [vmem:[%s247 + $0x18] sm:$0xff] %v1537
        %s1543 = scalar_lea.vmem %s253, 16
        %v1544 = vld [vmem:[%s1543] sm:$0xff]
        %v1545 = vld [vmem:[%s1543 + $0x8] sm:$0xff]
        %v1546 = vadd.f32 %v1544, %v1545
        %1547 = vadd.xlane.f32.xlu0 %v1546
        %v1548 = vpop.xlane.xlu0 %1547
        %v1549 = vmul.f32 %v1548, 0.00390625
        %v1550 = vsub.f32 %v1544, %v1549
        %v1551 = vsub.f32 %v1545, %v1549
        %v1552 = vmul.f32 %v1550, %v1550
        %v1553 = vmul.f32 %v1551, %v1551
        %v1554 = vadd.f32 %v1552, %v1553
        %1555 = vadd.xlane.f32.xlu0 %v1554
        %v1556 = vpop.xlane.xlu0 %1555
        %v1557 = vmul.f32 %v1556, 0.00390625
        %v1558 = vadd.f32 %v1557, 1e-05
        %v1559 = vrsqrt.pop %v1558
        %v1560 = vmul.f32 %v1550, %v1559
        %v1561 = vmul.f32 %v1551, %v1559
        %v1562 = vmax.f32 %v1560, 0.0
        %v1563 = vmax.f32 %v1561, 0.0
        %1564 = vmatprep.subr.mxu0 %v1563
        %1565 = vmatpush1.msra.mxu0 %v1562
        %1566 = vmatprep.subr.mxu0 0.0
        %1567 = vmatpush1.msra.mxu0 0.0
        %1568 = vmatprep.subr.mxu0 0.0
        %1569 = vmatpush1.msra.mxu0 0.0
        %1570 = vmatprep.subr.mxu0 0.0
        %1571 = vmatpush1.msra.mxu0 0.0
        %1572 = vmatprep.subr.mxu0 0.0
        %1573 = vmatpush1.msra.mxu0 0.0
        %1574 = vmatprep.subr.mxu0 0.0
        %1575 = vmatpush1.msra.mxu0 0.0
        %1576 = vmatprep.subr.mxu0 0.0
        %1577 = vmatpush1.msra.mxu0 0.0
        %1578 = vmatprep.subr.mxu0 0.0
        %1579 = vmatpush1.msra.mxu0 0.0
        %1580 = vmatprep.subr.mxu0 0.0
        %1581 = vmatpush1.msra.mxu0 0.0
        %1582 = vmatprep.subr.mxu0 0.0
        %1583 = vmatpush1.msra.mxu0 0.0
        %1584 = vmatprep.subr.mxu0 0.0
        %1585 = vmatpush1.msra.mxu0 0.0
        %1586 = vmatprep.subr.mxu0 0.0
        %1587 = vmatpush1.msra.mxu0 0.0
        %1588 = vmatprep.subr.mxu0 0.0
        %1589 = vmatpush1.msra.mxu0 0.0
        %1590 = vmatprep.subr.mxu0 0.0
        %1591 = vmatpush1.msra.mxu0 0.0
        %1592 = vmatprep.subr.mxu0 0.0
        %1593 = vmatpush1.msra.mxu0 0.0
        %1594 = vmatprep.subr.mxu0 0.0
        %1595 = vmatpush1.msra.mxu0 0.0
        %1596 = vmatprep.subr.mxu0 0.0
        %1597 = vmatpush1.msra.mxu0 0.0
        %1598 = vmatprep.subr.mxu0 0.0
        %1599 = vmatpush1.msra.mxu0 0.0
        %1600 = vmatprep.subr.mxu0 0.0
        %1601 = vmatpush1.msra.mxu0 0.0
        %1602 = vmatprep.subr.mxu0 0.0
        %1603 = vmatpush1.msra.mxu0 0.0
        %1604 = vmatprep.subr.mxu0 0.0
        %1605 = vmatpush1.msra.mxu0 0.0
        %1606 = vmatprep.subr.mxu0 0.0
        %1607 = vmatpush1.msra.mxu0 0.0
        %1608 = vmatprep.subr.mxu0 0.0
        %1609 = vmatpush1.msra.mxu0 0.0
        %1610 = vmatprep.subr.mxu0 0.0
        %1611 = vmatpush1.msra.mxu0 0.0
        %1612 = vmatprep.subr.mxu0 0.0
        %1613 = vmatpush1.msra.mxu0 0.0
        %1614 = vmatprep.subr.mxu0 0.0
        %1615 = vmatpush1.msra.mxu0 0.0
        %1616 = vmatprep.subr.mxu0 0.0
        %1617 = vmatpush1.msra.mxu0 0.0
        %1618 = vmatprep.subr.mxu0 0.0
        %1619 = vmatpush1.msra.mxu0 0.0
        %1620 = vmatprep.subr.mxu0 0.0
        %1621 = vmatpush1.msra.mxu0 0.0
        %1622 = vmatprep.subr.mxu0 0.0
        %1623 = vmatpush1.msra.mxu0 0.0
        %1624 = vmatprep.subr.mxu0 0.0
        %1625 = vmatpush1.msra.mxu0 0.0
        %1626 = vmatprep.subr.mxu0 0.0
        %1627 = vmatpush1.msra.mxu0 0.0
        %1628 = vmatprep.mubr.f32.mxu0 0.0
        %1629 = vmatmul.mubr.f32.gmra.mrb[0].mxu0 %v403
        %v1630 = vpop.f32.mrb[0].mxu0
        %v1631 = vadd.f32 0.0, %v1630
        %v1632 = vpop.f32.mrb[0].mxu0
        %v1633 = vadd.f32 0.0, %v1632
        %1634 = vmatprep.mubr.f32.mxu0 0.0
        %1635 = vmatmul.mubr.f32.gmra.mrb[0].mxu0 %v406
        %v1636 = vpop.f32.mrb[0].mxu0
        %v1637 = vadd.f32 0.0, %v1636
        %v1638 = vpop.f32.mrb[0].mxu0
        %v1639 = vadd.f32 0.0, %v1638
        %1640 = vdwg.mxu0
        %v1641 = vadd.f32 %v1631, %v1633
        %1642 = vadd.xlane.f32.xlu0 %v1641
        %v1643 = vpop.xlane.xlu0 %1642
        %v1644 = vadd.f32 %v1637, %v1639
        %1645 = vadd.xlane.f32.xlu0 %v1644
        %v1646 = vpop.xlane.xlu0 %1645
        %v1647 = vmul.f32 %v1643, 0.00390625
        %v1648 = vmul.f32 %v1646, 0.00390625
        %v1649 = vsub.f32 %v1631, %v1647
        %v1650 = vsub.f32 %v1633, %v1647
        %v1651 = vsub.f32 %v1637, %v1648
        %v1652 = vsub.f32 %v1639, %v1648
        %v1653 = vmul.f32 %v1649, %v1649
        %v1654 = vmul.f32 %v1650, %v1650
        %v1655 = vmul.f32 %v1651, %v1651
        %v1656 = vmul.f32 %v1652, %v1652
        %v1657 = vadd.f32 %v1653, %v1654
        %1658 = vadd.xlane.f32.xlu0 %v1657
        %v1659 = vpop.xlane.xlu0 %1658
        %v1660 = vadd.f32 %v1655, %v1656
        %1661 = vadd.xlane.f32.xlu0 %v1660
        %v1662 = vpop.xlane.xlu0 %1661
        %v1663 = vmul.f32 %v1659, 0.00390625
        %v1664 = vmul.f32 %v1662, 0.00390625
        %v1665 = vadd.f32 %v1663, 1e-05
        %v1666 = vadd.f32 %v1664, 1e-05
        %v1667 = vrsqrt.pop %v1665
        %v1668 = vrsqrt.pop %v1666
        %v1669 = vmul.f32 %v1649, %v1667
        %v1670 = vmul.f32 %v1650, %v1667
        %v1671 = vmul.f32 %v1651, %v1668
        %v1672 = vmul.f32 %v1652, %v1668
        %v1673 = vmax.f32 %v1669, 0.0
        %v1674 = vmax.f32 %v1670, 0.0
        %v1675 = vmax.f32 %v1671, 0.0
        %v1676 = vmax.f32 %v1672, 0.0
        %1677 = vmatprep.subr.mxu0 %v1674
        %1678 = vmatpush1.msra.mxu0 %v1673
        %1679 = vmatprep.subr.mxu0 %v1676
        %1680 = vmatpush1.msra.mxu0 %v1675
        %1681 = vmatprep.subr.mxu0 0.0
        %1682 = vmatpush1.msra.mxu0 0.0
        %1683 = vmatprep.subr.mxu0 0.0
        %1684 = vmatpush1.msra.mxu0 0.0
        %1685 = vmatprep.subr.mxu0 0.0
        %1686 = vmatpush1.msra.mxu0 0.0
        %1687 = vmatprep.subr.mxu0 0.0
        %1688 = vmatpush1.msra.mxu0 0.0
        %1689 = vmatprep.subr.mxu0 0.0
        %1690 = vmatpush1.msra.mxu0 0.0
        %1691 = vmatprep.subr.mxu0 0.0
        %1692 = vmatpush1.msra.mxu0 0.0
        %1693 = vmatprep.subr.mxu0 0.0
        %1694 = vmatpush1.msra.mxu0 0.0
        %1695 = vmatprep.subr.mxu0 0.0
        %1696 = vmatpush1.msra.mxu0 0.0
        %1697 = vmatprep.subr.mxu0 0.0
        %1698 = vmatpush1.msra.mxu0 0.0
        %1699 = vmatprep.subr.mxu0 0.0
        %1700 = vmatpush1.msra.mxu0 0.0
        %1701 = vmatprep.subr.mxu0 0.0
        %1702 = vmatpush1.msra.mxu0 0.0
        %1703 = vmatprep.subr.mxu0 0.0
        %1704 = vmatpush1.msra.mxu0 0.0
        %1705 = vmatprep.subr.mxu0 0.0
        %1706 = vmatpush1.msra.mxu0 0.0
        %1707 = vmatprep.subr.mxu0 0.0
        %1708 = vmatpush1.msra.mxu0 0.0
        %1709 = vmatprep.subr.mxu0 0.0
        %1710 = vmatpush1.msra.mxu0 0.0
        %1711 = vmatprep.subr.mxu0 0.0
        %1712 = vmatpush1.msra.mxu0 0.0
        %1713 = vmatprep.subr.mxu0 0.0
        %1714 = vmatpush1.msra.mxu0 0.0
        %1715 = vmatprep.subr.mxu0 0.0
        %1716 = vmatpush1.msra.mxu0 0.0
        %1717 = vmatprep.subr.mxu0 0.0
        %1718 = vmatpush1.msra.mxu0 0.0
        %1719 = vmatprep.subr.mxu0 0.0
        %1720 = vmatpush1.msra.mxu0 0.0
        %1721 = vmatprep.subr.mxu0 0.0
        %1722 = vmatpush1.msra.mxu0 0.0
        %1723 = vmatprep.subr.mxu0 0.0
        %1724 = vmatpush1.msra.mxu0 0.0
        %1725 = vmatprep.subr.mxu0 0.0
        %1726 = vmatpush1.msra.mxu0 0.0
        %1727 = vmatprep.subr.mxu0 0.0
        %1728 = vmatpush1.msra.mxu0 0.0
        %1729 = vmatprep.subr.mxu0 0.0
        %1730 = vmatpush1.msra.mxu0 0.0
        %1731 = vmatprep.subr.mxu0 0.0
        %1732 = vmatpush1.msra.mxu0 0.0
        %1733 = vmatprep.subr.mxu0 0.0
        %1734 = vmatpush1.msra.mxu0 0.0
        %1735 = vmatprep.subr.mxu0 0.0
        %1736 = vmatpush1.msra.mxu0 0.0
        %1737 = vmatprep.subr.mxu0 0.0
        %1738 = vmatpush1.msra.mxu0 0.0
        %1739 = vmatprep.subr.mxu0 0.0
        %1740 = vmatpush1.msra.mxu0 0.0
        %1741 = vmatprep.mubr.f32.mxu0 0.0
        %1742 = vmatmul.mubr.f32.gmra.mrb[0].mxu0 %v523
        %v1743 = vpop.f32.mrb[0].mxu0
        %v1744 = vadd.f32 0.0, %v1743
        %v1745 = vpop.f32.mrb[0].mxu0
        %v1746 = vadd.f32 0.0, %v1745
        %1747 = vdwg.mxu0
        %v1748 = vsel %vm596, %v1744, 0.0
        %v1749 = vsel %vm596, %v1746, 0.0
        %v1750 = vadd.f32 %v1748, %v1749
        %1751 = vadd.xlane.f32.xlu0 %v1750
        %v1752 = vpop.xlane.xlu0 %1751
        %v1753 = vmul.f32 %v1752, 0.00390625
        %v1754 = vsub.f32 %v1744, %v1753
        %v1755 = vsub.f32 %v1746, %v1753
        %v1756 = vmul.f32 %v1754, %v1754
        %v1757 = vmul.f32 %v1755, %v1755
        %v1758 = vsel %vm596, %v1756, 0.0
        %v1759 = vsel %vm596, %v1757, 0.0
        %v1760 = vadd.f32 %v1758, %v1759
        %1761 = vadd.xlane.f32.xlu0 %v1760
        %v1762 = vpop.xlane.xlu0 %1761
        %v1763 = vmul.f32 %v1762, 0.00390625
        %v1764 = vadd.f32 %v1763, 1e-05
        %v1765 = vrsqrt.pop %v1764
        %v1766 = vmul.f32 %v1754, %v1765
        %v1767 = vmul.f32 %v1755, %v1765
        %v1768 = vmax.f32 %v1766, 0.0
        %v1769 = vmax.f32 %v1767, 0.0
        %1770 = vrot.lane.b32.xlu0 %v1768, 34
        %v1771 = vpop.permute.xlu0 %1770
        %1772 = vrot.lane.b32.xlu0 %v1769, 34
        %v1773 = vpop.permute.xlu0 %1772
        %v1774 = vsel %vm625, %v1771, %v1773
        %v1775 = vsel %vm625, %v1773, %v1771
        %v1776 = vmul.f32 %v1775, %v283
        %v1777 = vmul.f32 %v1774, %v287
        %1778 = vrot.lane.b32.xlu0 %v1768, 32
        %v1779 = vpop.permute.xlu0 %1778
        %1780 = vrot.lane.b32.xlu0 %v1769, 32
        %v1781 = vpop.permute.xlu0 %1780
        %v1782 = vsel %vm634, %v1779, %v1781
        %v1783 = vsel %vm634, %v1781, %v1779
        %v1784 = vmul.f32 %v1783, %v296
        %v1785 = vmul.f32 %v1782, %v300
        %v1787 = vsel %vm596, %v1784, 0
        %v1790 = vsel %vm596, %v1785, 0
        %1792 = vmatprep.subr.mxu0 %v1790
        %1793 = vmatpush1.msra.mxu0 %v1787
        %1794 = vmatprep.subr.mxu0 0.0
        %1795 = vmatpush1.msra.mxu0 0.0
        %1796 = vmatprep.subr.mxu0 0.0
        %1797 = vmatpush1.msra.mxu0 0.0
        %1798 = vmatprep.subr.mxu0 0.0
        %1799 = vmatpush1.msra.mxu0 0.0
        %1800 = vmatprep.subr.mxu0 0.0
        %1801 = vmatpush1.msra.mxu0 0.0
        %1802 = vmatprep.subr.mxu0 0.0
        %1803 = vmatpush1.msra.mxu0 0.0
        %1804 = vmatprep.subr.mxu0 0.0
        %1805 = vmatpush1.msra.mxu0 0.0
        %1806 = vmatprep.subr.mxu0 0.0
        %1807 = vmatpush1.msra.mxu0 0.0
        %1808 = vmatprep.subr.mxu0 0.0
        %1809 = vmatpush1.msra.mxu0 0.0
        %1810 = vmatprep.subr.mxu0 0.0
        %1811 = vmatpush1.msra.mxu0 0.0
        %1812 = vmatprep.subr.mxu0 0.0
        %1813 = vmatpush1.msra.mxu0 0.0
        %1814 = vmatprep.subr.mxu0 0.0
        %1815 = vmatpush1.msra.mxu0 0.0
        %1816 = vmatprep.subr.mxu0 0.0
        %1817 = vmatpush1.msra.mxu0 0.0
        %1818 = vmatprep.subr.mxu0 0.0
        %1819 = vmatpush1.msra.mxu0 0.0
        %1820 = vmatprep.subr.mxu0 0.0
        %1821 = vmatpush1.msra.mxu0 0.0
        %1822 = vmatprep.subr.mxu0 0.0
        %1823 = vmatpush1.msra.mxu0 0.0
        %1824 = vmatprep.subr.mxu0 0.0
        %1825 = vmatpush1.msra.mxu0 0.0
        %1826 = vmatprep.subr.mxu0 0.0
        %1827 = vmatpush1.msra.mxu0 0.0
        %1828 = vmatprep.subr.mxu0 0.0
        %1829 = vmatpush1.msra.mxu0 0.0
        %1830 = vmatprep.subr.mxu0 0.0
        %1831 = vmatpush1.msra.mxu0 0.0
        %1832 = vmatprep.subr.mxu0 0.0
        %1833 = vmatpush1.msra.mxu0 0.0
        %1834 = vmatprep.subr.mxu0 0.0
        %1835 = vmatpush1.msra.mxu0 0.0
        %1836 = vmatprep.subr.mxu0 0.0
        %1837 = vmatpush1.msra.mxu0 0.0
        %1838 = vmatprep.subr.mxu0 0.0
        %1839 = vmatpush1.msra.mxu0 0.0
        %1840 = vmatprep.subr.mxu0 0.0
        %1841 = vmatpush1.msra.mxu0 0.0
        %1842 = vmatprep.subr.mxu0 0.0
        %1843 = vmatpush1.msra.mxu0 0.0
        %1844 = vmatprep.subr.mxu0 0.0
        %1845 = vmatpush1.msra.mxu0 0.0
        %1846 = vmatprep.subr.mxu0 0.0
        %1847 = vmatpush1.msra.mxu0 0.0
        %1848 = vmatprep.subr.mxu0 0.0
        %1849 = vmatpush1.msra.mxu0 0.0
        %1850 = vmatprep.subr.mxu0 0.0
        %1851 = vmatpush1.msra.mxu0 0.0
        %1852 = vmatprep.subr.mxu0 0.0
        %1853 = vmatpush1.msra.mxu0 0.0
        %1854 = vmatprep.subr.mxu0 0.0
        %1855 = vmatpush1.msra.mxu0 0.0
        %1856 = vmatprep.mubr.f32.mxu0 0.0
        %1857 = vmatmul.mubr.f32.gmra.mrb[0].mxu0 %v641
        %v1858 = vpop.f32.mrb[0].mxu0
        %v1859 = vadd.f32 0.0, %v1858
        %v1860 = vpop.f32.mrb[0].mxu0
        %v1861 = vadd.f32 0.0, %v1860
        %1862 = vdwg.mxu0
        %v1864 = vsel %vm596, %v1776, 0
        %v1867 = vsel %vm596, %v1777, 0
        %1869 = vmatprep.subr.mxu0 %v1867
        %1870 = vmatpush1.msra.mxu0 %v1864
        %1871 = vmatprep.subr.mxu0 0.0
        %1872 = vmatpush1.msra.mxu0 0.0
        %1873 = vmatprep.subr.mxu0 0.0
        %1874 = vmatpush1.msra.mxu0 0.0
        %1875 = vmatprep.subr.mxu0 0.0
        %1876 = vmatpush1.msra.mxu0 0.0
        %1877 = vmatprep.subr.mxu0 0.0
        %1878 = vmatpush1.msra.mxu0 0.0
        %1879 = vmatprep.subr.mxu0 0.0
        %1880 = vmatpush1.msra.mxu0 0.0
        %1881 = vmatprep.subr.mxu0 0.0
        %1882 = vmatpush1.msra.mxu0 0.0
        %1883 = vmatprep.subr.mxu0 0.0
        %1884 = vmatpush1.msra.mxu0 0.0
        %1885 = vmatprep.subr.mxu0 0.0
        %1886 = vmatpush1.msra.mxu0 0.0
        %1887 = vmatprep.subr.mxu0 0.0
        %1888 = vmatpush1.msra.mxu0 0.0
        %1889 = vmatprep.subr.mxu0 0.0
        %1890 = vmatpush1.msra.mxu0 0.0
        %1891 = vmatprep.subr.mxu0 0.0
        %1892 = vmatpush1.msra.mxu0 0.0
        %1893 = vmatprep.subr.mxu0 0.0
        %1894 = vmatpush1.msra.mxu0 0.0
        %1895 = vmatprep.subr.mxu0 0.0
        %1896 = vmatpush1.msra.mxu0 0.0
        %1897 = vmatprep.subr.mxu0 0.0
        %1898 = vmatpush1.msra.mxu0 0.0
        %1899 = vmatprep.subr.mxu0 0.0
        %1900 = vmatpush1.msra.mxu0 0.0
        %1901 = vmatprep.subr.mxu0 0.0
        %1902 = vmatpush1.msra.mxu0 0.0
        %1903 = vmatprep.subr.mxu0 0.0
        %1904 = vmatpush1.msra.mxu0 0.0
        %1905 = vmatprep.subr.mxu0 0.0
        %1906 = vmatpush1.msra.mxu0 0.0
        %1907 = vmatprep.subr.mxu0 0.0
        %1908 = vmatpush1.msra.mxu0 0.0
        %1909 = vmatprep.subr.mxu0 0.0
        %1910 = vmatpush1.msra.mxu0 0.0
        %1911 = vmatprep.subr.mxu0 0.0
        %1912 = vmatpush1.msra.mxu0 0.0
        %1913 = vmatprep.subr.mxu0 0.0
        %1914 = vmatpush1.msra.mxu0 0.0
        %1915 = vmatprep.subr.mxu0 0.0
        %1916 = vmatpush1.msra.mxu0 0.0
        %1917 = vmatprep.subr.mxu0 0.0
        %1918 = vmatpush1.msra.mxu0 0.0
        %1919 = vmatprep.subr.mxu0 0.0
        %1920 = vmatpush1.msra.mxu0 0.0
        %1921 = vmatprep.subr.mxu0 0.0
        %1922 = vmatpush1.msra.mxu0 0.0
        %1923 = vmatprep.subr.mxu0 0.0
        %1924 = vmatpush1.msra.mxu0 0.0
        %1925 = vmatprep.subr.mxu0 0.0
        %1926 = vmatpush1.msra.mxu0 0.0
        %1927 = vmatprep.subr.mxu0 0.0
        %1928 = vmatpush1.msra.mxu0 0.0
        %1929 = vmatprep.subr.mxu0 0.0
        %1930 = vmatpush1.msra.mxu0 0.0
        %1931 = vmatprep.subr.mxu0 0.0
        %1932 = vmatpush1.msra.mxu0 0.0
        %1933 = vmatprep.mubr.f32.mxu0 0.0
        %1934 = vmatmul.mubr.f32.gmra.mrb[0].mxu0 %v721
        %v1935 = vpop.f32.mrb[0].mxu0
        %v1936 = vadd.f32 %v1859, %v1935
        %v1937 = vpop.f32.mrb[0].mxu0
        %v1938 = vadd.f32 %v1861, %v1937
        %1939 = vdwg.mxu0
        %1940 = vrot.lane.b32.xlu0 %v1768, 30
        %v1941 = vpop.permute.xlu0 %1940
        %1942 = vrot.lane.b32.xlu0 %v1769, 30
        %v1943 = vpop.permute.xlu0 %1942
        %v1944 = vsel %vm804, %v1941, %v1943
        %v1945 = vsel %vm804, %v1943, %v1941
        %v1946 = vmul.f32 %v1945, %v309
        %v1947 = vmul.f32 %v1944, %v313
        %v1949 = vsel %vm596, %v1946, 0
        %v1952 = vsel %vm596, %v1947, 0
        %1954 = vmatprep.subr.mxu0 %v1952
        %1955 = vmatpush1.msra.mxu0 %v1949
        %1956 = vmatprep.subr.mxu0 0.0
        %1957 = vmatpush1.msra.mxu0 0.0
        %1958 = vmatprep.subr.mxu0 0.0
        %1959 = vmatpush1.msra.mxu0 0.0
        %1960 = vmatprep.subr.mxu0 0.0
        %1961 = vmatpush1.msra.mxu0 0.0
        %1962 = vmatprep.subr.mxu0 0.0
        %1963 = vmatpush1.msra.mxu0 0.0
        %1964 = vmatprep.subr.mxu0 0.0
        %1965 = vmatpush1.msra.mxu0 0.0
        %1966 = vmatprep.subr.mxu0 0.0
        %1967 = vmatpush1.msra.mxu0 0.0
        %1968 = vmatprep.subr.mxu0 0.0
        %1969 = vmatpush1.msra.mxu0 0.0
        %1970 = vmatprep.subr.mxu0 0.0
        %1971 = vmatpush1.msra.mxu0 0.0
        %1972 = vmatprep.subr.mxu0 0.0
        %1973 = vmatpush1.msra.mxu0 0.0
        %1974 = vmatprep.subr.mxu0 0.0
        %1975 = vmatpush1.msra.mxu0 0.0
        %1976 = vmatprep.subr.mxu0 0.0
        %1977 = vmatpush1.msra.mxu0 0.0
        %1978 = vmatprep.subr.mxu0 0.0
        %1979 = vmatpush1.msra.mxu0 0.0
        %1980 = vmatprep.subr.mxu0 0.0
        %1981 = vmatpush1.msra.mxu0 0.0
        %1982 = vmatprep.subr.mxu0 0.0
        %1983 = vmatpush1.msra.mxu0 0.0
        %1984 = vmatprep.subr.mxu0 0.0
        %1985 = vmatpush1.msra.mxu0 0.0
        %1986 = vmatprep.subr.mxu0 0.0
        %1987 = vmatpush1.msra.mxu0 0.0
        %1988 = vmatprep.subr.mxu0 0.0
        %1989 = vmatpush1.msra.mxu0 0.0
        %1990 = vmatprep.subr.mxu0 0.0
        %1991 = vmatpush1.msra.mxu0 0.0
        %1992 = vmatprep.subr.mxu0 0.0
        %1993 = vmatpush1.msra.mxu0 0.0
        %1994 = vmatprep.subr.mxu0 0.0
        %1995 = vmatpush1.msra.mxu0 0.0
        %1996 = vmatprep.subr.mxu0 0.0
        %1997 = vmatpush1.msra.mxu0 0.0
        %1998 = vmatprep.subr.mxu0 0.0
        %1999 = vmatpush1.msra.mxu0 0.0
        %2000 = vmatprep.subr.mxu0 0.0
        %2001 = vmatpush1.msra.mxu0 0.0
        %2002 = vmatprep.subr.mxu0 0.0
        %2003 = vmatpush1.msra.mxu0 0.0
        %2004 = vmatprep.subr.mxu0 0.0
        %2005 = vmatpush1.msra.mxu0 0.0
        %2006 = vmatprep.subr.mxu0 0.0
        %2007 = vmatpush1.msra.mxu0 0.0
        %2008 = vmatprep.subr.mxu0 0.0
        %2009 = vmatpush1.msra.mxu0 0.0
        %2010 = vmatprep.subr.mxu0 0.0
        %2011 = vmatpush1.msra.mxu0 0.0
        %2012 = vmatprep.subr.mxu0 0.0
        %2013 = vmatpush1.msra.mxu0 0.0
        %2014 = vmatprep.subr.mxu0 0.0
        %2015 = vmatpush1.msra.mxu0 0.0
        %2016 = vmatprep.subr.mxu0 0.0
        %2017 = vmatpush1.msra.mxu0 0.0
        %2018 = vmatprep.mubr.f32.mxu0 0.0
        %2019 = vmatmul.mubr.f32.gmra.mrb[0].mxu0 %v810
        %v2020 = vpop.f32.mrb[0].mxu0
        %v2021 = vadd.f32 0.0, %v2020
        %v2022 = vpop.f32.mrb[0].mxu0
        %v2023 = vadd.f32 0.0, %v2022
        %2024 = vdwg.mxu0
        %v2025 = vadd.f32 %v1936, %v2021
        %v2026 = vadd.f32 %v1938, %v2023
        %2027 = vrot.lane.b32.xlu0 %v1768, 2
        %v2028 = vpop.permute.xlu0 %2027
        %2029 = vrot.lane.b32.xlu0 %v1769, 2
        %v2030 = vpop.permute.xlu0 %2029
        %v2031 = vsel %vm895, %v2028, %v2030
        %v2032 = vsel %vm895, %v2030, %v2028
        %v2033 = vmul.f32 %v2032, %v322
        %v2034 = vmul.f32 %v2031, %v326
        %v2036 = vsel %vm596, %v2033, 0
        %v2039 = vsel %vm596, %v2034, 0
        %2041 = vmatprep.subr.mxu0 %v2039
        %2042 = vmatpush1.msra.mxu0 %v2036
        %2043 = vmatprep.subr.mxu0 0.0
        %2044 = vmatpush1.msra.mxu0 0.0
        %2045 = vmatprep.subr.mxu0 0.0
        %2046 = vmatpush1.msra.mxu0 0.0
        %2047 = vmatprep.subr.mxu0 0.0
        %2048 = vmatpush1.msra.mxu0 0.0
        %2049 = vmatprep.subr.mxu0 0.0
        %2050 = vmatpush1.msra.mxu0 0.0
        %2051 = vmatprep.subr.mxu0 0.0
        %2052 = vmatpush1.msra.mxu0 0.0
        %2053 = vmatprep.subr.mxu0 0.0
        %2054 = vmatpush1.msra.mxu0 0.0
        %2055 = vmatprep.subr.mxu0 0.0
        %2056 = vmatpush1.msra.mxu0 0.0
        %2057 = vmatprep.subr.mxu0 0.0
        %2058 = vmatpush1.msra.mxu0 0.0
        %2059 = vmatprep.subr.mxu0 0.0
        %2060 = vmatpush1.msra.mxu0 0.0
        %2061 = vmatprep.subr.mxu0 0.0
        %2062 = vmatpush1.msra.mxu0 0.0
        %2063 = vmatprep.subr.mxu0 0.0
        %2064 = vmatpush1.msra.mxu0 0.0
        %2065 = vmatprep.subr.mxu0 0.0
        %2066 = vmatpush1.msra.mxu0 0.0
        %2067 = vmatprep.subr.mxu0 0.0
        %2068 = vmatpush1.msra.mxu0 0.0
        %2069 = vmatprep.subr.mxu0 0.0
        %2070 = vmatpush1.msra.mxu0 0.0
        %2071 = vmatprep.subr.mxu0 0.0
        %2072 = vmatpush1.msra.mxu0 0.0
        %2073 = vmatprep.subr.mxu0 0.0
        %2074 = vmatpush1.msra.mxu0 0.0
        %2075 = vmatprep.subr.mxu0 0.0
        %2076 = vmatpush1.msra.mxu0 0.0
        %2077 = vmatprep.subr.mxu0 0.0
        %2078 = vmatpush1.msra.mxu0 0.0
        %2079 = vmatprep.subr.mxu0 0.0
        %2080 = vmatpush1.msra.mxu0 0.0
        %2081 = vmatprep.subr.mxu0 0.0
        %2082 = vmatpush1.msra.mxu0 0.0
        %2083 = vmatprep.subr.mxu0 0.0
        %2084 = vmatpush1.msra.mxu0 0.0
        %2085 = vmatprep.subr.mxu0 0.0
        %2086 = vmatpush1.msra.mxu0 0.0
        %2087 = vmatprep.subr.mxu0 0.0
        %2088 = vmatpush1.msra.mxu0 0.0
        %2089 = vmatprep.subr.mxu0 0.0
        %2090 = vmatpush1.msra.mxu0 0.0
        %2091 = vmatprep.subr.mxu0 0.0
        %2092 = vmatpush1.msra.mxu0 0.0
        %2093 = vmatprep.subr.mxu0 0.0
        %2094 = vmatpush1.msra.mxu0 0.0
        %2095 = vmatprep.subr.mxu0 0.0
        %2096 = vmatpush1.msra.mxu0 0.0
        %2097 = vmatprep.subr.mxu0 0.0
        %2098 = vmatpush1.msra.mxu0 0.0
        %2099 = vmatprep.subr.mxu0 0.0
        %2100 = vmatpush1.msra.mxu0 0.0
        %2101 = vmatprep.subr.mxu0 0.0
        %2102 = vmatpush1.msra.mxu0 0.0
        %2103 = vmatprep.subr.mxu0 0.0
        %2104 = vmatpush1.msra.mxu0 0.0
        %2105 = vmatprep.mubr.f32.mxu0 0.0
        %2106 = vmatmul.mubr.f32.gmra.mrb[0].mxu0 %v901
        %v2107 = vpop.f32.mrb[0].mxu0
        %v2108 = vadd.f32 0.0, %v2107
        %v2109 = vpop.f32.mrb[0].mxu0
        %v2110 = vadd.f32 0.0, %v2109
        %2111 = vdwg.mxu0
        %v2112 = vadd.f32 %v2025, %v2108
        %v2113 = vadd.f32 %v2026, %v2110
        %v2115 = vsel %vm596, %v1768, 0
        %v2118 = vsel %vm596, %v1769, 0
        %2120 = vmatprep.subr.mxu0 %v2118
        %2121 = vmatpush1.msra.mxu0 %v2115
        %2122 = vmatprep.subr.mxu0 0.0
        %2123 = vmatpush1.msra.mxu0 0.0
        %2124 = vmatprep.subr.mxu0 0.0
        %2125 = vmatpush1.msra.mxu0 0.0
        %2126 = vmatprep.subr.mxu0 0.0
        %2127 = vmatpush1.msra.mxu0 0.0
        %2128 = vmatprep.subr.mxu0 0.0
        %2129 = vmatpush1.msra.mxu0 0.0
        %2130 = vmatprep.subr.mxu0 0.0
        %2131 = vmatpush1.msra.mxu0 0.0
        %2132 = vmatprep.subr.mxu0 0.0
        %2133 = vmatpush1.msra.mxu0 0.0
        %2134 = vmatprep.subr.mxu0 0.0
        %2135 = vmatpush1.msra.mxu0 0.0
        %2136 = vmatprep.subr.mxu0 0.0
        %2137 = vmatpush1.msra.mxu0 0.0
        %2138 = vmatprep.subr.mxu0 0.0
        %2139 = vmatpush1.msra.mxu0 0.0
        %2140 = vmatprep.subr.mxu0 0.0
        %2141 = vmatpush1.msra.mxu0 0.0
        %2142 = vmatprep.subr.mxu0 0.0
        %2143 = vmatpush1.msra.mxu0 0.0
        %2144 = vmatprep.subr.mxu0 0.0
        %2145 = vmatpush1.msra.mxu0 0.0
        %2146 = vmatprep.subr.mxu0 0.0
        %2147 = vmatpush1.msra.mxu0 0.0
        %2148 = vmatprep.subr.mxu0 0.0
        %2149 = vmatpush1.msra.mxu0 0.0
        %2150 = vmatprep.subr.mxu0 0.0
        %2151 = vmatpush1.msra.mxu0 0.0
        %2152 = vmatprep.subr.mxu0 0.0
        %2153 = vmatpush1.msra.mxu0 0.0
        %2154 = vmatprep.subr.mxu0 0.0
        %2155 = vmatpush1.msra.mxu0 0.0
        %2156 = vmatprep.subr.mxu0 0.0
        %2157 = vmatpush1.msra.mxu0 0.0
        %2158 = vmatprep.subr.mxu0 0.0
        %2159 = vmatpush1.msra.mxu0 0.0
        %2160 = vmatprep.subr.mxu0 0.0
        %2161 = vmatpush1.msra.mxu0 0.0
        %2162 = vmatprep.subr.mxu0 0.0
        %2163 = vmatpush1.msra.mxu0 0.0
        %2164 = vmatprep.subr.mxu0 0.0
        %2165 = vmatpush1.msra.mxu0 0.0
        %2166 = vmatprep.subr.mxu0 0.0
        %2167 = vmatpush1.msra.mxu0 0.0
        %2168 = vmatprep.subr.mxu0 0.0
        %2169 = vmatpush1.msra.mxu0 0.0
        %2170 = vmatprep.subr.mxu0 0.0
        %2171 = vmatpush1.msra.mxu0 0.0
        %2172 = vmatprep.subr.mxu0 0.0
        %2173 = vmatpush1.msra.mxu0 0.0
        %2174 = vmatprep.subr.mxu0 0.0
        %2175 = vmatpush1.msra.mxu0 0.0
        %2176 = vmatprep.subr.mxu0 0.0
        %2177 = vmatpush1.msra.mxu0 0.0
        %2178 = vmatprep.subr.mxu0 0.0
        %2179 = vmatpush1.msra.mxu0 0.0
        %2180 = vmatprep.subr.mxu0 0.0
        %2181 = vmatpush1.msra.mxu0 0.0
        %2182 = vmatprep.subr.mxu0 0.0
        %2183 = vmatpush1.msra.mxu0 0.0
        %2184 = vmatprep.mubr.f32.mxu0 0.0
        %2185 = vmatmul.mubr.f32.gmra.mrb[0].mxu0 %v983
        %v2186 = vpop.f32.mrb[0].mxu0
        %v2187 = vadd.f32 0.0, %v2186
        %v2188 = vpop.f32.mrb[0].mxu0
        %v2189 = vadd.f32 0.0, %v2188
        %2190 = vdwg.mxu0
        %v2191 = vadd.f32 %v2112, %v2187
        %v2192 = vadd.f32 %v2113, %v2189
        %2193 = vrot.lane.b32.xlu0 %v1768, 126
        %v2194 = vpop.permute.xlu0 %2193
        %2195 = vrot.lane.b32.xlu0 %v1769, 126
        %v2196 = vpop.permute.xlu0 %2195
        %v2197 = vsel %vm1068, %v2194, %v2196
        %v2198 = vsel %vm1068, %v2196, %v2194
        %v2199 = vmul.f32 %v2197, %v335
        %v2200 = vmul.f32 %v2198, %v339
        %v2202 = vsel %vm596, %v2199, 0
        %v2205 = vsel %vm596, %v2200, 0
        %2207 = vmatprep.subr.mxu0 %v2205
        %2208 = vmatpush1.msra.mxu0 %v2202
        %2209 = vmatprep.subr.mxu0 0.0
        %2210 = vmatpush1.msra.mxu0 0.0
        %2211 = vmatprep.subr.mxu0 0.0
        %2212 = vmatpush1.msra.mxu0 0.0
        %2213 = vmatprep.subr.mxu0 0.0
        %2214 = vmatpush1.msra.mxu0 0.0
        %2215 = vmatprep.subr.mxu0 0.0
        %2216 = vmatpush1.msra.mxu0 0.0
        %2217 = vmatprep.subr.mxu0 0.0
        %2218 = vmatpush1.msra.mxu0 0.0
        %2219 = vmatprep.subr.mxu0 0.0
        %2220 = vmatpush1.msra.mxu0 0.0
        %2221 = vmatprep.subr.mxu0 0.0
        %2222 = vmatpush1.msra.mxu0 0.0
        %2223 = vmatprep.subr.mxu0 0.0
        %2224 = vmatpush1.msra.mxu0 0.0
        %2225 = vmatprep.subr.mxu0 0.0
        %2226 = vmatpush1.msra.mxu0 0.0
        %2227 = vmatprep.subr.mxu0 0.0
        %2228 = vmatpush1.msra.mxu0 0.0
        %2229 = vmatprep.subr.mxu0 0.0
        %2230 = vmatpush1.msra.mxu0 0.0
        %2231 = vmatprep.subr.mxu0 0.0
        %2232 = vmatpush1.msra.mxu0 0.0
        %2233 = vmatprep.subr.mxu0 0.0
        %2234 = vmatpush1.msra.mxu0 0.0
        %2235 = vmatprep.subr.mxu0 0.0
        %2236 = vmatpush1.msra.mxu0 0.0
        %2237 = vmatprep.subr.mxu0 0.0
        %2238 = vmatpush1.msra.mxu0 0.0
        %2239 = vmatprep.subr.mxu0 0.0
        %2240 = vmatpush1.msra.mxu0 0.0
        %2241 = vmatprep.subr.mxu0 0.0
        %2242 = vmatpush1.msra.mxu0 0.0
        %2243 = vmatprep.subr.mxu0 0.0
        %2244 = vmatpush1.msra.mxu0 0.0
        %2245 = vmatprep.subr.mxu0 0.0
        %2246 = vmatpush1.msra.mxu0 0.0
        %2247 = vmatprep.subr.mxu0 0.0
        %2248 = vmatpush1.msra.mxu0 0.0
        %2249 = vmatprep.subr.mxu0 0.0
        %2250 = vmatpush1.msra.mxu0 0.0
        %2251 = vmatprep.subr.mxu0 0.0
        %2252 = vmatpush1.msra.mxu0 0.0
        %2253 = vmatprep.subr.mxu0 0.0
        %2254 = vmatpush1.msra.mxu0 0.0
        %2255 = vmatprep.subr.mxu0 0.0
        %2256 = vmatpush1.msra.mxu0 0.0
        %2257 = vmatprep.subr.mxu0 0.0
        %2258 = vmatpush1.msra.mxu0 0.0
        %2259 = vmatprep.subr.mxu0 0.0
        %2260 = vmatpush1.msra.mxu0 0.0
        %2261 = vmatprep.subr.mxu0 0.0
        %2262 = vmatpush1.msra.mxu0 0.0
        %2263 = vmatprep.subr.mxu0 0.0
        %2264 = vmatpush1.msra.mxu0 0.0
        %2265 = vmatprep.subr.mxu0 0.0
        %2266 = vmatpush1.msra.mxu0 0.0
        %2267 = vmatprep.subr.mxu0 0.0
        %2268 = vmatpush1.msra.mxu0 0.0
        %2269 = vmatprep.subr.mxu0 0.0
        %2270 = vmatpush1.msra.mxu0 0.0
        %2271 = vmatprep.mubr.f32.mxu0 0.0
        %2272 = vmatmul.mubr.f32.gmra.mrb[0].mxu0 %v1074
        %v2273 = vpop.f32.mrb[0].mxu0
        %v2274 = vadd.f32 0.0, %v2273
        %v2275 = vpop.f32.mrb[0].mxu0
        %v2276 = vadd.f32 0.0, %v2275
        %2277 = vdwg.mxu0
        %v2278 = vadd.f32 %v2191, %v2274
        %v2279 = vadd.f32 %v2192, %v2276
        %2280 = vrot.lane.b32.xlu0 %v1768, 98
        %v2281 = vpop.permute.xlu0 %2280
        %2282 = vrot.lane.b32.xlu0 %v1769, 98
        %v2283 = vpop.permute.xlu0 %2282
        %v2284 = vsel %vm1159, %v2281, %v2283
        %v2285 = vsel %vm1159, %v2283, %v2281
        %v2286 = vmul.f32 %v2284, %v348
        %v2287 = vmul.f32 %v2285, %v352
        %v2289 = vsel %vm596, %v2286, 0
        %v2292 = vsel %vm596, %v2287, 0
        %2294 = vmatprep.subr.mxu0 %v2292
        %2295 = vmatpush1.msra.mxu0 %v2289
        %2296 = vmatprep.subr.mxu0 0.0
        %2297 = vmatpush1.msra.mxu0 0.0
        %2298 = vmatprep.subr.mxu0 0.0
        %2299 = vmatpush1.msra.mxu0 0.0
        %2300 = vmatprep.subr.mxu0 0.0
        %2301 = vmatpush1.msra.mxu0 0.0
        %2302 = vmatprep.subr.mxu0 0.0
        %2303 = vmatpush1.msra.mxu0 0.0
        %2304 = vmatprep.subr.mxu0 0.0
        %2305 = vmatpush1.msra.mxu0 0.0
        %2306 = vmatprep.subr.mxu0 0.0
        %2307 = vmatpush1.msra.mxu0 0.0
        %2308 = vmatprep.subr.mxu0 0.0
        %2309 = vmatpush1.msra.mxu0 0.0
        %2310 = vmatprep.subr.mxu0 0.0
        %2311 = vmatpush1.msra.mxu0 0.0
        %2312 = vmatprep.subr.mxu0 0.0
        %2313 = vmatpush1.msra.mxu0 0.0
        %2314 = vmatprep.subr.mxu0 0.0
        %2315 = vmatpush1.msra.mxu0 0.0
        %2316 = vmatprep.subr.mxu0 0.0
        %2317 = vmatpush1.msra.mxu0 0.0
        %2318 = vmatprep.subr.mxu0 0.0
        %2319 = vmatpush1.msra.mxu0 0.0
        %2320 = vmatprep.subr.mxu0 0.0
        %2321 = vmatpush1.msra.mxu0 0.0
        %2322 = vmatprep.subr.mxu0 0.0
        %2323 = vmatpush1.msra.mxu0 0.0
        %2324 = vmatprep.subr.mxu0 0.0
        %2325 = vmatpush1.msra.mxu0 0.0
        %2326 = vmatprep.subr.mxu0 0.0
        %2327 = vmatpush1.msra.mxu0 0.0
        %2328 = vmatprep.subr.mxu0 0.0
        %2329 = vmatpush1.msra.mxu0 0.0
        %2330 = vmatprep.subr.mxu0 0.0
        %2331 = vmatpush1.msra.mxu0 0.0
        %2332 = vmatprep.subr.mxu0 0.0
        %2333 = vmatpush1.msra.mxu0 0.0
        %2334 = vmatprep.subr.mxu0 0.0
        %2335 = vmatpush1.msra.mxu0 0.0
        %2336 = vmatprep.subr.mxu0 0.0
        %2337 = vmatpush1.msra.mxu0 0.0
        %2338 = vmatprep.subr.mxu0 0.0
        %2339 = vmatpush1.msra.mxu0 0.0
        %2340 = vmatprep.subr.mxu0 0.0
        %2341 = vmatpush1.msra.mxu0 0.0
        %2342 = vmatprep.subr.mxu0 0.0
        %2343 = vmatpush1.msra.mxu0 0.0
        %2344 = vmatprep.subr.mxu0 0.0
        %2345 = vmatpush1.msra.mxu0 0.0
        %2346 = vmatprep.subr.mxu0 0.0
        %2347 = vmatpush1.msra.mxu0 0.0
        %2348 = vmatprep.subr.mxu0 0.0
        %2349 = vmatpush1.msra.mxu0 0.0
        %2350 = vmatprep.subr.mxu0 0.0
        %2351 = vmatpush1.msra.mxu0 0.0
        %2352 = vmatprep.subr.mxu0 0.0
        %2353 = vmatpush1.msra.mxu0 0.0
        %2354 = vmatprep.subr.mxu0 0.0
        %2355 = vmatpush1.msra.mxu0 0.0
        %2356 = vmatprep.subr.mxu0 0.0
        %2357 = vmatpush1.msra.mxu0 0.0
        %2358 = vmatprep.mubr.f32.mxu0 0.0
        %2359 = vmatmul.mubr.f32.gmra.mrb[0].mxu0 %v1165
        %v2360 = vpop.f32.mrb[0].mxu0
        %v2361 = vadd.f32 0.0, %v2360
        %v2362 = vpop.f32.mrb[0].mxu0
        %v2363 = vadd.f32 0.0, %v2362
        %2364 = vdwg.mxu0
        %v2365 = vadd.f32 %v2278, %v2361
        %v2366 = vadd.f32 %v2279, %v2363
        %2367 = vrot.lane.b32.xlu0 %v1768, 96
        %v2368 = vpop.permute.xlu0 %2367
        %2369 = vrot.lane.b32.xlu0 %v1769, 96
        %v2370 = vpop.permute.xlu0 %2369
        %v2371 = vsel %vm1250, %v2368, %v2370
        %v2372 = vsel %vm1250, %v2370, %v2368
        %v2373 = vmul.f32 %v2371, %v361
        %v2374 = vmul.f32 %v2372, %v365
        %v2376 = vsel %vm596, %v2373, 0
        %v2379 = vsel %vm596, %v2374, 0
        %2381 = vmatprep.subr.mxu0 %v2379
        %2382 = vmatpush1.msra.mxu0 %v2376
        %2383 = vmatprep.subr.mxu0 0.0
        %2384 = vmatpush1.msra.mxu0 0.0
        %2385 = vmatprep.subr.mxu0 0.0
        %2386 = vmatpush1.msra.mxu0 0.0
        %2387 = vmatprep.subr.mxu0 0.0
        %2388 = vmatpush1.msra.mxu0 0.0
        %2389 = vmatprep.subr.mxu0 0.0
        %2390 = vmatpush1.msra.mxu0 0.0
        %2391 = vmatprep.subr.mxu0 0.0
        %2392 = vmatpush1.msra.mxu0 0.0
        %2393 = vmatprep.subr.mxu0 0.0
        %2394 = vmatpush1.msra.mxu0 0.0
        %2395 = vmatprep.subr.mxu0 0.0
        %2396 = vmatpush1.msra.mxu0 0.0
        %2397 = vmatprep.subr.mxu0 0.0
        %2398 = vmatpush1.msra.mxu0 0.0
        %2399 = vmatprep.subr.mxu0 0.0
        %2400 = vmatpush1.msra.mxu0 0.0
        %2401 = vmatprep.subr.mxu0 0.0
        %2402 = vmatpush1.msra.mxu0 0.0
        %2403 = vmatprep.subr.mxu0 0.0
        %2404 = vmatpush1.msra.mxu0 0.0
        %2405 = vmatprep.subr.mxu0 0.0
        %2406 = vmatpush1.msra.mxu0 0.0
        %2407 = vmatprep.subr.mxu0 0.0
        %2408 = vmatpush1.msra.mxu0 0.0
        %2409 = vmatprep.subr.mxu0 0.0
        %2410 = vmatpush1.msra.mxu0 0.0
        %2411 = vmatprep.subr.mxu0 0.0
        %2412 = vmatpush1.msra.mxu0 0.0
        %2413 = vmatprep.subr.mxu0 0.0
        %2414 = vmatpush1.msra.mxu0 0.0
        %2415 = vmatprep.subr.mxu0 0.0
        %2416 = vmatpush1.msra.mxu0 0.0
        %2417 = vmatprep.subr.mxu0 0.0
        %2418 = vmatpush1.msra.mxu0 0.0
        %2419 = vmatprep.subr.mxu0 0.0
        %2420 = vmatpush1.msra.mxu0 0.0
        %2421 = vmatprep.subr.mxu0 0.0
        %2422 = vmatpush1.msra.mxu0 0.0
        %2423 = vmatprep.subr.mxu0 0.0
        %2424 = vmatpush1.msra.mxu0 0.0
        %2425 = vmatprep.subr.mxu0 0.0
        %2426 = vmatpush1.msra.mxu0 0.0
        %2427 = vmatprep.subr.mxu0 0.0
        %2428 = vmatpush1.msra.mxu0 0.0
        %2429 = vmatprep.subr.mxu0 0.0
        %2430 = vmatpush1.msra.mxu0 0.0
        %2431 = vmatprep.subr.mxu0 0.0
        %2432 = vmatpush1.msra.mxu0 0.0
        %2433 = vmatprep.subr.mxu0 0.0
        %2434 = vmatpush1.msra.mxu0 0.0
        %2435 = vmatprep.subr.mxu0 0.0
        %2436 = vmatpush1.msra.mxu0 0.0
        %2437 = vmatprep.subr.mxu0 0.0
        %2438 = vmatpush1.msra.mxu0 0.0
        %2439 = vmatprep.subr.mxu0 0.0
        %2440 = vmatpush1.msra.mxu0 0.0
        %2441 = vmatprep.subr.mxu0 0.0
        %2442 = vmatpush1.msra.mxu0 0.0
        %2443 = vmatprep.subr.mxu0 0.0
        %2444 = vmatpush1.msra.mxu0 0.0
        %2445 = vmatprep.mubr.f32.mxu0 0.0
        %2446 = vmatmul.mubr.f32.gmra.mrb[0].mxu0 %v1256
        %v2447 = vpop.f32.mrb[0].mxu0
        %v2448 = vadd.f32 0.0, %v2447
        %v2449 = vpop.f32.mrb[0].mxu0
        %v2450 = vadd.f32 0.0, %v2449
        %2451 = vdwg.mxu0
        %v2452 = vadd.f32 %v2365, %v2448
        %v2453 = vadd.f32 %v2366, %v2450
        %2454 = vrot.lane.b32.xlu0 %v1768, 94
        %v2455 = vpop.permute.xlu0 %2454
        %2456 = vrot.lane.b32.xlu0 %v1769, 94
        %v2457 = vpop.permute.xlu0 %2456
        %v2458 = vsel %vm1341, %v2455, %v2457
        %v2459 = vsel %vm1341, %v2457, %v2455
        %v2460 = vmul.f32 %v2458, %v374
        %v2461 = vmul.f32 %v2459, %v378
        %v2463 = vsel %vm596, %v2460, 0
        %v2466 = vsel %vm596, %v2461, 0
        %2468 = vmatprep.subr.mxu0 %v2466
        %2469 = vmatpush1.msra.mxu0 %v2463
        %2470 = vmatprep.subr.mxu0 0.0
        %2471 = vmatpush1.msra.mxu0 0.0
        %2472 = vmatprep.subr.mxu0 0.0
        %2473 = vmatpush1.msra.mxu0 0.0
        %2474 = vmatprep.subr.mxu0 0.0
        %2475 = vmatpush1.msra.mxu0 0.0
        %2476 = vmatprep.subr.mxu0 0.0
        %2477 = vmatpush1.msra.mxu0 0.0
        %2478 = vmatprep.subr.mxu0 0.0
        %2479 = vmatpush1.msra.mxu0 0.0
        %2480 = vmatprep.subr.mxu0 0.0
        %2481 = vmatpush1.msra.mxu0 0.0
        %2482 = vmatprep.subr.mxu0 0.0
        %2483 = vmatpush1.msra.mxu0 0.0
        %2484 = vmatprep.subr.mxu0 0.0
        %2485 = vmatpush1.msra.mxu0 0.0
        %2486 = vmatprep.subr.mxu0 0.0
        %2487 = vmatpush1.msra.mxu0 0.0
        %2488 = vmatprep.subr.mxu0 0.0
        %2489 = vmatpush1.msra.mxu0 0.0
        %2490 = vmatprep.subr.mxu0 0.0
        %2491 = vmatpush1.msra.mxu0 0.0
        %2492 = vmatprep.subr.mxu0 0.0
        %2493 = vmatpush1.msra.mxu0 0.0
        %2494 = vmatprep.subr.mxu0 0.0
        %2495 = vmatpush1.msra.mxu0 0.0
        %2496 = vmatprep.subr.mxu0 0.0
        %2497 = vmatpush1.msra.mxu0 0.0
        %2498 = vmatprep.subr.mxu0 0.0
        %2499 = vmatpush1.msra.mxu0 0.0
        %2500 = vmatprep.subr.mxu0 0.0
        %2501 = vmatpush1.msra.mxu0 0.0
        %2502 = vmatprep.subr.mxu0 0.0
        %2503 = vmatpush1.msra.mxu0 0.0
        %2504 = vmatprep.subr.mxu0 0.0
        %2505 = vmatpush1.msra.mxu0 0.0
        %2506 = vmatprep.subr.mxu0 0.0
        %2507 = vmatpush1.msra.mxu0 0.0
        %2508 = vmatprep.subr.mxu0 0.0
        %2509 = vmatpush1.msra.mxu0 0.0
        %2510 = vmatprep.subr.mxu0 0.0
        %2511 = vmatpush1.msra.mxu0 0.0
        %2512 = vmatprep.subr.mxu0 0.0
        %2513 = vmatpush1.msra.mxu0 0.0
        %2514 = vmatprep.subr.mxu0 0.0
        %2515 = vmatpush1.msra.mxu0 0.0
        %2516 = vmatprep.subr.mxu0 0.0
        %2517 = vmatpush1.msra.mxu0 0.0
        %2518 = vmatprep.subr.mxu0 0.0
        %2519 = vmatpush1.msra.mxu0 0.0
        %2520 = vmatprep.subr.mxu0 0.0
        %2521 = vmatpush1.msra.mxu0 0.0
        %2522 = vmatprep.subr.mxu0 0.0
        %2523 = vmatpush1.msra.mxu0 0.0
        %2524 = vmatprep.subr.mxu0 0.0
        %2525 = vmatpush1.msra.mxu0 0.0
        %2526 = vmatprep.subr.mxu0 0.0
        %2527 = vmatpush1.msra.mxu0 0.0
        %2528 = vmatprep.subr.mxu0 0.0
        %2529 = vmatpush1.msra.mxu0 0.0
        %2530 = vmatprep.subr.mxu0 0.0
        %2531 = vmatpush1.msra.mxu0 0.0
        %2532 = vmatprep.mubr.f32.mxu0 0.0
        %2533 = vmatmul.mubr.f32.gmra.mrb[0].mxu0 %v1347
        %v2534 = vpop.f32.mrb[0].mxu0
        %v2535 = vadd.f32 0.0, %v2534
        %v2536 = vpop.f32.mrb[0].mxu0
        %v2537 = vadd.f32 0.0, %v2536
        %2538 = vdwg.mxu0
        %v2539 = vadd.f32 %v2452, %v2535
        %v2540 = vadd.f32 %v2453, %v2537
        %v2541 = vsel %vm596, %v2539, 0.0
        %v2542 = vsel %vm596, %v2540, 0.0
        %v2543 = vadd.f32 %v2541, %v2542
        %2544 = vadd.xlane.f32.xlu0 %v2543
        %v2545 = vpop.xlane.xlu0 %2544
        %v2546 = vmul.f32 %v2545, 0.00390625
        %v2547 = vsub.f32 %v2539, %v2546
        %v2548 = vsub.f32 %v2540, %v2546
        %v2549 = vmul.f32 %v2547, %v2547
        %v2550 = vmul.f32 %v2548, %v2548
        %v2551 = vsel %vm596, %v2549, 0.0
        %v2552 = vsel %vm596, %v2550, 0.0
        %v2553 = vadd.f32 %v2551, %v2552
        %2554 = vadd.xlane.f32.xlu0 %v2553
        %v2555 = vpop.xlane.xlu0 %2554
        %v2556 = vmul.f32 %v2555, 0.00390625
        %v2557 = vadd.f32 %v2556, 1e-05
        %v2558 = vrsqrt.pop %v2557
        %v2559 = vmul.f32 %v2547, %v2558
        %v2560 = vmul.f32 %v2548, %v2558
        %v2561 = vmax.f32 %v2559, 0.0
        %v2562 = vmax.f32 %v2560, 0.0
        %v2564 = vsel %vm596, %v2561, 0
        %v2567 = vsel %vm596, %v2562, 0
        %2569 = vmatprep.subr.mxu0 %v2567
        %2570 = vmatpush1.msra.mxu0 %v2564
        %2571 = vmatprep.subr.mxu0 0.0
        %2572 = vmatpush1.msra.mxu0 0.0
        %2573 = vmatprep.subr.mxu0 0.0
        %2574 = vmatpush1.msra.mxu0 0.0
        %2575 = vmatprep.subr.mxu0 0.0
        %2576 = vmatpush1.msra.mxu0 0.0
        %2577 = vmatprep.subr.mxu0 0.0
        %2578 = vmatpush1.msra.mxu0 0.0
        %2579 = vmatprep.subr.mxu0 0.0
        %2580 = vmatpush1.msra.mxu0 0.0
        %2581 = vmatprep.subr.mxu0 0.0
        %2582 = vmatpush1.msra.mxu0 0.0
        %2583 = vmatprep.subr.mxu0 0.0
        %2584 = vmatpush1.msra.mxu0 0.0
        %2585 = vmatprep.subr.mxu0 0.0
        %2586 = vmatpush1.msra.mxu0 0.0
        %2587 = vmatprep.subr.mxu0 0.0
        %2588 = vmatpush1.msra.mxu0 0.0
        %2589 = vmatprep.subr.mxu0 0.0
        %2590 = vmatpush1.msra.mxu0 0.0
        %2591 = vmatprep.subr.mxu0 0.0
        %2592 = vmatpush1.msra.mxu0 0.0
        %2593 = vmatprep.subr.mxu0 0.0
        %2594 = vmatpush1.msra.mxu0 0.0
        %2595 = vmatprep.subr.mxu0 0.0
        %2596 = vmatpush1.msra.mxu0 0.0
        %2597 = vmatprep.subr.mxu0 0.0
        %2598 = vmatpush1.msra.mxu0 0.0
        %2599 = vmatprep.subr.mxu0 0.0
        %2600 = vmatpush1.msra.mxu0 0.0
        %2601 = vmatprep.subr.mxu0 0.0
        %2602 = vmatpush1.msra.mxu0 0.0
        %2603 = vmatprep.subr.mxu0 0.0
        %2604 = vmatpush1.msra.mxu0 0.0
        %2605 = vmatprep.subr.mxu0 0.0
        %2606 = vmatpush1.msra.mxu0 0.0
        %2607 = vmatprep.subr.mxu0 0.0
        %2608 = vmatpush1.msra.mxu0 0.0
        %2609 = vmatprep.subr.mxu0 0.0
        %2610 = vmatpush1.msra.mxu0 0.0
        %2611 = vmatprep.subr.mxu0 0.0
        %2612 = vmatpush1.msra.mxu0 0.0
        %2613 = vmatprep.subr.mxu0 0.0
        %2614 = vmatpush1.msra.mxu0 0.0
        %2615 = vmatprep.subr.mxu0 0.0
        %2616 = vmatpush1.msra.mxu0 0.0
        %2617 = vmatprep.subr.mxu0 0.0
        %2618 = vmatpush1.msra.mxu0 0.0
        %2619 = vmatprep.subr.mxu0 0.0
        %2620 = vmatpush1.msra.mxu0 0.0
        %2621 = vmatprep.subr.mxu0 0.0
        %2622 = vmatpush1.msra.mxu0 0.0
        %2623 = vmatprep.subr.mxu0 0.0
        %2624 = vmatpush1.msra.mxu0 0.0
        %2625 = vmatprep.subr.mxu0 0.0
        %2626 = vmatpush1.msra.mxu0 0.0
        %2627 = vmatprep.subr.mxu0 0.0
        %2628 = vmatpush1.msra.mxu0 0.0
        %2629 = vmatprep.subr.mxu0 0.0
        %2630 = vmatpush1.msra.mxu0 0.0
        %2631 = vmatprep.subr.mxu0 0.0
        %2632 = vmatpush1.msra.mxu0 0.0
        %2633 = vmatprep.mubr.f32.mxu0 0.0
        %2634 = vmatmul.mubr.f32.gmra.mrb[0].mxu0 %v1451
        %v2635 = vpop.f32.mrb[0].mxu0
        %v2636 = vadd.f32 %v1631, %v2635
        %v2637 = vpop.f32.mrb[0].mxu0
        %v2638 = vadd.f32 %v1633, %v2637
        %2639 = vmatprep.mubr.f32.mxu0 0.0
        %2640 = vmatmul.mubr.f32.gmra.mrb[0].mxu0 %v1454
        %v2641 = vpop.f32.mrb[0].mxu0
        %v2642 = vadd.f32 %v1637, %v2641
        %v2643 = vpop.f32.mrb[0].mxu0
        %v2644 = vadd.f32 %v1639, %v2643
        %2645 = vdwg.mxu0
        %s2646 = scalar_lea.vmem %s247, 32 [#allocation2]
        %2647 = vst [vmem:[%s2646] sm:$0xff] %v2636
        %2648 = vst [vmem:[%s2646 + $0x8] sm:$0xff] %v2638
        %2649 = vst [vmem:[%s2646 + $0x10] sm:$0xff] %v2642
        %2650 = vst [vmem:[%s2646 + $0x18] sm:$0xff] %v2644
        %s2651 = sand.u32 %s159, 1
        %s2652 = scalar_lea.sflag [#allocation3], %s2651
        %s2653 = sand.u32 %s159, 1
        %s2654 = smul.addr %s2653, 64
        %s2655 = scalar_lea.vmem [#allocation2], %s2654
        // Predicated region
        $region45: #{tpu_custom_call.1} parent=43 // pred_check
          %p2656 = pneg %p169
        $region46: #{tpu_custom_call.1} parent=43 // pred_check_branch
          %2658 = sbr.rel (%p2656) target = $region48
        $region47: #{tpu_custom_call.1} parent=43 // pred_region
          %s2659 = smul.u32 2, %s20
          %s2661 = ssub.s32 1024, 1024
          %2662 = vsyncadd %s2652, %s2661
          %s2663 = smul.addr %s2659, 4
          %s2664 = smul.addr %s2663, 128
          %s2665 = scalar_lea.hbm %s6, %s2664
          %s2666 = sshll.u32 %s2655, 4
          %s2667 = int_to_ptr.vmem [resolvable:$true] %s2666
          %2672 = dma.vmem_to_hbm [thread:$0]  %s2667, 1024, %s2665, %s2652, 256, 256, 16
        $region48: #{tpu_custom_call.1} parent=43 // pred_fallthru
          _
      $region44: #{tpu_custom_call.1} parent=5 // pred_fallthru
        _
      %p2673 = scmp.le.s32.totalorder 2, %s15
      // Predicated region
      $region49: #{tpu_custom_call.1} parent=5 // pred_check
        %p2674 = pneg %p2673
      $region50: #{tpu_custom_call.1} parent=5 // pred_check_branch
        %2676 = sbr.rel (%p2674) target = $region52
      $region51: #{tpu_custom_call.1} parent=5 // pred_region
        %s2677 = ssub.s32 %s15, 2
        // Predicated region
        $region53: #{tpu_custom_call.1} parent=51 // pred_check
          %p2678 = pneg %p175
        $region54: #{tpu_custom_call.1} parent=51 // pred_check_branch
          %2680 = sbr.rel (%p2678) target = $region56
        $region55: #{tpu_custom_call.1} parent=51 // pred_region
          %s2681 = sand.u32 %s160, 1
          %s2682 = scalar_lea.sflag [#allocation3], %s2681
          %s2683 = sand.u32 %s160, 1
          %s2684 = smul.addr %s2683, 64
          %s2685 = scalar_lea.vmem [#allocation2], %s2684
          %2686 = dma.done %s2682, 1024
        $region56: #{tpu_custom_call.1} parent=51 // pred_fallthru
          _
      $region52: #{tpu_custom_call.1} parent=5 // pred_fallthru
        _
    $region6: #{tpu_custom_call.1} parent=1 // loop_footer
      %s19 = sadd.s32 1, %s15
    $region7: #{tpu_custom_call.1} parent=1 // loop_footer_branch
      %14 = sbr.rel target = $region3
    $region8: #{tpu_custom_call.1} parent=1 // loop_exit
      _
    %2687 = vsyncpa [#allocation3], 1
    %s2688 = scalar_lea.sflag [#allocation3], 1
    %2689 = vsyncpa %s2688, 1

</llo_original>
